<compile_context>
chip_gen: v5e
topology: v5e:2x2
jax: 0.10.0
libtpu: 0.0.40
codegen_flags: <defaults>
</compile_context>

<pallas_src>
import functools

import jax
import jax.numpy as jnp
from jax import lax
from jax.experimental import pallas as pl
from jax.experimental.pallas import tpu as pltpu

EPS_F = 1e-4           # per-factor norm clamp (sqrt of torch's eps=1e-8 product clamp)
TINY = 1e-13           # allennlp tiny_value_of_dtype(float32)
NEG = float(jnp.finfo(jnp.float32).min)   # allennlp min_value_of_dtype(float32)


def _round_up(x, m):
    return (x + m - 1) // m * m


def _dot_t(a, b):
    """(M, H) x (N, H) -> (M, N): contract over the last axis, f32 accumulate."""
    return lax.dot_general(a, b, (((1,), (1,)), ((), ())),
                           preferred_element_type=jnp.float32)


def _dot_0(a, b):
    """(K, M) x (K, N) -> (M, N): contract over the first axis."""
    return lax.dot_general(a, b, (((0,), (0,)), ((), ())),
                           preferred_element_type=jnp.float32)


def _dot(a, b):
    """(M, K) x (K, N) -> (M, N)."""
    return lax.dot_general(a, b, (((1,), (0,)), ((), ())),
                           preferred_element_type=jnp.float32)


def _inv(x):
    return 1.0 / jnp.maximum(x, EPS_F)


def _mpm(v1, v2, w2p, n1, d1):
    """multi_perspective_match with hoisted v1 statistics.

    v1 (S, H), v2 (1, H) or (S, H), w2p = weight**2 (P, H),
    n1 = ||v1|| (S, 1), d1 = ||w_p * v1|| per perspective (S, P).
    Returns (single (S, 1), multi (S, P)).
    """
    prod = v1 * v2
    if v2.shape[0] == 1:
        dot = _dot_t(v1, v2)                          # MXU matvec
    else:
        dot = jnp.sum(prod, axis=-1, keepdims=True)
    n2 = jnp.sqrt(jnp.sum(v2 * v2, axis=-1, keepdims=True))
    single = dot * (_inv(n1) * _inv(n2))
    num = _dot_t(prod, w2p)                           # (S, P) via MXU
    d2 = jnp.sqrt(_dot_t(v2 * v2, w2p))               # (1, P) or (S, P)
    multi = num * (_inv(d1) * _inv(d2))
    return single, multi


def _masked_softmax(v, m):
    """allennlp masked_softmax over the last axis. v (S, H), m (S, 1)."""
    x = v * m
    x = x - jnp.max(x, axis=-1, keepdims=True)
    e = jnp.exp(x)
    sm = e / jnp.sum(e, axis=-1, keepdims=True)
    sm = sm * m
    return sm / (jnp.sum(sm, axis=-1, keepdims=True) + TINY)


def bimpm_kernel(lens_ref, c1_ref, m1_ref, c2_ref, m2_ref, w_ref,
                 o1_ref, o2_ref, *, P, is_forward, chunk, mxu_dtype):
    S1, H = c1_ref.shape[1], c1_ref.shape[2]
    S2 = c2_ref.shape[1]
    Dpad = o1_ref.shape[2]
    b = pl.program_id(0)

    w2 = w_ref[...]                                   # (4P+8, H), already squared
    wf2, wmp2 = w2[0:P], w2[P:2 * P]
    wa2, wma2 = w2[2 * P:3 * P], w2[3 * P:4 * P]

    m1r = m1_ref[0]                                   # (1, S1) lane-major mask
    m2r = m2_ref[0]                                   # (1, S2)
    m1c, m2c = m1r.T, m2r.T                           # (S, 1)
    keep1 = m1c > 0.5                                 # (S1, 1)
    keep2c = m2c > 0.5                                # (S2, 1)
    keep2r = m2r > 0.5                                # (1, S2)

    len1 = lens_ref[b, 0]
    len2 = lens_ref[b, 1]
    inv_len1 = 1.0 / jnp.maximum(len1.astype(jnp.float32), TINY)
    inv_len2 = 1.0 / jnp.maximum(len2.astype(jnp.float32), TINY)

    c1 = c1_ref[0].astype(jnp.float32) * m1c          # (S1, H) padding zeroed
    c2 = c2_ref[0].astype(jnp.float32) * m2c          # (S2, H)

    # ---- hoisted norms: one MXU pass per side gives every per-perspective
    #      norm for all four flavours plus the plain L2 norm (ones row). ----
    d1_all = jnp.sqrt(_dot_t(c1 * c1, w2))            # (S1, 4P+8)
    d2_all = jnp.sqrt(_dot_t(c2 * c2, w2))            # (S2, 4P+8)
    n1 = d1_all[:, 4 * P:4 * P + 1]                   # (S1, 1) = ||c1||
    n2 = d2_all[:, 4 * P:4 * P + 1]                   # (S2, 1)

    # ---- pairwise cosine similarity: normalize first, one MXU pass ----
    c1n = (c1 * _inv(n1)).astype(mxu_dtype)
    c2n = (c2 * _inv(n2)).astype(mxu_dtype)
    cos = _dot_t(c1n, c2n)                            # (S1, S2) f32

    cmax1 = jnp.max(jnp.where(keep2r, cos, NEG), axis=1, keepdims=True)   # (S1,1)
    cmean1 = _dot_t(cos, m2r) * inv_len2                                  # (S1,1)
    cmax2 = jnp.max(jnp.where(keep1, cos, NEG), axis=0, keepdims=True).T  # (S2,1)
    cmean2 = _dot_0(cos, m1c) * inv_len1                                  # (S2,1)

    # ---- full match ----
    if is_forward:
        i1 = jnp.maximum(len1 - 1, 0)
        i2 = jnp.maximum(len2 - 1, 0)
    else:
        i1 = jnp.int32(0)
        i2 = jnp.int32(0)
    oh1 = (lax.broadcasted_iota(jnp.int32, (1, S1), 1) == i1).astype(jnp.float32)
    oh2 = (lax.broadcasted_iota(jnp.int32, (1, S2), 1) == i2).astype(jnp.float32)
    c1_last = jnp.dot(oh1, c1, preferred_element_type=jnp.float32)        # (1, H)
    c2_last = jnp.dot(oh2, c2, preferred_element_type=jnp.float32)        # (1, H)
    fs1, fm1 = _mpm(c1, c2_last, wf2, n1, d1_all[:, 0:P])
    fs2, fm2 = _mpm(c2, c1_last, wf2, n2, d2_all[:, 0:P])

    # ---- maxpool (pairwise multi-perspective) match ----
    d1mp = d1_all[:, P:2 * P]                         # (S1, P)
    d2mp = d2_all[:, P:2 * P]                         # (S2, P)
    inv_d1mp = _inv(d1mp)
    inv_d2mp = _inv(d2mp)

    # analytic masked mean: two tiny MXU matmuls instead of an (S1,P,S2) sum.
    G2 = _dot_0(m2c * inv_d2mp, c2)                   # (P, H)
    G1 = _dot_0(m1c * inv_d1mp, c1)                   # (P, H)
    mpmean1 = _dot_t(c1, wmp2 * G2) * inv_d1mp * inv_len2   # (S1, P)
    mpmean2 = _dot_t(c2, wmp2 * G1) * inv_d2mp * inv_len1   # (S2, P)

    # masked max: stream over S2 chunks, never materialize (S1, P, S2).
    A = ((c1[:, None, :] * wmp2[None, :, :]) * inv_d1mp[:, :, None]
         ).reshape(S1 * P, H).astype(mxu_dtype)       # (S1*P, H), P % 8 == 0
    mpmax1 = jnp.full((S1, P), NEG, jnp.float32)
    mpmax2_chunks = []
    for a0 in range(0, S2, chunk):
        a1 = min(a0 + chunk, S2)
        c2_chunk = c2[a0:a1].astype(mxu_dtype)                         # (C, H)
        num = _dot_t(A, c2_chunk).reshape(S1, P, a1 - a0)              # (S1, P, C)
        mp = num * inv_d2mp[a0:a1].T[None, :, :]                       # (S1, P, C)
        kj = keep2r[:, a0:a1].reshape(1, 1, a1 - a0)
        mpmax1 = jnp.maximum(mpmax1,
                             jnp.max(jnp.where(kj, mp, NEG), axis=2))  # over j
        ki = keep1[:, :, None]                                         # (S1,1,1)
        mpmax2_chunks.append(jnp.max(jnp.where(ki, mp, NEG), axis=0).T)  # (C, P)
    mpmax2 = (mpmax2_chunks[0] if len(mpmax2_chunks) == 1
              else jnp.concatenate(mpmax2_chunks, axis=0))             # (S2, P)

    # ---- attentive match ----
    att2sum = _dot(cos.astype(mxu_dtype), c2.astype(mxu_dtype))        # (S1, H)
    att1sum = _dot_0(cos.astype(mxu_dtype), c1.astype(mxu_dtype))      # (S2, H)
    att_mean_2 = _masked_softmax(att2sum, m1c)
    att_mean_1 = _masked_softmax(att1sum, m2c)
    ams1, amm1 = _mpm(c1, att_mean_2, wa2, n1, d1_all[:, 2 * P:3 * P])
    ams2, amm2 = _mpm(c2, att_mean_1, wa2, n2, d2_all[:, 2 * P:3 * P])

    # ---- max attentive match (streamed; never materializes (S1,S2,H)) ----
    att_max_2 = jnp.full((S1, H), NEG, jnp.float32)
    for a0 in range(0, S2, chunk):
        a1 = min(a0 + chunk, S2)
        vals = cos[:, a0:a1][:, :, None] * c2[a0:a1][None, :, :]       # (S1, C, H)
        vals = jnp.where(keep2c[a0:a1][None, :, :], vals, NEG)
        att_max_2 = jnp.maximum(att_max_2, jnp.max(vals, axis=1))

    att_max_1 = jnp.full((S2, H), NEG, jnp.float32)
    for a0 in range(0, S1, chunk):
        a1 = min(a0 + chunk, S1)
        vals = cos[a0:a1, :][:, :, None] * c1[a0:a1][:, None, :]       # (C, S2, H)
        vals = jnp.where(keep1[a0:a1][:, :, None], vals, NEG)
        att_max_1 = jnp.maximum(att_max_1, jnp.max(vals, axis=0))

    axs1, axm1 = _mpm(c1, att_max_2, wma2, n1, d1_all[:, 3 * P:4 * P])
    axs2, axm2 = _mpm(c2, att_max_1, wma2, n2, d2_all[:, 3 * P:4 * P])

    # ---- single lane-dense store per side ----
    D = 5 + 5 * P
    pieces1 = (cmax1, cmean1, fs1, fm1, mpmax1, mpmean1, ams1, amm1, axs1, axm1)
    pieces2 = (cmax2, cmean2, fs2, fm2, mpmax2, mpmean2, ams2, amm2, axs2, axm2)
    pad1 = (jnp.zeros((S1, Dpad - D), jnp.float32),) if Dpad > D else ()
    pad2 = (jnp.zeros((S2, Dpad - D), jnp.float32),) if Dpad > D else ()
    o1_ref[0] = jnp.concatenate(pieces1 + pad1, axis=-1).astype(o1_ref.dtype)
    o2_ref[0] = jnp.concatenate(pieces2 + pad2, axis=-1).astype(o2_ref.dtype)


def init_params(key, hidden_dim, num_perspectives):
    """kaiming_normal_ on zeros(P, H): std = sqrt(2 / fan_in) = sqrt(2 / H)."""
    std = (2.0 / hidden_dim) ** 0.5
    keys = jax.random.split(key, 4)
    # full, maxpool, attentive, max_attentive (weights shared between directions)
    return tuple(jax.random.normal(k, (num_perspectives, hidden_dim), jnp.float32) * std
                 for k in keys)


def _vmem_limit_bytes(S1, S2, H, Ppad, Dpad, chunk):
    W = 4 * Ppad + 8
    c1c, c2c = min(chunk, S1), min(chunk, S2)
    elems = (8 * (S1 + S2) * H                       # contexts / normalized / attentive vecs
             + 2 * (S1 + S2) * W                     # norm tables
             + 4 * S1 * S2                           # cos + masked temporaries
             + S1 * Ppad * H                         # maxpool scaled LHS
             + 3 * S1 * Ppad * c2c                   # maxpool streamed chunk
             + 2 * max(S1 * c2c, S2 * c1c) * H       # att-max streamed chunk
             + 10 * (S1 + S2) * Ppad                 # per-perspective pieces
             + 2 * (S1 + S2) * Dpad)                 # output slabs
    io = 4 * ((S1 + S2) * (H + Dpad) + S1 + S2) + W * H    # double-buffered blocks
    working = 4 * (elems + io)
    try:
        cap = int(pltpu.get_tpu_info().vmem_capacity_bytes)
    except Exception:
        cap = 64 * 2 ** 20                           # v7x physical size (most restrictive)
    return int(min(int(0.85 * cap), max(32 * 2 ** 20, working)))


def bimpm_matching(context_1, mask_1, context_2, mask_2, weights, *,
                   is_forward=True, chunk=128, mxu_dtype=jnp.float32,
                   context_dtype=jnp.float32):
    """Forward pass of allennlp BiMpmMatching (all four match flavours enabled).

    Returns two lists of 10 tensors each, ordered exactly like the PyTorch module.
    `mxu_dtype=jnp.bfloat16` / `context_dtype=jnp.bfloat16` trade a little
    precision for 2-3x MXU throughput and halved input DMA (compute stays f32).
    """
    B, S1, H = context_1.shape
    S2 = context_2.shape[1]
    P = weights[0].shape[0]
    Ppad = _round_up(P, 8)               # sublane-aligned perspectives
    D = 5 + 5 * Ppad
    Dpad = _round_up(D, 128)             # lane-dense output slab width

    # squared + padded + packed perspective weights; row 4*Ppad is all-ones so
    # the plain ||c||^2 falls out of the same MXU pass as the per-perspective norms.
    blocks = []
    for w in weights:                    # full, maxpool, attentive, max_attentive
        w2 = (w.astype(jnp.float32)) ** 2
        if Ppad > P:
            w2 = jnp.concatenate([w2, jnp.zeros((Ppad - P, H), jnp.float32)], 0)
        blocks.append(w2)
    blocks.append(jnp.ones((1, H), jnp.float32))
    blocks.append(jnp.zeros((7, H), jnp.float32))
    w_packed = jnp.concatenate(blocks, axis=0)            # (4*Ppad + 8, H)

    # masks lane-major (B, 1, S); lengths scalar-prefetched into SMEM
    m1 = mask_1.astype(jnp.float32).reshape(B, 1, S1)
    m2 = mask_2.astype(jnp.float32).reshape(B, 1, S2)
    lens = jnp.stack([jnp.sum(mask_1 != 0, axis=-1),
                      jnp.sum(mask_2 != 0, axis=-1)], axis=-1).astype(jnp.int32)

    kernel = functools.partial(bimpm_kernel, P=Ppad, is_forward=is_forward,
                               chunk=chunk, mxu_dtype=mxu_dtype)

    out1, out2 = pl.pallas_call(
        kernel,
        out_shape=(jax.ShapeDtypeStruct((B, S1, Dpad), jnp.float32),
                   jax.ShapeDtypeStruct((B, S2, Dpad), jnp.float32)),
        grid_spec=pltpu.PrefetchScalarGridSpec(
            num_scalar_prefetch=1,
            grid=(B,),
            in_specs=[
                pl.BlockSpec((1, S1, H), lambda i, lens: (i, 0, 0)),
                pl.BlockSpec((1, 1, S1), lambda i, lens: (i, 0, 0)),
                pl.BlockSpec((1, S2, H), lambda i, lens: (i, 0, 0)),
                pl.BlockSpec((1, 1, S2), lambda i, lens: (i, 0, 0)),
                pl.BlockSpec((4 * Ppad + 8, H), lambda i, lens: (0, 0)),
            ],
            out_specs=[
                pl.BlockSpec((1, S1, Dpad), lambda i, lens: (i, 0, 0)),
                pl.BlockSpec((1, S2, Dpad), lambda i, lens: (i, 0, 0)),
            ],
        ),
        compiler_params=pltpu.CompilerParams(
            dimension_semantics=("parallel",),        # batch elements independent
            vmem_limit_bytes=_vmem_limit_bytes(S1, S2, H, Ppad, Dpad, chunk),
        ),
    )(lens, context_1.astype(context_dtype), m1,
      context_2.astype(context_dtype), m2, w_packed)

    # Slice the slabs back into the PyTorch-ordered lists:
    # [cos_max, cos_mean, full_single, full_multi, maxpool_max, maxpool_mean,
    #  att_mean_single, att_mean_multi, att_max_single, att_max_multi]
    widths_pad = [1, 1, 1, Ppad, Ppad, Ppad, 1, Ppad, 1, Ppad]
    widths = [1, 1, 1, P, P, P, 1, P, 1, P]
    offs, c = [], 0
    for w in widths_pad:
        offs.append(c)
        c += w
    matching_vector_1 = [out1[:, :, o:o + w] for o, w in zip(offs, widths)]
    matching_vector_2 = [out2[:, :, o:o + w] for o, w in zip(offs, widths)]
    return matching_vector_1, matching_vector_2


# ----------------------------------------------------------------------------
# Pure-JAX reference of the PyTorch forward (for a parity check in __main__).
# ----------------------------------------------------------------------------
def _reference(c1, m1, c2, m2, weights, is_forward=True):
    eps, tiny, neg = 1e-8, 1e-13, NEG
    wf, wmp, wa, wma = [w.astype(jnp.float32) for w in weights]
    B = c1.shape[0]
    m1f = m1.astype(jnp.float32)
    m2f = m2.astype(jnp.float32)
    len1 = jnp.sum(m1f, -1)
    len2 = jnp.sum(m2f, -1)
    c1 = c1.astype(jnp.float32) * m1f[..., None]
    c2 = c2.astype(jnp.float32) * m2f[..., None]

    def cos_sim(a, b, axis=-1):
        dot = jnp.sum(a * b, axis)
        na = jnp.linalg.norm(a, axis=axis)
        nb = jnp.linalg.norm(b, axis=axis)
        return dot / jnp.maximum(na * nb, eps)

    def masked_max(v, mask, axis, keepdims=False):
        return jnp.max(jnp.where(mask > 0, v, neg), axis=axis, keepdims=keepdims)

    def masked_mean(v, mask, axis, keepdims=False):
        s = jnp.sum(v * mask, axis=axis, keepdims=keepdims)
        c = jnp.sum(mask * jnp.ones_like(v), axis=axis, keepdims=keepdims)
        return s / jnp.maximum(c, tiny)

    def masked_softmax(v, mask):
        x = jax.nn.softmax(v * mask, axis=-1) * mask
        return x / (jnp.sum(x, -1, keepdims=True) + tiny)

    def mpm(v1, v2, w):
        single = cos_sim(v1, v2)[..., None]
        v1e = w[None, None] * v1[:, :, None, :]
        v2e = w[None, None] * v2[:, :, None, :]
        return single, cos_sim(v1e, v2e, axis=-1)

    def mpm_pairwise(v1, v2, w):
        v1e = w[None, :, None, :] * v1[:, None, :, :]          # (B,P,S1,H)
        v2e = w[None, :, None, :] * v2[:, None, :, :]          # (B,P,S2,H)
        n1 = jnp.linalg.norm(v1e, axis=-1, keepdims=True)
        n2 = jnp.linalg.norm(v2e, axis=-1, keepdims=True)
        mul = jnp.einsum('bpih,bpjh->bpij', v1e, v2e)
        den = n1 * jnp.swapaxes(n2, -1, -2)
        return jnp.transpose(mul / jnp.maximum(den, eps), (0, 2, 3, 1))

    cos = jnp.einsum('bih,bjh->bij', c1, c2) / jnp.maximum(
        jnp.linalg.norm(c1, axis=-1)[:, :, None] *
        jnp.linalg.norm(c2, axis=-1)[:, None, :], eps)

    mv1 = [masked_max(cos, m2f[:, None, :], 2, True),
           masked_mean(cos, m2f[:, None, :], 2, True)]
    mv2 = [masked_max(jnp.swapaxes(cos, 1, 2), m1f[:, None, :], 2, True),
           masked_mean(jnp.swapaxes(cos, 1, 2), m1f[:, None, :], 2, True)]

    if is_forward:
        i1 = jnp.maximum(len1.astype(jnp.int32) - 1, 0)
        i2 = jnp.maximum(len2.astype(jnp.int32) - 1, 0)
    else:
        i1 = jnp.zeros((B,), jnp.int32)
        i2 = jnp.zeros((B,), jnp.int32)
    c1_last = c1[jnp.arange(B)[:, None], i1[:, None]]
    c2_last = c2[jnp.arange(B)[:, None], i2[:, None]]
    s, m = mpm(c1, c2_last, wf); mv1 += [s, m]
    s, m = mpm(c2, c1_last, wf); mv2 += [s, m]

    mvmax = mpm_pairwise(c1, c2, wmp)                          # (B,S1,S2,P)
    mv1 += [masked_max(mvmax, m2f[:, None, :, None], 2),
            masked_mean(mvmax, m2f[:, None, :, None], 2)]
    mvmax_t = jnp.transpose(mvmax, (0, 2, 1, 3))
    mv2 += [masked_max(mvmax_t, m1f[:, None, :, None], 2),
            masked_mean(mvmax_t, m1f[:, None, :, None], 2)]

    att2 = c2[:, None, :, :] * cos[..., None]                  # (B,S1,S2,H)
    att1 = c1[:, :, None, :] * cos[..., None]                  # (B,S1,S2,H)
    att_mean_2 = masked_softmax(att2.sum(2), m1f[..., None])
    att_mean_1 = masked_softmax(att1.sum(1), m2f[..., None])
    s, m = mpm(c1, att_mean_2, wa); mv1 += [s, m]
    s, m = mpm(c2, att_mean_1, wa); mv2 += [s, m]

    att_max_2 = masked_max(att2, m2f[:, None, :, None], 2)
    att_max_1 = masked_max(jnp.transpose(att1, (0, 2, 1, 3)), m1f[:, None, :, None], 2)
    s, m = mpm(c1, att_max_2, wma); mv1 += [s, m]
    s, m = mpm(c2, att_max_1, wma); mv2 += [s, m]
    return mv1, mv2


if __name__ == "__main__":
    B, S1, S2, H, P = 2, 8, 16, 32, 8   # batch, seq1, seq2, hidden_dim, num_perspectives
    key = jax.random.PRNGKey(0)
    k1, k2, kp = jax.random.split(key, 3)

    context_1 = jax.random.normal(k1, (B, S1, H), jnp.float32)
    context_2 = jax.random.normal(k2, (B, S2, H), jnp.float32)
    # binary masks with trailing padding
    len1 = jnp.array([S1, S1 - 3], dtype=jnp.int32)
    len2 = jnp.array([S2 - 5, S2], dtype=jnp.int32)
    mask_1 = (jnp.arange(S1)[None, :] < len1[:, None]).astype(jnp.float32)
    mask_2 = (jnp.arange(S2)[None, :] < len2[:, None]).astype(jnp.float32)

    weights = init_params(kp, H, P)

    mv1, mv2 = bimpm_matching(context_1, mask_1, context_2, mask_2, weights,
                              is_forward=True)
    jax.block_until_ready(mv1)
    jax.block_until_ready(mv2)

    expected_1 = [(B, S1, 1), (B, S1, 1), (B, S1, 1), (B, S1, P), (B, S1, P),
                  (B, S1, P), (B, S1, 1), (B, S1, P), (B, S1, 1), (B, S1, P)]
    expected_2 = [(B, S2, 1), (B, S2, 1), (B, S2, 1), (B, S2, P), (B, S2, P),
                  (B, S2, P), (B, S2, 1), (B, S2, P), (B, S2, 1), (B, S2, P)]
    assert [t.shape for t in mv1] == expected_1
    assert [t.shape for t in mv2] == expected_2
    assert all(bool(jnp.all(jnp.isfinite(t))) for t in mv1 + mv2)

    # parity check against a pure-JAX reference of the PyTorch forward
    ref1, ref2 = _reference(context_1, mask_1, context_2, mask_2, weights,
                            is_forward=True)
    for got, want in zip(mv1 + mv2, ref1 + ref2):
        err = float(jnp.max(jnp.abs(got - want)))
        assert err < 1e-3, f"parity mismatch: max abs err = {err}"

    print("KERNEL_OK")
</pallas_src>

<mosaic_0001>
module attributes {stable_mosaic.version = 11 : i64} {
  func.func @bimpm_kernel(%arg0: i32, %arg1: memref<2x2xi32, #tpu.memory_space<smem>>, %arg2: memref<1x8x32xf32, #tpu.memory_space<vmem>>, %arg3: memref<1x1x8xf32, #tpu.memory_space<vmem>>, %arg4: memref<1x16x32xf32, #tpu.memory_space<vmem>>, %arg5: memref<1x1x16xf32, #tpu.memory_space<vmem>>, %arg6: memref<40x32xf32, #tpu.memory_space<vmem>>, %arg7: memref<1x8x128xf32, #tpu.memory_space<vmem>>, %arg8: memref<1x16x128xf32, #tpu.memory_space<vmem>>) attributes {dimension_semantics = [#tpu.dimension_semantics<parallel>], iteration_bounds = array<i64: 2>, scalar_prefetch = 1 : i64, scratch_operands = 0 : i64, tpu.core_type = #tpu.core_type<tc>, window_params = [{transform_indices = @transform_0, window_bounds = array<i64: 1, 8, 32>}, {transform_indices = @transform_1, window_bounds = array<i64: 1, 1, 8>}, {transform_indices = @transform_2, window_bounds = array<i64: 1, 16, 32>}, {transform_indices = @transform_3, window_bounds = array<i64: 1, 1, 16>}, {pipeline_mode = #tpu.pipeline_mode<synchronous>, transform_indices = @transform_4, window_bounds = array<i64: 40, 32>}, {transform_indices = @transform_5, window_bounds = array<i64: 1, 8, 128>}, {transform_indices = @transform_6, window_bounds = array<i64: 1, 16, 128>}]} {
    %c0 = arith.constant 0 : index
    %c0_0 = arith.constant 0 : index
    %0 = vector.load %arg6[%c0, %c0_0] : memref<40x32xf32, #tpu.memory_space<vmem>>, vector<40x32xf32>
    %1 = vector.extract_strided_slice %0 {offsets = [0, 0], sizes = [8, 32], strides = [1, 1]} : vector<40x32xf32> to vector<8x32xf32>
    %2 = vector.extract_strided_slice %0 {offsets = [8, 0], sizes = [8, 32], strides = [1, 1]} : vector<40x32xf32> to vector<8x32xf32>
    %3 = vector.extract_strided_slice %0 {offsets = [16, 0], sizes = [8, 32], strides = [1, 1]} : vector<40x32xf32> to vector<8x32xf32>
    %4 = vector.extract_strided_slice %0 {offsets = [24, 0], sizes = [8, 32], strides = [1, 1]} : vector<40x32xf32> to vector<8x32xf32>
    %c0_1 = arith.constant 0 : index
    %c0_2 = arith.constant 0 : index
    %c0_3 = arith.constant 0 : index
    %5 = vector.load %arg3[%c0_1, %c0_2, %c0_3] : memref<1x1x8xf32, #tpu.memory_space<vmem>>, vector<1x1x8xf32>
    %6 = vector.shape_cast %5 : vector<1x1x8xf32> to vector<1x8xf32>
    %c0_4 = arith.constant 0 : index
    %c0_5 = arith.constant 0 : index
    %c0_6 = arith.constant 0 : index
    %7 = vector.load %arg5[%c0_4, %c0_5, %c0_6] : memref<1x1x16xf32, #tpu.memory_space<vmem>>, vector<1x1x16xf32>
    %8 = vector.shape_cast %7 : vector<1x1x16xf32> to vector<1x16xf32>
    %9 = tpu.transpose %6, [1, 0] : vector<1x8xf32> -> vector<8x1xf32>
    %10 = tpu.transpose %8, [1, 0] : vector<1x16xf32> -> vector<16x1xf32>
    %cst = arith.constant 5.000000e-01 : f32
    %11 = vector.broadcast %cst : f32 to vector<8x1xf32>
    %12 = arith.cmpf ogt, %9, %11 : vector<8x1xf32>
    %cst_7 = arith.constant 5.000000e-01 : f32
    %13 = vector.broadcast %cst_7 : f32 to vector<16x1xf32>
    %14 = arith.cmpf ogt, %10, %13 : vector<16x1xf32>
    %cst_8 = arith.constant 5.000000e-01 : f32
    %15 = vector.broadcast %cst_8 : f32 to vector<1x16xf32>
    %16 = arith.cmpf ogt, %8, %15 : vector<1x16xf32>
    %17 = arith.index_cast %arg0 : i32 to index
    %c0_9 = arith.constant 0 : index
    %18 = memref.load %arg1[%17, %c0_9] : memref<2x2xi32, #tpu.memory_space<smem>>
    %19 = arith.index_cast %arg0 : i32 to index
    %c1 = arith.constant 1 : index
    %20 = memref.load %arg1[%19, %c1] : memref<2x2xi32, #tpu.memory_space<smem>>
    %21 = arith.sitofp %18 : i32 to f32
    %cst_10 = arith.constant 9.99999982E-14 : f32
    %22 = arith.maximumf %21, %cst_10 : f32
    %cst_11 = arith.constant 1.000000e+00 : f32
    %23 = arith.divf %cst_11, %22 : f32
    %24 = arith.sitofp %20 : i32 to f32
    %cst_12 = arith.constant 9.99999982E-14 : f32
    %25 = arith.maximumf %24, %cst_12 : f32
    %cst_13 = arith.constant 1.000000e+00 : f32
    %26 = arith.divf %cst_13, %25 : f32
    %c0_14 = arith.constant 0 : index
    %c0_15 = arith.constant 0 : index
    %c0_16 = arith.constant 0 : index
    %27 = vector.load %arg2[%c0_14, %c0_15, %c0_16] : memref<1x8x32xf32, #tpu.memory_space<vmem>>, vector<1x8x32xf32>
    %28 = vector.shape_cast %27 : vector<1x8x32xf32> to vector<8x32xf32>
    %29 = vector.broadcast %9 : vector<8x1xf32> to vector<8x32xf32>
    %30 = arith.mulf %28, %29 : vector<8x32xf32>
    %c0_17 = arith.constant 0 : index
    %c0_18 = arith.constant 0 : index
    %c0_19 = arith.constant 0 : index
    %31 = vector.load %arg4[%c0_17, %c0_18, %c0_19] : memref<1x16x32xf32, #tpu.memory_space<vmem>>, vector<1x16x32xf32>
    %32 = vector.shape_cast %31 : vector<1x16x32xf32> to vector<16x32xf32>
    %33 = vector.broadcast %10 : vector<16x1xf32> to vector<16x32xf32>
    %34 = arith.mulf %32, %33 : vector<16x32xf32>
    %35 = arith.mulf %30, %30 : vector<8x32xf32>
    %cst_20 = arith.constant dense<0.000000e+00> : vector<8x40xf32>
    %36 = tpu.matmul %35, %0, %cst_20 {dimension_numbers = #tpu.dot_dimension_numbers<[1], [1], [0], [0], [0, 0, 1, 0], [], []>} : vector<8x32xf32>, vector<40x32xf32>, vector<8x40xf32> -> vector<8x40xf32>
    %37 = math.sqrt %36 : vector<8x40xf32>
    %38 = arith.mulf %34, %34 : vector<16x32xf32>
    %cst_21 = arith.constant dense<0.000000e+00> : vector<16x40xf32>
    %39 = tpu.matmul %38, %0, %cst_21 {dimension_numbers = #tpu.dot_dimension_numbers<[1], [1], [0], [0], [0, 0, 1, 0], [], []>} : vector<16x32xf32>, vector<40x32xf32>, vector<16x40xf32> -> vector<16x40xf32>
    %40 = math.sqrt %39 : vector<16x40xf32>
    %41 = vector.extract_strided_slice %37 {offsets = [0, 32], sizes = [8, 1], strides = [1, 1]} : vector<8x40xf32> to vector<8x1xf32>
    %42 = vector.extract_strided_slice %40 {offsets = [0, 32], sizes = [16, 1], strides = [1, 1]} : vector<16x40xf32> to vector<16x1xf32>
    %cst_22 = arith.constant 9.99999974E-5 : f32
    %43 = vector.broadcast %cst_22 : f32 to vector<8x1xf32>
    %44 = arith.maximumf %41, %43 : vector<8x1xf32>
    %cst_23 = arith.constant 1.000000e+00 : f32
    %45 = vector.broadcast %cst_23 : f32 to vector<8x1xf32>
    %46 = arith.divf %45, %44 : vector<8x1xf32>
    %47 = vector.broadcast %46 : vector<8x1xf32> to vector<8x32xf32>
    %48 = arith.mulf %30, %47 : vector<8x32xf32>
    %cst_24 = arith.constant 9.99999974E-5 : f32
    %49 = vector.broadcast %cst_24 : f32 to vector<16x1xf32>
    %50 = arith.maximumf %42, %49 : vector<16x1xf32>
    %cst_25 = arith.constant 1.000000e+00 : f32
    %51 = vector.broadcast %cst_25 : f32 to vector<16x1xf32>
    %52 = arith.divf %51, %50 : vector<16x1xf32>
    %53 = vector.broadcast %52 : vector<16x1xf32> to vector<16x32xf32>
    %54 = arith.mulf %34, %53 : vector<16x32xf32>
    %cst_26 = arith.constant dense<0.000000e+00> : vector<8x16xf32>
    %55 = tpu.matmul %48, %54, %cst_26 {dimension_numbers = #tpu.dot_dimension_numbers<[1], [1], [0], [0], [0, 0, 1, 0], [], []>} : vector<8x32xf32>, vector<16x32xf32>, vector<8x16xf32> -> vector<8x16xf32>
    %cst_27 = arith.constant -3.40282347E+38 : f32
    %56 = vector.shape_cast %16 : vector<1x16xi1> to vector<1x16xi1>
    %57 = vector.broadcast %56 : vector<1x16xi1> to vector<8x16xi1>
    %58 = vector.broadcast %cst_27 : f32 to vector<8x16xf32>
    %59 = arith.select %57, %55, %58 : vector<8x16xi1>, vector<8x16xf32>
    %cst_28 = arith.constant dense<0xFF800000> : vector<8xf32>
    %60 = vector.multi_reduction <maximumf>, %59, %cst_28 [1] : vector<8x16xf32> to vector<8xf32>
    %61 = vector.shape_cast %60 : vector<8xf32> to vector<8x1xf32>
    %cst_29 = arith.constant dense<0.000000e+00> : vector<8x1xf32>
    %62 = tpu.matmul %55, %8, %cst_29 {dimension_numbers = #tpu.dot_dimension_numbers<[1], [1], [0], [0], [0, 0, 1, 0], [], []>} : vector<8x16xf32>, vector<1x16xf32>, vector<8x1xf32> -> vector<8x1xf32>
    %63 = vector.broadcast %26 : f32 to vector<8x1xf32>
    %64 = arith.mulf %62, %63 : vector<8x1xf32>
    %cst_30 = arith.constant -3.40282347E+38 : f32
    %65 = vector.shape_cast %12 : vector<8x1xi1> to vector<8x1xi1>
    %66 = vector.broadcast %65 : vector<8x1xi1> to vector<8x16xi1>
    %67 = vector.broadcast %cst_30 : f32 to vector<8x16xf32>
    %68 = arith.select %66, %55, %67 : vector<8x16xi1>, vector<8x16xf32>
    %cst_31 = arith.constant dense<0xFF800000> : vector<16xf32>
    %69 = vector.multi_reduction <maximumf>, %68, %cst_31 [0] : vector<8x16xf32> to vector<16xf32>
    %70 = vector.shape_cast %69 : vector<16xf32> to vector<1x16xf32>
    %71 = tpu.transpose %70, [1, 0] : vector<1x16xf32> -> vector<16x1xf32>
    %cst_32 = arith.constant dense<0.000000e+00> : vector<16x1xf32>
    %72 = tpu.matmul %55, %9, %cst_32 {dimension_numbers = #tpu.dot_dimension_numbers<[0], [0], [1], [1], [0, 1, 1, 1], [], []>} : vector<8x16xf32>, vector<8x1xf32>, vector<16x1xf32> -> vector<16x1xf32>
    %73 = vector.broadcast %23 : f32 to vector<16x1xf32>
    %74 = arith.mulf %72, %73 : vector<16x1xf32>
    %c1_i32 = arith.constant 1 : i32
    %75 = arith.subi %18, %c1_i32 : i32
    %c0_i32 = arith.constant 0 : i32
    %76 = arith.maxsi %75, %c0_i32 : i32
    %c1_i32_33 = arith.constant 1 : i32
    %77 = arith.subi %20, %c1_i32_33 : i32
    %c0_i32_34 = arith.constant 0 : i32
    %78 = arith.maxsi %77, %c0_i32_34 : i32
    %79 = tpu.iota {dimensions = array<i32: 1>} : vector<1x8xi32>
    %80 = vector.broadcast %76 : i32 to vector<1x8xi32>
    %81 = arith.cmpi eq, %79, %80 : vector<1x8xi32>
    %82 = arith.extui %81 : vector<1x8xi1> to vector<1x8xi32>
    %83 = arith.sitofp %82 : vector<1x8xi32> to vector<1x8xf32>
    %84 = tpu.iota {dimensions = array<i32: 1>} : vector<1x16xi32>
    %85 = vector.broadcast %78 : i32 to vector<1x16xi32>
    %86 = arith.cmpi eq, %84, %85 : vector<1x16xi32>
    %87 = arith.extui %86 : vector<1x16xi1> to vector<1x16xi32>
    %88 = arith.sitofp %87 : vector<1x16xi32> to vector<1x16xf32>
    %cst_35 = arith.constant dense<0.000000e+00> : vector<1x32xf32>
    %89 = tpu.matmul %83, %30, %cst_35 {dimension_numbers = #tpu.dot_dimension_numbers<[1], [0], [0], [1], [0, 0, 1, 1], [], []>} : vector<1x8xf32>, vector<8x32xf32>, vector<1x32xf32> -> vector<1x32xf32>
    %cst_36 = arith.constant dense<0.000000e+00> : vector<1x32xf32>
    %90 = tpu.matmul %88, %34, %cst_36 {dimension_numbers = #tpu.dot_dimension_numbers<[1], [0], [0], [1], [0, 0, 1, 1], [], []>} : vector<1x16xf32>, vector<16x32xf32>, vector<1x32xf32> -> vector<1x32xf32>
    %91 = vector.extract_strided_slice %37 {offsets = [0, 0], sizes = [8, 8], strides = [1, 1]} : vector<8x40xf32> to vector<8x8xf32>
    %92 = vector.broadcast %90 : vector<1x32xf32> to vector<8x32xf32>
    %93 = arith.mulf %30, %92 : vector<8x32xf32>
    %cst_37 = arith.constant dense<0.000000e+00> : vector<8x1xf32>
    %94 = tpu.matmul %30, %90, %cst_37 {dimension_numbers = #tpu.dot_dimension_numbers<[1], [1], [0], [0], [0, 0, 1, 0], [], []>} : vector<8x32xf32>, vector<1x32xf32>, vector<8x1xf32> -> vector<8x1xf32>
    %95 = arith.mulf %90, %90 : vector<1x32xf32>
    %cst_38 = arith.constant dense<0.000000e+00> : vector<1xf32>
    %96 = vector.multi_reduction <add>, %95, %cst_38 [1] : vector<1x32xf32> to vector<1xf32>
    %97 = vector.shape_cast %96 : vector<1xf32> to vector<1x1xf32>
    %98 = math.sqrt %97 : vector<1x1xf32>
    %cst_39 = arith.constant 9.99999974E-5 : f32
    %99 = vector.broadcast %cst_39 : f32 to vector<8x1xf32>
    %100 = arith.maximumf %41, %99 : vector<8x1xf32>
    %cst_40 = arith.constant 1.000000e+00 : f32
    %101 = vector.broadcast %cst_40 : f32 to vector<8x1xf32>
    %102 = arith.divf %101, %100 : vector<8x1xf32>
    %cst_41 = arith.constant 9.99999974E-5 : f32
    %103 = vector.broadcast %cst_41 : f32 to vector<1x1xf32>
    %104 = arith.maximumf %98, %103 : vector<1x1xf32>
    %cst_42 = arith.constant 1.000000e+00 : f32
    %105 = vector.broadcast %cst_42 : f32 to vector<1x1xf32>
    %106 = arith.divf %105, %104 : vector<1x1xf32>
    %107 = vector.broadcast %106 : vector<1x1xf32> to vector<8x1xf32>
    %108 = arith.mulf %102, %107 : vector<8x1xf32>
    %109 = arith.mulf %94, %108 : vector<8x1xf32>
    %cst_43 = arith.constant dense<0.000000e+00> : vector<8x8xf32>
    %110 = tpu.matmul %93, %1, %cst_43 {dimension_numbers = #tpu.dot_dimension_numbers<[1], [1], [0], [0], [0, 0, 1, 0], [], []>} : vector<8x32xf32>, vector<8x32xf32>, vector<8x8xf32> -> vector<8x8xf32>
    %111 = arith.mulf %90, %90 : vector<1x32xf32>
    %cst_44 = arith.constant dense<0.000000e+00> : vector<1x8xf32>
    %112 = tpu.matmul %111, %1, %cst_44 {dimension_numbers = #tpu.dot_dimension_numbers<[1], [1], [0], [0], [0, 0, 1, 0], [], []>} : vector<1x32xf32>, vector<8x32xf32>, vector<1x8xf32> -> vector<1x8xf32>
    %113 = math.sqrt %112 : vector<1x8xf32>
    %cst_45 = arith.constant 9.99999974E-5 : f32
    %114 = vector.broadcast %cst_45 : f32 to vector<8x8xf32>
    %115 = arith.maximumf %91, %114 : vector<8x8xf32>
    %cst_46 = arith.constant 1.000000e+00 : f32
    %116 = vector.broadcast %cst_46 : f32 to vector<8x8xf32>
    %117 = arith.divf %116, %115 : vector<8x8xf32>
    %cst_47 = arith.constant 9.99999974E-5 : f32
    %118 = vector.broadcast %cst_47 : f32 to vector<1x8xf32>
    %119 = arith.maximumf %113, %118 : vector<1x8xf32>
    %cst_48 = arith.constant 1.000000e+00 : f32
    %120 = vector.broadcast %cst_48 : f32 to vector<1x8xf32>
    %121 = arith.divf %120, %119 : vector<1x8xf32>
    %122 = vector.broadcast %121 : vector<1x8xf32> to vector<8x8xf32>
    %123 = arith.mulf %117, %122 : vector<8x8xf32>
    %124 = arith.mulf %110, %123 : vector<8x8xf32>
    %125 = vector.extract_strided_slice %40 {offsets = [0, 0], sizes = [16, 8], strides = [1, 1]} : vector<16x40xf32> to vector<16x8xf32>
    %126 = vector.broadcast %89 : vector<1x32xf32> to vector<16x32xf32>
    %127 = arith.mulf %34, %126 : vector<16x32xf32>
    %cst_49 = arith.constant dense<0.000000e+00> : vector<16x1xf32>
    %128 = tpu.matmul %34, %89, %cst_49 {dimension_numbers = #tpu.dot_dimension_numbers<[1], [1], [0], [0], [0, 0, 1, 0], [], []>} : vector<16x32xf32>, vector<1x32xf32>, vector<16x1xf32> -> vector<16x1xf32>
    %129 = arith.mulf %89, %89 : vector<1x32xf32>
    %cst_50 = arith.constant dense<0.000000e+00> : vector<1xf32>
    %130 = vector.multi_reduction <add>, %129, %cst_50 [1] : vector<1x32xf32> to vector<1xf32>
    %131 = vector.shape_cast %130 : vector<1xf32> to vector<1x1xf32>
    %132 = math.sqrt %131 : vector<1x1xf32>
    %cst_51 = arith.constant 9.99999974E-5 : f32
    %133 = vector.broadcast %cst_51 : f32 to vector<16x1xf32>
    %134 = arith.maximumf %42, %133 : vector<16x1xf32>
    %cst_52 = arith.constant 1.000000e+00 : f32
    %135 = vector.broadcast %cst_52 : f32 to vector<16x1xf32>
    %136 = arith.divf %135, %134 : vector<16x1xf32>
    %cst_53 = arith.constant 9.99999974E-5 : f32
    %137 = vector.broadcast %cst_53 : f32 to vector<1x1xf32>
    %138 = arith.maximumf %132, %137 : vector<1x1xf32>
    %cst_54 = arith.constant 1.000000e+00 : f32
    %139 = vector.broadcast %cst_54 : f32 to vector<1x1xf32>
    %140 = arith.divf %139, %138 : vector<1x1xf32>
    %141 = vector.broadcast %140 : vector<1x1xf32> to vector<16x1xf32>
    %142 = arith.mulf %136, %141 : vector<16x1xf32>
    %143 = arith.mulf %128, %142 : vector<16x1xf32>
    %cst_55 = arith.constant dense<0.000000e+00> : vector<16x8xf32>
    %144 = tpu.matmul %127, %1, %cst_55 {dimension_numbers = #tpu.dot_dimension_numbers<[1], [1], [0], [0], [0, 0, 1, 0], [], []>} : vector<16x32xf32>, vector<8x32xf32>, vector<16x8xf32> -> vector<16x8xf32>
    %145 = arith.mulf %89, %89 : vector<1x32xf32>
    %cst_56 = arith.constant dense<0.000000e+00> : vector<1x8xf32>
    %146 = tpu.matmul %145, %1, %cst_56 {dimension_numbers = #tpu.dot_dimension_numbers<[1], [1], [0], [0], [0, 0, 1, 0], [], []>} : vector<1x32xf32>, vector<8x32xf32>, vector<1x8xf32> -> vector<1x8xf32>
    %147 = math.sqrt %146 : vector<1x8xf32>
    %cst_57 = arith.constant 9.99999974E-5 : f32
    %148 = vector.broadcast %cst_57 : f32 to vector<16x8xf32>
    %149 = arith.maximumf %125, %148 : vector<16x8xf32>
    %cst_58 = arith.constant 1.000000e+00 : f32
    %150 = vector.broadcast %cst_58 : f32 to vector<16x8xf32>
    %151 = arith.divf %150, %149 : vector<16x8xf32>
    %cst_59 = arith.constant 9.99999974E-5 : f32
    %152 = vector.broadcast %cst_59 : f32 to vector<1x8xf32>
    %153 = arith.maximumf %147, %152 : vector<1x8xf32>
    %cst_60 = arith.constant 1.000000e+00 : f32
    %154 = vector.broadcast %cst_60 : f32 to vector<1x8xf32>
    %155 = arith.divf %154, %153 : vector<1x8xf32>
    %156 = vector.broadcast %155 : vector<1x8xf32> to vector<16x8xf32>
    %157 = arith.mulf %151, %156 : vector<16x8xf32>
    %158 = arith.mulf %144, %157 : vector<16x8xf32>
    %159 = vector.extract_strided_slice %37 {offsets = [0, 8], sizes = [8, 8], strides = [1, 1]} : vector<8x40xf32> to vector<8x8xf32>
    %160 = vector.extract_strided_slice %40 {offsets = [0, 8], sizes = [16, 8], strides = [1, 1]} : vector<16x40xf32> to vector<16x8xf32>
    %cst_61 = arith.constant 9.99999974E-5 : f32
    %161 = vector.broadcast %cst_61 : f32 to vector<8x8xf32>
    %162 = arith.maximumf %159, %161 : vector<8x8xf32>
    %cst_62 = arith.constant 1.000000e+00 : f32
    %163 = vector.broadcast %cst_62 : f32 to vector<8x8xf32>
    %164 = arith.divf %163, %162 : vector<8x8xf32>
    %cst_63 = arith.constant 9.99999974E-5 : f32
    %165 = vector.broadcast %cst_63 : f32 to vector<16x8xf32>
    %166 = arith.maximumf %160, %165 : vector<16x8xf32>
    %cst_64 = arith.constant 1.000000e+00 : f32
    %167 = vector.broadcast %cst_64 : f32 to vector<16x8xf32>
    %168 = arith.divf %167, %166 : vector<16x8xf32>
    %169 = vector.broadcast %10 : vector<16x1xf32> to vector<16x8xf32>
    %170 = arith.mulf %169, %168 : vector<16x8xf32>
    %cst_65 = arith.constant dense<0.000000e+00> : vector<8x32xf32>
    %171 = tpu.matmul %170, %34, %cst_65 {dimension_numbers = #tpu.dot_dimension_numbers<[0], [0], [1], [1], [0, 1, 1, 1], [], []>} : vector<16x8xf32>, vector<16x32xf32>, vector<8x32xf32> -> vector<8x32xf32>
    %172 = vector.broadcast %9 : vector<8x1xf32> to vector<8x8xf32>
    %173 = arith.mulf %172, %164 : vector<8x8xf32>
    %cst_66 = arith.constant dense<0.000000e+00> : vector<8x32xf32>
    %174 = tpu.matmul %173, %30, %cst_66 {dimension_numbers = #tpu.dot_dimension_numbers<[0], [0], [1], [1], [0, 1, 1, 1], [], []>} : vector<8x8xf32>, vector<8x32xf32>, vector<8x32xf32> -> vector<8x32xf32>
    %175 = arith.mulf %2, %171 : vector<8x32xf32>
    %cst_67 = arith.constant dense<0.000000e+00> : vector<8x8xf32>
    %176 = tpu.matmul %30, %175, %cst_67 {dimension_numbers = #tpu.dot_dimension_numbers<[1], [1], [0], [0], [0, 0, 1, 0], [], []>} : vector<8x32xf32>, vector<8x32xf32>, vector<8x8xf32> -> vector<8x8xf32>
    %177 = arith.mulf %176, %164 : vector<8x8xf32>
    %178 = vector.broadcast %26 : f32 to vector<8x8xf32>
    %179 = arith.mulf %177, %178 : vector<8x8xf32>
    %180 = arith.mulf %2, %174 : vector<8x32xf32>
    %cst_68 = arith.constant dense<0.000000e+00> : vector<16x8xf32>
    %181 = tpu.matmul %34, %180, %cst_68 {dimension_numbers = #tpu.dot_dimension_numbers<[1], [1], [0], [0], [0, 0, 1, 0], [], []>} : vector<16x32xf32>, vector<8x32xf32>, vector<16x8xf32> -> vector<16x8xf32>
    %182 = arith.mulf %181, %168 : vector<16x8xf32>
    %183 = vector.broadcast %23 : f32 to vector<16x8xf32>
    %184 = arith.mulf %182, %183 : vector<16x8xf32>
    %185 = vector.shape_cast %30 : vector<8x32xf32> to vector<8x1x32xf32>
    %186 = vector.shape_cast %2 : vector<8x32xf32> to vector<1x8x32xf32>
    %187 = vector.broadcast %185 : vector<8x1x32xf32> to vector<8x8x32xf32>
    %188 = vector.broadcast %186 : vector<1x8x32xf32> to vector<8x8x32xf32>
    %189 = arith.mulf %187, %188 : vector<8x8x32xf32>
    %190 = vector.shape_cast %164 : vector<8x8xf32> to vector<8x8x1xf32>
    %191 = vector.broadcast %190 : vector<8x8x1xf32> to vector<8x8x32xf32>
    %192 = arith.mulf %189, %191 : vector<8x8x32xf32>
    %193 = vector.shape_cast %192 : vector<8x8x32xf32> to vector<64x32xf32>
    %cst_69 = arith.constant -3.40282347E+38 : f32
    %194 = vector.broadcast %cst_69 : f32 to vector<8x8xf32>
    %cst_70 = arith.constant dense<0.000000e+00> : vector<64x16xf32>
    %195 = tpu.matmul %193, %34, %cst_70 {dimension_numbers = #tpu.dot_dimension_numbers<[1], [1], [0], [0], [0, 0, 1, 0], [], []>} : vector<64x32xf32>, vector<16x32xf32>, vector<64x16xf32> -> vector<64x16xf32>
    %196 = vector.shape_cast %195 : vector<64x16xf32> to vector<8x8x16xf32>
    %197 = tpu.transpose %168, [1, 0] : vector<16x8xf32> -> vector<8x16xf32>
    %198 = vector.shape_cast %197 : vector<8x16xf32> to vector<1x8x16xf32>
    %199 = vector.broadcast %198 : vector<1x8x16xf32> to vector<8x8x16xf32>
    %200 = arith.mulf %196, %199 : vector<8x8x16xf32>
    %201 = vector.shape_cast %16 : vector<1x16xi1> to vector<1x1x16xi1>
    %cst_71 = arith.constant -3.40282347E+38 : f32
    %202 = vector.shape_cast %201 : vector<1x1x16xi1> to vector<1x1x16xi1>
    %203 = vector.broadcast %202 : vector<1x1x16xi1> to vector<8x8x16xi1>
    %204 = vector.broadcast %cst_71 : f32 to vector<8x8x16xf32>
    %205 = arith.select %203, %200, %204 : vector<8x8x16xi1>, vector<8x8x16xf32>
    %cst_72 = arith.constant dense<0xFF800000> : vector<8x8xf32>
    %206 = vector.multi_reduction <maximumf>, %205, %cst_72 [2] : vector<8x8x16xf32> to vector<8x8xf32>
    %207 = arith.maximumf %194, %206 : vector<8x8xf32>
    %208 = vector.shape_cast %12 : vector<8x1xi1> to vector<8x1x1xi1>
    %cst_73 = arith.constant -3.40282347E+38 : f32
    %209 = vector.shape_cast %208 : vector<8x1x1xi1> to vector<8x1x1xi1>
    %210 = vector.broadcast %209 : vector<8x1x1xi1> to vector<8x8x16xi1>
    %211 = vector.broadcast %cst_73 : f32 to vector<8x8x16xf32>
    %212 = arith.select %210, %200, %211 : vector<8x8x16xi1>, vector<8x8x16xf32>
    %cst_74 = arith.constant dense<0xFF800000> : vector<8x16xf32>
    %213 = vector.multi_reduction <maximumf>, %212, %cst_74 [0] : vector<8x8x16xf32> to vector<8x16xf32>
    %214 = tpu.transpose %213, [1, 0] : vector<8x16xf32> -> vector<16x8xf32>
    %cst_75 = arith.constant dense<0.000000e+00> : vector<8x32xf32>
    %215 = tpu.matmul %55, %34, %cst_75 {dimension_numbers = #tpu.dot_dimension_numbers<[1], [0], [0], [1], [0, 0, 1, 1], [], []>} : vector<8x16xf32>, vector<16x32xf32>, vector<8x32xf32> -> vector<8x32xf32>
    %cst_76 = arith.constant dense<0.000000e+00> : vector<16x32xf32>
    %216 = tpu.matmul %55, %30, %cst_76 {dimension_numbers = #tpu.dot_dimension_numbers<[0], [0], [1], [1], [0, 1, 1, 1], [], []>} : vector<8x16xf32>, vector<8x32xf32>, vector<16x32xf32> -> vector<16x32xf32>
    %217 = vector.broadcast %9 : vector<8x1xf32> to vector<8x32xf32>
    %218 = arith.mulf %215, %217 : vector<8x32xf32>
    %cst_77 = arith.constant dense<0xFF800000> : vector<8xf32>
    %219 = vector.multi_reduction <maximumf>, %218, %cst_77 [1] : vector<8x32xf32> to vector<8xf32>
    %220 = vector.shape_cast %219 : vector<8xf32> to vector<8x1xf32>
    %221 = vector.broadcast %220 : vector<8x1xf32> to vector<8x32xf32>
    %222 = arith.subf %218, %221 : vector<8x32xf32>
    %223 = math.exp %222 : vector<8x32xf32>
    %cst_78 = arith.constant dense<0.000000e+00> : vector<8xf32>
    %224 = vector.multi_reduction <add>, %223, %cst_78 [1] : vector<8x32xf32> to vector<8xf32>
    %225 = vector.shape_cast %224 : vector<8xf32> to vector<8x1xf32>
    %226 = vector.broadcast %225 : vector<8x1xf32> to vector<8x32xf32>
    %227 = arith.divf %223, %226 : vector<8x32xf32>
    %228 = vector.broadcast %9 : vector<8x1xf32> to vector<8x32xf32>
    %229 = arith.mulf %227, %228 : vector<8x32xf32>
    %cst_79 = arith.constant dense<0.000000e+00> : vector<8xf32>
    %230 = vector.multi_reduction <add>, %229, %cst_79 [1] : vector<8x32xf32> to vector<8xf32>
    %231 = vector.shape_cast %230 : vector<8xf32> to vector<8x1xf32>
    %cst_80 = arith.constant 9.99999982E-14 : f32
    %232 = vector.broadcast %cst_80 : f32 to vector<8x1xf32>
    %233 = arith.addf %231, %232 : vector<8x1xf32>
    %234 = vector.broadcast %233 : vector<8x1xf32> to vector<8x32xf32>
    %235 = arith.divf %229, %234 : vector<8x32xf32>
    %236 = vector.broadcast %10 : vector<16x1xf32> to vector<16x32xf32>
    %237 = arith.mulf %216, %236 : vector<16x32xf32>
    %cst_81 = arith.constant dense<0xFF800000> : vector<16xf32>
    %238 = vector.multi_reduction <maximumf>, %237, %cst_81 [1] : vector<16x32xf32> to vector<16xf32>
    %239 = vector.shape_cast %238 : vector<16xf32> to vector<16x1xf32>
    %240 = vector.broadcast %239 : vector<16x1xf32> to vector<16x32xf32>
    %241 = arith.subf %237, %240 : vector<16x32xf32>
    %242 = math.exp %241 : vector<16x32xf32>
    %cst_82 = arith.constant dense<0.000000e+00> : vector<16xf32>
    %243 = vector.multi_reduction <add>, %242, %cst_82 [1] : vector<16x32xf32> to vector<16xf32>
    %244 = vector.shape_cast %243 : vector<16xf32> to vector<16x1xf32>
    %245 = vector.broadcast %244 : vector<16x1xf32> to vector<16x32xf32>
    %246 = arith.divf %242, %245 : vector<16x32xf32>
    %247 = vector.broadcast %10 : vector<16x1xf32> to vector<16x32xf32>
    %248 = arith.mulf %246, %247 : vector<16x32xf32>
    %cst_83 = arith.constant dense<0.000000e+00> : vector<16xf32>
    %249 = vector.multi_reduction <add>, %248, %cst_83 [1] : vector<16x32xf32> to vector<16xf32>
    %250 = vector.shape_cast %249 : vector<16xf32> to vector<16x1xf32>
    %cst_84 = arith.constant 9.99999982E-14 : f32
    %251 = vector.broadcast %cst_84 : f32 to vector<16x1xf32>
    %252 = arith.addf %250, %251 : vector<16x1xf32>
    %253 = vector.broadcast %252 : vector<16x1xf32> to vector<16x32xf32>
    %254 = arith.divf %248, %253 : vector<16x32xf32>
    %255 = vector.extract_strided_slice %37 {offsets = [0, 16], sizes = [8, 8], strides = [1, 1]} : vector<8x40xf32> to vector<8x8xf32>
    %256 = arith.mulf %30, %235 : vector<8x32xf32>
    %cst_85 = arith.constant dense<0.000000e+00> : vector<8xf32>
    %257 = vector.multi_reduction <add>, %256, %cst_85 [1] : vector<8x32xf32> to vector<8xf32>
    %258 = vector.shape_cast %257 : vector<8xf32> to vector<8x1xf32>
    %259 = arith.mulf %235, %235 : vector<8x32xf32>
    %cst_86 = arith.constant dense<0.000000e+00> : vector<8xf32>
    %260 = vector.multi_reduction <add>, %259, %cst_86 [1] : vector<8x32xf32> to vector<8xf32>
    %261 = vector.shape_cast %260 : vector<8xf32> to vector<8x1xf32>
    %262 = math.sqrt %261 : vector<8x1xf32>
    %cst_87 = arith.constant 9.99999974E-5 : f32
    %263 = vector.broadcast %cst_87 : f32 to vector<8x1xf32>
    %264 = arith.maximumf %41, %263 : vector<8x1xf32>
    %cst_88 = arith.constant 1.000000e+00 : f32
    %265 = vector.broadcast %cst_88 : f32 to vector<8x1xf32>
    %266 = arith.divf %265, %264 : vector<8x1xf32>
    %cst_89 = arith.constant 9.99999974E-5 : f32
    %267 = vector.broadcast %cst_89 : f32 to vector<8x1xf32>
    %268 = arith.maximumf %262, %267 : vector<8x1xf32>
    %cst_90 = arith.constant 1.000000e+00 : f32
    %269 = vector.broadcast %cst_90 : f32 to vector<8x1xf32>
    %270 = arith.divf %269, %268 : vector<8x1xf32>
    %271 = arith.mulf %266, %270 : vector<8x1xf32>
    %272 = arith.mulf %258, %271 : vector<8x1xf32>
    %cst_91 = arith.constant dense<0.000000e+00> : vector<8x8xf32>
    %273 = tpu.matmul %256, %3, %cst_91 {dimension_numbers = #tpu.dot_dimension_numbers<[1], [1], [0], [0], [0, 0, 1, 0], [], []>} : vector<8x32xf32>, vector<8x32xf32>, vector<8x8xf32> -> vector<8x8xf32>
    %274 = arith.mulf %235, %235 : vector<8x32xf32>
    %cst_92 = arith.constant dense<0.000000e+00> : vector<8x8xf32>
    %275 = tpu.matmul %274, %3, %cst_92 {dimension_numbers = #tpu.dot_dimension_numbers<[1], [1], [0], [0], [0, 0, 1, 0], [], []>} : vector<8x32xf32>, vector<8x32xf32>, vector<8x8xf32> -> vector<8x8xf32>
    %276 = math.sqrt %275 : vector<8x8xf32>
    %cst_93 = arith.constant 9.99999974E-5 : f32
    %277 = vector.broadcast %cst_93 : f32 to vector<8x8xf32>
    %278 = arith.maximumf %255, %277 : vector<8x8xf32>
    %cst_94 = arith.constant 1.000000e+00 : f32
    %279 = vector.broadcast %cst_94 : f32 to vector<8x8xf32>
    %280 = arith.divf %279, %278 : vector<8x8xf32>
    %cst_95 = arith.constant 9.99999974E-5 : f32
    %281 = vector.broadcast %cst_95 : f32 to vector<8x8xf32>
    %282 = arith.maximumf %276, %281 : vector<8x8xf32>
    %cst_96 = arith.constant 1.000000e+00 : f32
    %283 = vector.broadcast %cst_96 : f32 to vector<8x8xf32>
    %284 = arith.divf %283, %282 : vector<8x8xf32>
    %285 = arith.mulf %280, %284 : vector<8x8xf32>
    %286 = arith.mulf %273, %285 : vector<8x8xf32>
    %287 = vector.extract_strided_slice %40 {offsets = [0, 16], sizes = [16, 8], strides = [1, 1]} : vector<16x40xf32> to vector<16x8xf32>
    %288 = arith.mulf %34, %254 : vector<16x32xf32>
    %cst_97 = arith.constant dense<0.000000e+00> : vector<16xf32>
    %289 = vector.multi_reduction <add>, %288, %cst_97 [1] : vector<16x32xf32> to vector<16xf32>
    %290 = vector.shape_cast %289 : vector<16xf32> to vector<16x1xf32>
    %291 = arith.mulf %254, %254 : vector<16x32xf32>
    %cst_98 = arith.constant dense<0.000000e+00> : vector<16xf32>
    %292 = vector.multi_reduction <add>, %291, %cst_98 [1] : vector<16x32xf32> to vector<16xf32>
    %293 = vector.shape_cast %292 : vector<16xf32> to vector<16x1xf32>
    %294 = math.sqrt %293 : vector<16x1xf32>
    %cst_99 = arith.constant 9.99999974E-5 : f32
    %295 = vector.broadcast %cst_99 : f32 to vector<16x1xf32>
    %296 = arith.maximumf %42, %295 : vector<16x1xf32>
    %cst_100 = arith.constant 1.000000e+00 : f32
    %297 = vector.broadcast %cst_100 : f32 to vector<16x1xf32>
    %298 = arith.divf %297, %296 : vector<16x1xf32>
    %cst_101 = arith.constant 9.99999974E-5 : f32
    %299 = vector.broadcast %cst_101 : f32 to vector<16x1xf32>
    %300 = arith.maximumf %294, %299 : vector<16x1xf32>
    %cst_102 = arith.constant 1.000000e+00 : f32
    %301 = vector.broadcast %cst_102 : f32 to vector<16x1xf32>
    %302 = arith.divf %301, %300 : vector<16x1xf32>
    %303 = arith.mulf %298, %302 : vector<16x1xf32>
    %304 = arith.mulf %290, %303 : vector<16x1xf32>
    %cst_103 = arith.constant dense<0.000000e+00> : vector<16x8xf32>
    %305 = tpu.matmul %288, %3, %cst_103 {dimension_numbers = #tpu.dot_dimension_numbers<[1], [1], [0], [0], [0, 0, 1, 0], [], []>} : vector<16x32xf32>, vector<8x32xf32>, vector<16x8xf32> -> vector<16x8xf32>
    %306 = arith.mulf %254, %254 : vector<16x32xf32>
    %cst_104 = arith.constant dense<0.000000e+00> : vector<16x8xf32>
    %307 = tpu.matmul %306, %3, %cst_104 {dimension_numbers = #tpu.dot_dimension_numbers<[1], [1], [0], [0], [0, 0, 1, 0], [], []>} : vector<16x32xf32>, vector<8x32xf32>, vector<16x8xf32> -> vector<16x8xf32>
    %308 = math.sqrt %307 : vector<16x8xf32>
    %cst_105 = arith.constant 9.99999974E-5 : f32
    %309 = vector.broadcast %cst_105 : f32 to vector<16x8xf32>
    %310 = arith.maximumf %287, %309 : vector<16x8xf32>
    %cst_106 = arith.constant 1.000000e+00 : f32
    %311 = vector.broadcast %cst_106 : f32 to vector<16x8xf32>
    %312 = arith.divf %311, %310 : vector<16x8xf32>
    %cst_107 = arith.constant 9.99999974E-5 : f32
    %313 = vector.broadcast %cst_107 : f32 to vector<16x8xf32>
    %314 = arith.maximumf %308, %313 : vector<16x8xf32>
    %cst_108 = arith.constant 1.000000e+00 : f32
    %315 = vector.broadcast %cst_108 : f32 to vector<16x8xf32>
    %316 = arith.divf %315, %314 : vector<16x8xf32>
    %317 = arith.mulf %312, %316 : vector<16x8xf32>
    %318 = arith.mulf %305, %317 : vector<16x8xf32>
    %cst_109 = arith.constant -3.40282347E+38 : f32
    %319 = vector.broadcast %cst_109 : f32 to vector<8x32xf32>
    %320 = vector.shape_cast %55 : vector<8x16xf32> to vector<8x16x1xf32>
    %321 = vector.shape_cast %34 : vector<16x32xf32> to vector<1x16x32xf32>
    %322 = vector.broadcast %320 : vector<8x16x1xf32> to vector<8x16x32xf32>
    %323 = vector.broadcast %321 : vector<1x16x32xf32> to vector<8x16x32xf32>
    %324 = arith.mulf %322, %323 : vector<8x16x32xf32>
    %325 = vector.shape_cast %14 : vector<16x1xi1> to vector<1x16x1xi1>
    %cst_110 = arith.constant -3.40282347E+38 : f32
    %326 = vector.shape_cast %325 : vector<1x16x1xi1> to vector<1x16x1xi1>
    %327 = vector.broadcast %326 : vector<1x16x1xi1> to vector<8x16x32xi1>
    %328 = vector.broadcast %cst_110 : f32 to vector<8x16x32xf32>
    %329 = arith.select %327, %324, %328 : vector<8x16x32xi1>, vector<8x16x32xf32>
    %cst_111 = arith.constant dense<0xFF800000> : vector<8x32xf32>
    %330 = vector.multi_reduction <maximumf>, %329, %cst_111 [1] : vector<8x16x32xf32> to vector<8x32xf32>
    %331 = arith.maximumf %319, %330 : vector<8x32xf32>
    %cst_112 = arith.constant -3.40282347E+38 : f32
    %332 = vector.broadcast %cst_112 : f32 to vector<16x32xf32>
    %333 = vector.shape_cast %55 : vector<8x16xf32> to vector<8x16x1xf32>
    %334 = vector.shape_cast %30 : vector<8x32xf32> to vector<8x1x32xf32>
    %335 = vector.broadcast %333 : vector<8x16x1xf32> to vector<8x16x32xf32>
    %336 = vector.broadcast %334 : vector<8x1x32xf32> to vector<8x16x32xf32>
    %337 = arith.mulf %335, %336 : vector<8x16x32xf32>
    %338 = vector.shape_cast %12 : vector<8x1xi1> to vector<8x1x1xi1>
    %cst_113 = arith.constant -3.40282347E+38 : f32
    %339 = vector.shape_cast %338 : vector<8x1x1xi1> to vector<8x1x1xi1>
    %340 = vector.broadcast %339 : vector<8x1x1xi1> to vector<8x16x32xi1>
    %341 = vector.broadcast %cst_113 : f32 to vector<8x16x32xf32>
    %342 = arith.select %340, %337, %341 : vector<8x16x32xi1>, vector<8x16x32xf32>
    %cst_114 = arith.constant dense<0xFF800000> : vector<16x32xf32>
    %343 = vector.multi_reduction <maximumf>, %342, %cst_114 [0] : vector<8x16x32xf32> to vector<16x32xf32>
    %344 = arith.maximumf %332, %343 : vector<16x32xf32>
    %345 = vector.extract_strided_slice %37 {offsets = [0, 24], sizes = [8, 8], strides = [1, 1]} : vector<8x40xf32> to vector<8x8xf32>
    %346 = arith.mulf %30, %331 : vector<8x32xf32>
    %cst_115 = arith.constant dense<0.000000e+00> : vector<8xf32>
    %347 = vector.multi_reduction <add>, %346, %cst_115 [1] : vector<8x32xf32> to vector<8xf32>
    %348 = vector.shape_cast %347 : vector<8xf32> to vector<8x1xf32>
    %349 = arith.mulf %331, %331 : vector<8x32xf32>
    %cst_116 = arith.constant dense<0.000000e+00> : vector<8xf32>
    %350 = vector.multi_reduction <add>, %349, %cst_116 [1] : vector<8x32xf32> to vector<8xf32>
    %351 = vector.shape_cast %350 : vector<8xf32> to vector<8x1xf32>
    %352 = math.sqrt %351 : vector<8x1xf32>
    %cst_117 = arith.constant 9.99999974E-5 : f32
    %353 = vector.broadcast %cst_117 : f32 to vector<8x1xf32>
    %354 = arith.maximumf %41, %353 : vector<8x1xf32>
    %cst_118 = arith.constant 1.000000e+00 : f32
    %355 = vector.broadcast %cst_118 : f32 to vector<8x1xf32>
    %356 = arith.divf %355, %354 : vector<8x1xf32>
    %cst_119 = arith.constant 9.99999974E-5 : f32
    %357 = vector.broadcast %cst_119 : f32 to vector<8x1xf32>
    %358 = arith.maximumf %352, %357 : vector<8x1xf32>
    %cst_120 = arith.constant 1.000000e+00 : f32
    %359 = vector.broadcast %cst_120 : f32 to vector<8x1xf32>
    %360 = arith.divf %359, %358 : vector<8x1xf32>
    %361 = arith.mulf %356, %360 : vector<8x1xf32>
    %362 = arith.mulf %348, %361 : vector<8x1xf32>
    %cst_121 = arith.constant dense<0.000000e+00> : vector<8x8xf32>
    %363 = tpu.matmul %346, %4, %cst_121 {dimension_numbers = #tpu.dot_dimension_numbers<[1], [1], [0], [0], [0, 0, 1, 0], [], []>} : vector<8x32xf32>, vector<8x32xf32>, vector<8x8xf32> -> vector<8x8xf32>
    %364 = arith.mulf %331, %331 : vector<8x32xf32>
    %cst_122 = arith.constant dense<0.000000e+00> : vector<8x8xf32>
    %365 = tpu.matmul %364, %4, %cst_122 {dimension_numbers = #tpu.dot_dimension_numbers<[1], [1], [0], [0], [0, 0, 1, 0], [], []>} : vector<8x32xf32>, vector<8x32xf32>, vector<8x8xf32> -> vector<8x8xf32>
    %366 = math.sqrt %365 : vector<8x8xf32>
    %cst_123 = arith.constant 9.99999974E-5 : f32
    %367 = vector.broadcast %cst_123 : f32 to vector<8x8xf32>
    %368 = arith.maximumf %345, %367 : vector<8x8xf32>
    %cst_124 = arith.constant 1.000000e+00 : f32
    %369 = vector.broadcast %cst_124 : f32 to vector<8x8xf32>
    %370 = arith.divf %369, %368 : vector<8x8xf32>
    %cst_125 = arith.constant 9.99999974E-5 : f32
    %371 = vector.broadcast %cst_125 : f32 to vector<8x8xf32>
    %372 = arith.maximumf %366, %371 : vector<8x8xf32>
    %cst_126 = arith.constant 1.000000e+00 : f32
    %373 = vector.broadcast %cst_126 : f32 to vector<8x8xf32>
    %374 = arith.divf %373, %372 : vector<8x8xf32>
    %375 = arith.mulf %370, %374 : vector<8x8xf32>
    %376 = arith.mulf %363, %375 : vector<8x8xf32>
    %377 = vector.extract_strided_slice %40 {offsets = [0, 24], sizes = [16, 8], strides = [1, 1]} : vector<16x40xf32> to vector<16x8xf32>
    %378 = arith.mulf %34, %344 : vector<16x32xf32>
    %cst_127 = arith.constant dense<0.000000e+00> : vector<16xf32>
    %379 = vector.multi_reduction <add>, %378, %cst_127 [1] : vector<16x32xf32> to vector<16xf32>
    %380 = vector.shape_cast %379 : vector<16xf32> to vector<16x1xf32>
    %381 = arith.mulf %344, %344 : vector<16x32xf32>
    %cst_128 = arith.constant dense<0.000000e+00> : vector<16xf32>
    %382 = vector.multi_reduction <add>, %381, %cst_128 [1] : vector<16x32xf32> to vector<16xf32>
    %383 = vector.shape_cast %382 : vector<16xf32> to vector<16x1xf32>
    %384 = math.sqrt %383 : vector<16x1xf32>
    %cst_129 = arith.constant 9.99999974E-5 : f32
    %385 = vector.broadcast %cst_129 : f32 to vector<16x1xf32>
    %386 = arith.maximumf %42, %385 : vector<16x1xf32>
    %cst_130 = arith.constant 1.000000e+00 : f32
    %387 = vector.broadcast %cst_130 : f32 to vector<16x1xf32>
    %388 = arith.divf %387, %386 : vector<16x1xf32>
    %cst_131 = arith.constant 9.99999974E-5 : f32
    %389 = vector.broadcast %cst_131 : f32 to vector<16x1xf32>
    %390 = arith.maximumf %384, %389 : vector<16x1xf32>
    %cst_132 = arith.constant 1.000000e+00 : f32
    %391 = vector.broadcast %cst_132 : f32 to vector<16x1xf32>
    %392 = arith.divf %391, %390 : vector<16x1xf32>
    %393 = arith.mulf %388, %392 : vector<16x1xf32>
    %394 = arith.mulf %380, %393 : vector<16x1xf32>
    %cst_133 = arith.constant dense<0.000000e+00> : vector<16x8xf32>
    %395 = tpu.matmul %378, %4, %cst_133 {dimension_numbers = #tpu.dot_dimension_numbers<[1], [1], [0], [0], [0, 0, 1, 0], [], []>} : vector<16x32xf32>, vector<8x32xf32>, vector<16x8xf32> -> vector<16x8xf32>
    %396 = arith.mulf %344, %344 : vector<16x32xf32>
    %cst_134 = arith.constant dense<0.000000e+00> : vector<16x8xf32>
    %397 = tpu.matmul %396, %4, %cst_134 {dimension_numbers = #tpu.dot_dimension_numbers<[1], [1], [0], [0], [0, 0, 1, 0], [], []>} : vector<16x32xf32>, vector<8x32xf32>, vector<16x8xf32> -> vector<16x8xf32>
    %398 = math.sqrt %397 : vector<16x8xf32>
    %cst_135 = arith.constant 9.99999974E-5 : f32
    %399 = vector.broadcast %cst_135 : f32 to vector<16x8xf32>
    %400 = arith.maximumf %377, %399 : vector<16x8xf32>
    %cst_136 = arith.constant 1.000000e+00 : f32
    %401 = vector.broadcast %cst_136 : f32 to vector<16x8xf32>
    %402 = arith.divf %401, %400 : vector<16x8xf32>
    %cst_137 = arith.constant 9.99999974E-5 : f32
    %403 = vector.broadcast %cst_137 : f32 to vector<16x8xf32>
    %404 = arith.maximumf %398, %403 : vector<16x8xf32>
    %cst_138 = arith.constant 1.000000e+00 : f32
    %405 = vector.broadcast %cst_138 : f32 to vector<16x8xf32>
    %406 = arith.divf %405, %404 : vector<16x8xf32>
    %407 = arith.mulf %402, %406 : vector<16x8xf32>
    %408 = arith.mulf %395, %407 : vector<16x8xf32>
    %cst_139 = arith.constant 0.000000e+00 : f32
    %409 = vector.broadcast %cst_139 : f32 to vector<8x83xf32>
    %cst_140 = arith.constant 0.000000e+00 : f32
    %410 = vector.broadcast %cst_140 : f32 to vector<16x83xf32>
    %411 = tpu.concatenate %61, %64, %109, %124, %207, %179, %272, %286, %362, %376, %409 in 1 : vector<8x1xf32>, vector<8x1xf32>, vector<8x1xf32>, vector<8x8xf32>, vector<8x8xf32>, vector<8x8xf32>, vector<8x1xf32>, vector<8x8xf32>, vector<8x1xf32>, vector<8x8xf32>, vector<8x83xf32> -> vector<8x128xf32>
    %c0_141 = arith.constant 0 : index
    %c0_142 = arith.constant 0 : index
    %c0_143 = arith.constant 0 : index
    %412 = vector.load %arg7[%c0_141, %c0_142, %c0_143] : memref<1x8x128xf32, #tpu.memory_space<vmem>>, vector<1x8x128xf32>
    %413 = vector.shape_cast %412 : vector<1x8x128xf32> to vector<8x128xf32>
    %414 = vector.shape_cast %411 : vector<8x128xf32> to vector<1x8x128xf32>
    tpu.vector_store %arg7[%c0_141, %c0_142, %c0_143], %414 {strides = array<i32>} : memref<1x8x128xf32, #tpu.memory_space<vmem>>, vector<1x8x128xf32>,
    %415 = tpu.concatenate %71, %74, %143, %158, %214, %184, %304, %318, %394, %408, %410 in 1 : vector<16x1xf32>, vector<16x1xf32>, vector<16x1xf32>, vector<16x8xf32>, vector<16x8xf32>, vector<16x8xf32>, vector<16x1xf32>, vector<16x8xf32>, vector<16x1xf32>, vector<16x8xf32>, vector<16x83xf32> -> vector<16x128xf32>
    %c0_144 = arith.constant 0 : index
    %c0_145 = arith.constant 0 : index
    %c0_146 = arith.constant 0 : index
    %416 = vector.load %arg8[%c0_144, %c0_145, %c0_146] : memref<1x16x128xf32, #tpu.memory_space<vmem>>, vector<1x16x128xf32>
    %417 = vector.shape_cast %416 : vector<1x16x128xf32> to vector<16x128xf32>
    %418 = vector.shape_cast %415 : vector<16x128xf32> to vector<1x16x128xf32>
    tpu.vector_store %arg8[%c0_144, %c0_145, %c0_146], %418 {strides = array<i32>} : memref<1x16x128xf32, #tpu.memory_space<vmem>>, vector<1x16x128xf32>,
    return
  }
  func.func @transform_0(%arg0: i32, %arg1: memref<2x2xi32, #tpu.memory_space<smem>>) -> (i32, i32, i32) {
    %c0_i32 = arith.constant 0 : i32
    %c0_i32_0 = arith.constant 0 : i32
    %c0_i32_1 = arith.constant 0 : i32
    return %arg0, %c0_i32, %c0_i32_0 : i32, i32, i32
  }
  func.func @transform_1(%arg0: i32, %arg1: memref<2x2xi32, #tpu.memory_space<smem>>) -> (i32, i32, i32) {
    %c0_i32 = arith.constant 0 : i32
    %c0_i32_0 = arith.constant 0 : i32
    %c0_i32_1 = arith.constant 0 : i32
    return %arg0, %c0_i32, %c0_i32_0 : i32, i32, i32
  }
  func.func @transform_2(%arg0: i32, %arg1: memref<2x2xi32, #tpu.memory_space<smem>>) -> (i32, i32, i32) {
    %c0_i32 = arith.constant 0 : i32
    %c0_i32_0 = arith.constant 0 : i32
    %c0_i32_1 = arith.constant 0 : i32
    return %arg0, %c0_i32, %c0_i32_0 : i32, i32, i32
  }
  func.func @transform_3(%arg0: i32, %arg1: memref<2x2xi32, #tpu.memory_space<smem>>) -> (i32, i32, i32) {
    %c0_i32 = arith.constant 0 : i32
    %c0_i32_0 = arith.constant 0 : i32
    %c0_i32_1 = arith.constant 0 : i32
    return %arg0, %c0_i32, %c0_i32_0 : i32, i32, i32
  }
  func.func @transform_4(%arg0: i32, %arg1: memref<2x2xi32, #tpu.memory_space<smem>>) -> (i32, i32) {
    %c0_i32 = arith.constant 0 : i32
    %c0_i32_0 = arith.constant 0 : i32
    %c0_i32_1 = arith.constant 0 : i32
    return %c0_i32, %c0_i32_0 : i32, i32
  }
  func.func @transform_5(%arg0: i32, %arg1: memref<2x2xi32, #tpu.memory_space<smem>>) -> (i32, i32, i32) {
    %c0_i32 = arith.constant 0 : i32
    %c0_i32_0 = arith.constant 0 : i32
    %c0_i32_1 = arith.constant 0 : i32
    return %arg0, %c0_i32, %c0_i32_0 : i32, i32, i32
  }
  func.func @transform_6(%arg0: i32, %arg1: memref<2x2xi32, #tpu.memory_space<smem>>) -> (i32, i32, i32) {
    %c0_i32 = arith.constant 0 : i32
    %c0_i32_0 = arith.constant 0 : i32
    %c0_i32_1 = arith.constant 0 : i32
    return %arg0, %c0_i32, %c0_i32_0 : i32, i32, i32
  }
}

</mosaic_0001>

<llo_original>
// kernel: tpu_custom_call.1
$region0: #{tpu_custom_call.1}
  #allocation0 [shape = 'u32[]', space=smem, size = 0x4, offset = 0x4, fixed_abs, tag = 'smem constant byte address 0x4 - core index']
  #allocation1 [shape = 'u32[72,128]{1,0:T(1,128)}', space=vmem, size = 0x9000, scoped, tag = 'internal scratch']
  #allocation2 [shape = 's32[1]{0}', space=sflag, size = 0x4, scoped, tag = 'scoped memory for tpu_custom_call.1']
  #allocation3 [shape = 'u8[1024]{0}', space=smem, size = 0x400, scoped, tag = 'prefetched SMEM operand 0']
  %s0 = inlined_call_operand.vmem [shape: s32[2,2], index: 0, kind: input, shape index: {}]
  %s1 = inlined_call_operand.vmem [shape: f32[2,8,32], index: 1, kind: input, shape index: {}]
  %s2 = inlined_call_operand.vmem [shape: f32[2,1,8], index: 2, kind: input, shape index: {}]
  %s3 = inlined_call_operand.vmem [shape: f32[2,16,32], index: 3, kind: input, shape index: {}]
  %s4 = inlined_call_operand.vmem [shape: f32[2,1,16], index: 4, kind: input, shape index: {}]
  %s5 = inlined_call_operand.vmem [shape: f32[40,32], index: 5, kind: input, shape index: {}]
  %s6 = inlined_call_operand.hbm [shape: f32[2,8,128], index: 6, kind: output, shape index: {0}]
  %s7 = inlined_call_operand.hbm [shape: f32[2,16,128], index: 7, kind: output, shape index: {1}]
  %8 = xla_tuple %s6, %s7
  %s9 = sld [smem:[#allocation0]]
  $region61: #{tpu_custom_call.1} parent=0
    _
  %s11 = ssub.s32 1, %s9
  %s12 = scalar_select 0, %s11, %s9
  %s14 = sshll.u32 %s0, 4
  %s15 = int_to_ptr.vmem [resolvable:$true] %s14
  %17 = dma.vmem_to_smem %s15, 32, [#allocation3], [#allocation2]
  %19 = dma.done [#allocation2], 32
  %20 = sfence
  $region1: #{tpu_custom_call.1} parent=0
    #allocation4 [shape = 'u8[8192]{0}', space=vmem, size = 0x2000, scoped, tag = 'output window, operand 0']
    #allocation5 [shape = 's32[2]{0}', space=sflag, size = 0x8, scoped, tag = 'scoped memory for tpu_custom_call.1']
    #allocation6 [shape = 'u8[16384]{0}', space=vmem, size = 0x4000, scoped, tag = 'output window, operand 1']
    #allocation7 [shape = 's32[2]{0}', space=sflag, size = 0x8, scoped, tag = 'scoped memory for tpu_custom_call.1']
    %21 = vsyncpa [#allocation5], 0
    %s22 = scalar_lea.sflag [#allocation5], 1
    %23 = vsyncpa %s22, 0
    %24 = vsyncpa [#allocation7], 0
    %s25 = scalar_lea.sflag [#allocation7], 1
    %26 = vsyncpa %s25, 0
    loop: start=0, step=1, limit=4
    $region2: #{tpu_custom_call.1} parent=1 // loop_pre_header
      _
    $region3: #{tpu_custom_call.1} parent=1 // loop_header
      %s28 = sphi 0, %s32
      %p29 = scmp.ge.s32.totalorder %s28, 4
      %s38 = sphi 0, %s40
      %s41 = sphi 0, %s38
      %s42 = sphi 0, %s41
      %s58 = sphi 0, %s42
      %s64 = sphi 0, %s66
      %s67 = sphi 0, %s64
      %s68 = sphi 0, %s67
      %s84 = sphi 0, %s68
      %s90 = sphi 0, %s92
      %s93 = sphi 0, %s90
      %s94 = sphi 0, %s93
      %s110 = sphi 0, %s94
      %s116 = sphi 0, %s118
      %s119 = sphi 0, %s116
      %s120 = sphi 0, %s119
      %s136 = sphi 0, %s120
      %s140 = sphi 0, %s140
      %s142 = sphi 0, %s140
      %s143 = sphi 0, %s142
      %s157 = sphi 0, %s143
      %s163 = sphi 0, %s165
      %s166 = sphi 0, %s163
      %s167 = sphi 0, %s166
      %s183 = sphi 0, %s167
      %s189 = sphi 0, %s191
      %s192 = sphi 0, %s189
      %s193 = sphi 0, %s192
      %s209 = sphi 0, %s193
    $region4: #{tpu_custom_call.1} parent=1 // loop_header_branch
      %31 = sbr.rel (%p29) target = $region8
    $region5: #{tpu_custom_call.1} parent=1 // loop_body
      %s33 = ssub.s32 %s28, 1
      %s34 = ssub.s32 %s28, 2
      %s35 = sadd.s32 %s28, 1
      %s36 = ssub.s32 %s28, %s35
      %p37 = scmp.eq.s32.totalorder %s36, 0
      %s39 = sadd.s32 %s38, 1
      %s40 = scalar_select %p37, %s38, %s39
      %p43 = pneg %p37
      %p44 = scmp.eq.s32.totalorder %s28, 1
      %p45 = por %p43, %p44
      %p46 = scmp.ne.s32.totalorder %s38, %s41
      %p47 = scmp.eq.s32.totalorder %s28, 0
      %p48 = por %p46, %p47
      %p49 = scmp.ne.s32.totalorder %s38, %s41
      %p50 = scmp.eq.s32.totalorder %s33, 1
      %p51 = por %p49, %p50
      %p52 = scmp.ne.s32.totalorder %s41, %s42
      %p53 = scmp.eq.s32.totalorder %s33, 0
      %p54 = por %p52, %p53
      %p55 = scmp.ne.s32.totalorder %s41, %s42
      %p56 = scmp.eq.s32.totalorder %s34, 1
      %p57 = por %p55, %p56
      %p59 = scmp.ne.s32.totalorder %s42, %s58
      %p60 = scmp.eq.s32.totalorder %s34, 0
      %p61 = por %p59, %p60
      %s62 = ssub.s32 %s28, %s35
      %p63 = scmp.eq.s32.totalorder %s62, 0
      %s65 = sadd.s32 %s64, 1
      %s66 = scalar_select %p63, %s64, %s65
      %p69 = pneg %p63
      %p70 = scmp.eq.s32.totalorder %s28, 1
      %p71 = por %p69, %p70
      %p72 = scmp.ne.s32.totalorder %s64, %s67
      %p73 = scmp.eq.s32.totalorder %s28, 0
      %p74 = por %p72, %p73
      %p75 = scmp.ne.s32.totalorder %s64, %s67
      %p76 = scmp.eq.s32.totalorder %s33, 1
      %p77 = por %p75, %p76
      %p78 = scmp.ne.s32.totalorder %s67, %s68
      %p79 = scmp.eq.s32.totalorder %s33, 0
      %p80 = por %p78, %p79
      %p81 = scmp.ne.s32.totalorder %s67, %s68
      %p82 = scmp.eq.s32.totalorder %s34, 1
      %p83 = por %p81, %p82
      %p85 = scmp.ne.s32.totalorder %s68, %s84
      %p86 = scmp.eq.s32.totalorder %s34, 0
      %p87 = por %p85, %p86
      %s88 = ssub.s32 %s28, %s35
      %p89 = scmp.eq.s32.totalorder %s88, 0
      %s91 = sadd.s32 %s90, 1
      %s92 = scalar_select %p89, %s90, %s91
      %p95 = pneg %p89
      %p96 = scmp.eq.s32.totalorder %s28, 1
      %p97 = por %p95, %p96
      %p98 = scmp.ne.s32.totalorder %s90, %s93
      %p99 = scmp.eq.s32.totalorder %s28, 0
      %p100 = por %p98, %p99
      %p101 = scmp.ne.s32.totalorder %s90, %s93
      %p102 = scmp.eq.s32.totalorder %s33, 1
      %p103 = por %p101, %p102
      %p104 = scmp.ne.s32.totalorder %s93, %s94
      %p105 = scmp.eq.s32.totalorder %s33, 0
      %p106 = por %p104, %p105
      %p107 = scmp.ne.s32.totalorder %s93, %s94
      %p108 = scmp.eq.s32.totalorder %s34, 1
      %p109 = por %p107, %p108
      %p111 = scmp.ne.s32.totalorder %s94, %s110
      %p112 = scmp.eq.s32.totalorder %s34, 0
      %p113 = por %p111, %p112
      %s114 = ssub.s32 %s28, %s35
      %p115 = scmp.eq.s32.totalorder %s114, 0
      %s117 = sadd.s32 %s116, 1
      %s118 = scalar_select %p115, %s116, %s117
      %p121 = pneg %p115
      %p122 = scmp.eq.s32.totalorder %s28, 1
      %p123 = por %p121, %p122
      %p124 = scmp.ne.s32.totalorder %s116, %s119
      %p125 = scmp.eq.s32.totalorder %s28, 0
      %p126 = por %p124, %p125
      %p127 = scmp.ne.s32.totalorder %s116, %s119
      %p128 = scmp.eq.s32.totalorder %s33, 1
      %p129 = por %p127, %p128
      %p130 = scmp.ne.s32.totalorder %s119, %s120
      %p131 = scmp.eq.s32.totalorder %s33, 0
      %p132 = por %p130, %p131
      %p133 = scmp.ne.s32.totalorder %s119, %s120
      %p134 = scmp.eq.s32.totalorder %s34, 1
      %p135 = por %p133, %p134
      %p137 = scmp.ne.s32.totalorder %s120, %s136
      %p138 = scmp.eq.s32.totalorder %s34, 0
      %p139 = por %p137, %p138
      %s141 = sadd.s32 %s140, 1
      %p144 = scmp.eq.s32.totalorder %s28, 1
      %p145 = scmp.ne.s32.totalorder %s140, %s142
      %p146 = scmp.eq.s32.totalorder %s28, 0
      %p147 = por %p145, %p146
      %p148 = scmp.ne.s32.totalorder %s140, %s142
      %p149 = scmp.eq.s32.totalorder %s33, 1
      %p150 = por %p148, %p149
      %p151 = scmp.ne.s32.totalorder %s142, %s143
      %p152 = scmp.eq.s32.totalorder %s33, 0
      %p153 = por %p151, %p152
      %p154 = scmp.ne.s32.totalorder %s142, %s143
      %p155 = scmp.eq.s32.totalorder %s34, 1
      %p156 = por %p154, %p155
      %p158 = scmp.ne.s32.totalorder %s143, %s157
      %p159 = scmp.eq.s32.totalorder %s34, 0
      %p160 = por %p158, %p159
      %s161 = ssub.s32 %s28, %s35
      %p162 = scmp.eq.s32.totalorder %s161, 0
      %s164 = sadd.s32 %s163, 1
      %s165 = scalar_select %p162, %s163, %s164
      %p168 = pneg %p162
      %p169 = scmp.eq.s32.totalorder %s28, 1
      %p170 = por %p168, %p169
      %p171 = scmp.ne.s32.totalorder %s163, %s166
      %p172 = scmp.eq.s32.totalorder %s28, 0
      %p173 = por %p171, %p172
      %p174 = scmp.ne.s32.totalorder %s163, %s166
      %p175 = scmp.eq.s32.totalorder %s33, 1
      %p176 = por %p174, %p175
      %p177 = scmp.ne.s32.totalorder %s166, %s167
      %p178 = scmp.eq.s32.totalorder %s33, 0
      %p179 = por %p177, %p178
      %p180 = scmp.ne.s32.totalorder %s166, %s167
      %p181 = scmp.eq.s32.totalorder %s34, 1
      %p182 = por %p180, %p181
      %p184 = scmp.ne.s32.totalorder %s167, %s183
      %p185 = scmp.eq.s32.totalorder %s34, 0
      %p186 = por %p184, %p185
      %s187 = ssub.s32 %s28, %s35
      %p188 = scmp.eq.s32.totalorder %s187, 0
      %s190 = sadd.s32 %s189, 1
      %s191 = scalar_select %p188, %s189, %s190
      %p194 = pneg %p188
      %p195 = scmp.eq.s32.totalorder %s28, 1
      %p196 = por %p194, %p195
      %p197 = scmp.ne.s32.totalorder %s189, %s192
      %p198 = scmp.eq.s32.totalorder %s28, 0
      %p199 = por %p197, %p198
      %p200 = scmp.ne.s32.totalorder %s189, %s192
      %p201 = scmp.eq.s32.totalorder %s33, 1
      %p202 = por %p200, %p201
      %p203 = scmp.ne.s32.totalorder %s192, %s193
      %p204 = scmp.eq.s32.totalorder %s33, 0
      %p205 = por %p203, %p204
      %p206 = scmp.ne.s32.totalorder %s192, %s193
      %p207 = scmp.eq.s32.totalorder %s34, 1
      %p208 = por %p206, %p207
      %p210 = scmp.ne.s32.totalorder %s193, %s209
      %p211 = scmp.eq.s32.totalorder %s34, 0
      %p212 = por %p210, %p211
      %p213 = scmp.le.s32.totalorder 1, %s28
      %p214 = scmp.lt.s32.totalorder %s28, 3
      %p215 = pnand %p213, %p214
      %p216 = pneg %p215
      // Predicated region
      $region9: #{tpu_custom_call.1} parent=5 // pred_check
        _
      $region10: #{tpu_custom_call.1} parent=5 // pred_check_branch
        %218 = sbr.rel (%p215) target = $region12
      $region11: #{tpu_custom_call.1} parent=5 // pred_region
        %s219 = ssub.s32 %s28, 1
        // Predicated region
        $region13: #{tpu_custom_call.1} parent=11 // pred_check
          %p220 = pneg %p153
        $region14: #{tpu_custom_call.1} parent=11 // pred_check_branch
          %222 = sbr.rel (%p220) target = $region16
        $region15: #{tpu_custom_call.1} parent=11 // pred_region
          _
        $region16: #{tpu_custom_call.1} parent=11 // pred_fallthru
          _
      $region12: #{tpu_custom_call.1} parent=5 // pred_fallthru
        _
      %p223 = scmp.lt.s32.totalorder %s28, 2
      // Predicated region
      $region17: #{tpu_custom_call.1} parent=5 // pred_check
        %p224 = pneg %p223
      $region18: #{tpu_custom_call.1} parent=5 // pred_check_branch
        %226 = sbr.rel (%p224) target = $region20
      $region19: #{tpu_custom_call.1} parent=5 // pred_region
        // Predicated region
        $region21: #{tpu_custom_call.1} parent=19 // pred_check
          %p227 = pneg %p48
        $region22: #{tpu_custom_call.1} parent=19 // pred_check_branch
          %229 = sbr.rel (%p227) target = $region24
        $region23: #{tpu_custom_call.1} parent=19 // pred_region
          %p230 = scmp.lt.s32.totalorder %s28, 1
          %s231 = scalar_select %p230, %s28, 1
          %s232 = smul.addr %s231, 8
          %s233 = scalar_lea.vmem %s1, %s232
        $region24: #{tpu_custom_call.1} parent=19 // pred_fallthru
          _
        // Predicated region
        $region25: #{tpu_custom_call.1} parent=19 // pred_check
          %p234 = pneg %p74
        $region26: #{tpu_custom_call.1} parent=19 // pred_check_branch
          %236 = sbr.rel (%p234) target = $region28
        $region27: #{tpu_custom_call.1} parent=19 // pred_region
          %p237 = scmp.lt.s32.totalorder %s28, 1
          %s238 = scalar_select %p237, %s28, 1
          %s239 = scalar_lea.vmem %s2, %s238
        $region28: #{tpu_custom_call.1} parent=19 // pred_fallthru
          _
        // Predicated region
        $region29: #{tpu_custom_call.1} parent=19 // pred_check
          %p240 = pneg %p100
        $region30: #{tpu_custom_call.1} parent=19 // pred_check_branch
          %242 = sbr.rel (%p240) target = $region32
        $region31: #{tpu_custom_call.1} parent=19 // pred_region
          %p243 = scmp.lt.s32.totalorder %s28, 1
          %s244 = scalar_select %p243, %s28, 1
          %s245 = smul.addr %s244, 2
          %s246 = smul.addr %s245, 8
          %s247 = scalar_lea.vmem %s3, %s246
        $region32: #{tpu_custom_call.1} parent=19 // pred_fallthru
          _
        // Predicated region
        $region33: #{tpu_custom_call.1} parent=19 // pred_check
          %p248 = pneg %p126
        $region34: #{tpu_custom_call.1} parent=19 // pred_check_branch
          %250 = sbr.rel (%p248) target = $region36
        $region35: #{tpu_custom_call.1} parent=19 // pred_region
          %p251 = scmp.lt.s32.totalorder %s28, 1
          %s252 = scalar_select %p251, %s28, 1
          %s253 = scalar_lea.vmem %s4, %s252
        $region36: #{tpu_custom_call.1} parent=19 // pred_fallthru
          _
      $region20: #{tpu_custom_call.1} parent=5 // pred_fallthru
        _
      %p254 = scmp.le.s32.totalorder 1, %s28
      %p255 = scmp.lt.s32.totalorder %s28, 3
      %p256 = pnand %p254, %p255
      %p257 = pneg %p256
      // Predicated region
      $region37: #{tpu_custom_call.1} parent=5 // pred_check
        _
      $region38: #{tpu_custom_call.1} parent=5 // pred_check_branch
        %259 = sbr.rel (%p256) target = $region40
      $region39: #{tpu_custom_call.1} parent=5 // pred_region
        %s260 = ssub.s32 %s28, 1
        %p261 = scmp.lt.s32.totalorder %s33, 1
        %s262 = scalar_select %p261, %s33, 1
        %s263 = smul.addr %s262, 8
        %s264 = scalar_lea.vmem %s1, %s263
        %p265 = pneg %p54
        %p266 = pneg %p51
        %p267 = scmp.lt.s32.totalorder %s33, 1
        %s268 = scalar_select %p267, %s33, 1
        %s269 = scalar_lea.vmem %s2, %s268
        %p270 = pneg %p80
        %p271 = pneg %p77
        %p272 = scmp.lt.s32.totalorder %s33, 1
        %s273 = scalar_select %p272, %s33, 1
        %s274 = smul.addr %s273, 2
        %s275 = smul.addr %s274, 8
        %s276 = scalar_lea.vmem %s3, %s275
        %p277 = pneg %p106
        %p278 = pneg %p103
        %p279 = scmp.lt.s32.totalorder %s33, 1
        %s280 = scalar_select %p279, %s33, 1
        %s281 = scalar_lea.vmem %s4, %s280
        %p282 = pneg %p132
        %p283 = pneg %p129
        %p284 = pneg %p153
        %p285 = pneg %p150
        %p286 = pneg %p179
        %p287 = pneg %p176
        %s288 = sand.u32 %s166, 1
        %s289 = scalar_lea.sflag [#allocation5], %s288
        %s290 = sand.u32 %s166, 1
        %s291 = smul.addr %s290, 8
        %s292 = scalar_lea.vmem [#allocation4], %s291
        %p293 = pneg %p205
        %p294 = pneg %p202
        %s295 = sand.u32 %s192, 1
        %s296 = scalar_lea.sflag [#allocation7], %s295
        %s297 = sand.u32 %s192, 1
        %s298 = smul.addr %s297, 16
        %s299 = scalar_lea.vmem [#allocation6], %s298
        %p300 = scmp.lt.s32.totalorder %s33, 1
        %s301 = scalar_select %p300, %s33, 1
        %s302 = smul.addr %s301, 8
        %s303 = scalar_lea.vmem %s1, %s302
        %p304 = scmp.lt.s32.totalorder %s33, 1
        %s305 = scalar_select %p304, %s33, 1
        %s306 = scalar_lea.vmem %s2, %s305
        %p307 = scmp.lt.s32.totalorder %s33, 1
        %s308 = scalar_select %p307, %s33, 1
        %s309 = smul.addr %s308, 2
        %s310 = smul.addr %s309, 8
        %s311 = scalar_lea.vmem %s3, %s310
        %p312 = scmp.lt.s32.totalorder %s33, 1
        %s313 = scalar_select %p312, %s33, 1
        %s314 = scalar_lea.vmem %s4, %s313
        %v315 = vld [vmem:[%s5] sm:$0xff]
        %v316 = vld [vmem:[%s5 + $0x8] sm:$0xff]
        %v317 = vld [vmem:[%s5 + $0x10] sm:$0xff]
        %v318 = vld [vmem:[%s5 + $0x18] sm:$0xff]
        %v319 = vld [vmem:[%s5 + $0x20] sm:$0xff]
        %v320 = vld [vmem:[%s306] sm:$0x1]
        %v321 = vld [vmem:[%s314] sm:$0x1]
        %322 = vxpose.xlu0.b32.start [1/16] %v320, 128
        %323 = vxpose.xlu0.b32.cont [2/16] 0.0, 128
        %324 = vxpose.xlu0.b32.cont [3/16] 0.0, 128
        %325 = vxpose.xlu0.b32.cont [4/16] 0.0, 128
        %326 = vxpose.xlu0.b32.cont [5/16] 0.0, 128
        %327 = vxpose.xlu0.b32.cont [6/16] 0.0, 128
        %328 = vxpose.xlu0.b32.cont [7/16] 0.0, 128
        %329 = vxpose.xlu0.b32.cont [8/16] 0.0, 128
        %330 = vxpose.xlu0.b32.cont [9/16] 0.0, 128
        %331 = vxpose.xlu0.b32.cont [10/16] 0.0, 128
        %332 = vxpose.xlu0.b32.cont [11/16] 0.0, 128
        %333 = vxpose.xlu0.b32.cont [12/16] 0.0, 128
        %334 = vxpose.xlu0.b32.cont [13/16] 0.0, 128
        %335 = vxpose.xlu0.b32.cont [14/16] 0.0, 128
        %336 = vxpose.xlu0.b32.cont [15/16] 0.0, 128
        %337 = vxpose.xlu0.b32.end [16/16] 0.0, 128
        %v338 = vpop.trf.xlu0
        %v339 = vpop.trf.xlu0
        %v340 = vpop.trf.xlu0
        %v341 = vpop.trf.xlu0
        %v342 = vpop.trf.xlu0
        %v343 = vpop.trf.xlu0
        %v344 = vpop.trf.xlu0
        %v345 = vpop.trf.xlu0
        %v346 = vpop.trf.xlu0
        %v347 = vpop.trf.xlu0
        %v348 = vpop.trf.xlu0
        %v349 = vpop.trf.xlu0
        %v350 = vpop.trf.xlu0
        %v351 = vpop.trf.xlu0
        %v352 = vpop.trf.xlu0
        %v353 = vpop.trf.xlu0
        %354 = vxpose.xlu0.b32.start [1/16] %v321, 128
        %355 = vxpose.xlu0.b32.cont [2/16] 0.0, 128
        %356 = vxpose.xlu0.b32.cont [3/16] 0.0, 128
        %357 = vxpose.xlu0.b32.cont [4/16] 0.0, 128
        %358 = vxpose.xlu0.b32.cont [5/16] 0.0, 128
        %359 = vxpose.xlu0.b32.cont [6/16] 0.0, 128
        %360 = vxpose.xlu0.b32.cont [7/16] 0.0, 128
        %361 = vxpose.xlu0.b32.cont [8/16] 0.0, 128
        %362 = vxpose.xlu0.b32.cont [9/16] 0.0, 128
        %363 = vxpose.xlu0.b32.cont [10/16] 0.0, 128
        %364 = vxpose.xlu0.b32.cont [11/16] 0.0, 128
        %365 = vxpose.xlu0.b32.cont [12/16] 0.0, 128
        %366 = vxpose.xlu0.b32.cont [13/16] 0.0, 128
        %367 = vxpose.xlu0.b32.cont [14/16] 0.0, 128
        %368 = vxpose.xlu0.b32.cont [15/16] 0.0, 128
        %369 = vxpose.xlu0.b32.end [16/16] 0.0, 128
        %v370 = vpop.trf.xlu0
        %v371 = vpop.trf.xlu0
        %v372 = vpop.trf.xlu0
        %v373 = vpop.trf.xlu0
        %v374 = vpop.trf.xlu0
        %v375 = vpop.trf.xlu0
        %v376 = vpop.trf.xlu0
        %v377 = vpop.trf.xlu0
        %v378 = vpop.trf.xlu0
        %v379 = vpop.trf.xlu0
        %v380 = vpop.trf.xlu0
        %v381 = vpop.trf.xlu0
        %v382 = vpop.trf.xlu0
        %v383 = vpop.trf.xlu0
        %v384 = vpop.trf.xlu0
        %v385 = vpop.trf.xlu0
        %vm386 = vcmp.gt.f32.partialorder %v338, 0.5
        %vm387 = vcmp.gt.f32.partialorder %v370, 0.5
        %vm388 = vcmp.gt.f32.partialorder %v371, 0.5
        %vm389 = vcmp.gt.f32.partialorder %v321, 0.5
        %s390 = smul.u32 %s33, 128
        %s391 = sld [smem:[#allocation3 + %s390]]
        %s392 = sadd.s32 %s390, 1
        %s393 = sld [smem:[#allocation3 + %s392]]
        %s394 = scvt.s32.f32 %s391
        %s395 = smax.f32 %s394, 1e-13
        %v396 = vstv %s395
        %v397 = vrcp.pop %v396
        %v398 = vmul.f32 %v396, %v397
        %v399 = vsub.f32 1.0, %v398
        %v400 = vmul.f32 %v397, %v399
        %v401 = vadd.f32 %v397, %v400
        %vm402 = vweird.f32 %v396
        %vm403 = vweird.f32 %v397
        %vm404 = vmor %vm402, %vm403
        %v405 = vsel %vm404, %v397, %v401
        %v406 = vand.u32 2147483647, %v396
        %vm407 = vcmp.eq.f32.partialorder %v406, 8.507059e+37
        %v408 = vand.u32 %v396, 2147483648
        %v409 = vor.u32 1.1754944e-38, %v408
        %v410 = vsel %vm407, %v409, %v405
        %s411 = vtos %v410
        %s412 = scvt.s32.f32 %s393
        %s413 = smax.f32 %s412, 1e-13
        %v414 = vstv %s413
        %v415 = vrcp.pop %v414
        %v416 = vmul.f32 %v414, %v415
        %v417 = vsub.f32 1.0, %v416
        %v418 = vmul.f32 %v415, %v417
        %v419 = vadd.f32 %v415, %v418
        %vm420 = vweird.f32 %v414
        %vm421 = vweird.f32 %v415
        %vm422 = vmor %vm420, %vm421
        %v423 = vsel %vm422, %v415, %v419
        %v424 = vand.u32 2147483647, %v414
        %vm425 = vcmp.eq.f32.partialorder %v424, 8.507059e+37
        %v426 = vand.u32 %v414, 2147483648
        %v427 = vor.u32 1.1754944e-38, %v426
        %v428 = vsel %vm425, %v427, %v423
        %s429 = vtos %v428
        %v430 = vld [vmem:[%s303] sm:$0xff]
        %432 = vset.pattern.permute.xlu0 0
        %433 = vperm.xlu0 %432, %v338
        %v434 = vpop.permute.xlu0 %433
        %v436 = vmul.f32 %v430, %v434
        %v437 = vld [vmem:[%s311] sm:$0xff]
        %v438 = vld [vmem:[%s311 + $0x8] sm:$0xff]
        %440 = vset.pattern.permute.xlu0 0
        %441 = vperm.xlu0 %440, %v370
        %v442 = vpop.permute.xlu0 %441
        %445 = vset.pattern.permute.xlu0 0
        %446 = vperm.xlu0 %445, %v371
        %v447 = vpop.permute.xlu0 %446
        %v449 = vmul.f32 %v437, %v442
        %v450 = vmul.f32 %v438, %v447
        %v451 = vmul.f32 %v436, %v436
        %vm452 = vcmask 261120
        %v454 = vsel %vm452, %v451, 0
        %v457 = vsel %vm452, %v315, 0
        %v460 = vsel %vm452, %v316, 0
        %v463 = vsel %vm452, %v317, 0
        %v466 = vsel %vm452, %v318, 0
        %v469 = vsel %vm452, %v319, 0
        %471 = vmatpush.xpose.msra.mxu0 0.0
        %472 = vmatpush.xpose.msra.mxu0 0.0
        %473 = vmatpush.xpose.msra.mxu0 0.0
        %474 = vmatpush.xpose.msra.mxu0 0.0
        %475 = vmatpush.xpose.msra.mxu0 0.0
        %476 = vmatpush.xpose.msra.mxu0 0.0
        %477 = vmatpush.xpose.msra.mxu0 0.0
        %478 = vmatpush.xpose.msra.mxu0 0.0
        %479 = vmatpush.xpose.msra.mxu0 0.0
        %480 = vmatpush.xpose.msra.mxu0 0.0
        %481 = vmatpush.xpose.msra.mxu0 0.0
        %482 = vmatpush.xpose.msra.mxu0 %v469
        %483 = vmatpush.xpose.msra.mxu0 %v466
        %484 = vmatpush.xpose.msra.mxu0 %v463
        %485 = vmatpush.xpose.msra.mxu0 %v460
        %486 = vmatpush.xpose.msra.mxu0 %v457
        %487 = vmatmul.f32.gmra.mxu0 %v454
        %v488 = vpop.f32.mrf.mxu0
        %v489 = vadd.f32 0.0, %v488
        %490 = vdwg.mxu0
        %v491 = vrsqrt.pop %v489
        %v492 = vmul.f32 %v491, %v489
        %v493 = vmul.f32 %v492, %v491
        %v494 = vmul.f32 0.5, %v493
        %v495 = vsub.f32 1.5, %v494
        %v496 = vmul.f32 %v491, %v495
        %v497 = vmul.f32 %v489, %v496
        %vm498 = vcmp.eq.f32.partialorder %v489, inf
        %v499 = vsel %vm498, %v489, %v497
        %vm500 = vcmp.eq.f32.partialorder %v489, 0.0
        %v501 = vand.u32 %v489, 2147483648
        %v502 = vsel %vm500, %v501, %v499
        %v503 = vmul.f32 %v449, %v449
        %v504 = vmul.f32 %v450, %v450
        %v506 = vsel %vm452, %v503, 0
        %v509 = vsel %vm452, %v504, 0
        %511 = vmatpush.xpose.msra.mxu0 0.0
        %512 = vmatpush.xpose.msra.mxu0 0.0
        %513 = vmatpush.xpose.msra.mxu0 0.0
        %514 = vmatpush.xpose.msra.mxu0 0.0
        %515 = vmatpush.xpose.msra.mxu0 0.0
        %516 = vmatpush.xpose.msra.mxu0 0.0
        %517 = vmatpush.xpose.msra.mxu0 0.0
        %518 = vmatpush.xpose.msra.mxu0 0.0
        %519 = vmatpush.xpose.msra.mxu0 0.0
        %520 = vmatpush.xpose.msra.mxu0 0.0
        %521 = vmatpush.xpose.msra.mxu0 0.0
        %522 = vmatpush.xpose.msra.mxu0 %v469
        %523 = vmatpush.xpose.msra.mxu0 %v466
        %524 = vmatpush.xpose.msra.mxu0 %v463
        %525 = vmatpush.xpose.msra.mxu0 %v460
        %526 = vmatpush.xpose.msra.mxu0 %v457
        %527 = vmatmul.f32.gmra.mxu0 %v506
        %v528 = vpop.f32.mrf.mxu0
        %v529 = vadd.f32 0.0, %v528
        %530 = vmatmul.f32.gmra.mxu0 %v509
        %v531 = vpop.f32.mrf.mxu0
        %v532 = vadd.f32 0.0, %v531
        %533 = vdwg.mxu0
        %v534 = vrsqrt.pop %v529
        %v535 = vmul.f32 %v534, %v529
        %v536 = vmul.f32 %v535, %v534
        %v537 = vmul.f32 0.5, %v536
        %v538 = vsub.f32 1.5, %v537
        %v539 = vmul.f32 %v534, %v538
        %v540 = vmul.f32 %v529, %v539
        %vm541 = vcmp.eq.f32.partialorder %v529, inf
        %v542 = vsel %vm541, %v529, %v540
        %vm543 = vcmp.eq.f32.partialorder %v529, 0.0
        %v544 = vand.u32 %v529, 2147483648
        %v545 = vsel %vm543, %v544, %v542
        %v546 = vrsqrt.pop %v532
        %v547 = vmul.f32 %v546, %v532
        %v548 = vmul.f32 %v547, %v546
        %v549 = vmul.f32 0.5, %v548
        %v550 = vsub.f32 1.5, %v549
        %v551 = vmul.f32 %v546, %v550
        %v552 = vmul.f32 %v532, %v551
        %vm553 = vcmp.eq.f32.partialorder %v532, inf
        %v554 = vsel %vm553, %v532, %v552
        %vm555 = vcmp.eq.f32.partialorder %v532, 0.0
        %v556 = vand.u32 %v532, 2147483648
        %v557 = vsel %vm555, %v556, %v554
        %v558 = vmax.f32 %v502, 0.0001
        %v559 = vrcp.pop %v558
        %v560 = vmul.f32 %v558, %v559
        %v561 = vsub.f32 1.0, %v560
        %v562 = vmul.f32 %v559, %v561
        %v563 = vadd.f32 %v559, %v562
        %vm564 = vweird.f32 %v558
        %vm565 = vweird.f32 %v559
        %vm566 = vmor %vm564, %vm565
        %v567 = vsel %vm566, %v559, %v563
        %v568 = vand.u32 2147483647, %v558
        %vm569 = vcmp.eq.f32.partialorder %v568, 8.507059e+37
        %v570 = vand.u32 %v558, 2147483648
        %v571 = vor.u32 1.1754944e-38, %v570
        %v572 = vsel %vm569, %v571, %v567
        %v573 = vmul.f32 1.0, %v572
        %575 = vset.pattern.permute.xlu0 32
        %576 = vperm.xlu0 %575, %v573
        %v577 = vpop.permute.xlu0 %576
        %v579 = vmul.f32 %v436, %v577
        %v580 = vmax.f32 %v545, 0.0001
        %v581 = vmax.f32 %v557, 0.0001
        %v582 = vrcp.pop %v580
        %v583 = vmul.f32 %v580, %v582
        %v584 = vsub.f32 1.0, %v583
        %v585 = vmul.f32 %v582, %v584
        %v586 = vadd.f32 %v582, %v585
        %vm587 = vweird.f32 %v580
        %vm588 = vweird.f32 %v582
        %vm589 = vmor %vm587, %vm588
        %v590 = vsel %vm589, %v582, %v586
        %v591 = vand.u32 2147483647, %v580
        %vm592 = vcmp.eq.f32.partialorder %v591, 8.507059e+37
        %v593 = vand.u32 %v580, 2147483648
        %v594 = vor.u32 1.1754944e-38, %v593
        %v595 = vsel %vm592, %v594, %v590
        %v596 = vmul.f32 1.0, %v595
        %v597 = vrcp.pop %v581
        %v598 = vmul.f32 %v581, %v597
        %v599 = vsub.f32 1.0, %v598
        %v600 = vmul.f32 %v597, %v599
        %v601 = vadd.f32 %v597, %v600
        %vm602 = vweird.f32 %v581
        %vm603 = vweird.f32 %v597
        %vm604 = vmor %vm602, %vm603
        %v605 = vsel %vm604, %v597, %v601
        %v606 = vand.u32 2147483647, %v581
        %vm607 = vcmp.eq.f32.partialorder %v606, 8.507059e+37
        %v608 = vand.u32 %v581, 2147483648
        %v609 = vor.u32 1.1754944e-38, %v608
        %v610 = vsel %vm607, %v609, %v605
        %v611 = vmul.f32 1.0, %v610
        %613 = vset.pattern.permute.xlu0 32
        %614 = vperm.xlu0 %613, %v596
        %v615 = vpop.permute.xlu0 %614
        %618 = vset.pattern.permute.xlu0 32
        %619 = vperm.xlu0 %618, %v611
        %v620 = vpop.permute.xlu0 %619
        %v622 = vmul.f32 %v449, %v615
        %v623 = vmul.f32 %v450, %v620
        %v625 = vsel %vm452, %v579, 0
        %v628 = vsel %vm452, %v622, 0
        %v631 = vsel %vm452, %v623, 0
        %633 = vmatpush.xpose.msra.mxu0 0.0
        %634 = vmatpush.xpose.msra.mxu0 0.0
        %635 = vmatpush.xpose.msra.mxu0 0.0
        %636 = vmatpush.xpose.msra.mxu0 0.0
        %637 = vmatpush.xpose.msra.mxu0 0.0
        %638 = vmatpush.xpose.msra.mxu0 0.0
        %639 = vmatpush.xpose.msra.mxu0 0.0
        %640 = vmatpush.xpose.msra.mxu0 0.0
        %641 = vmatpush.xpose.msra.mxu0 0.0
        %642 = vmatpush.xpose.msra.mxu0 0.0
        %643 = vmatpush.xpose.msra.mxu0 0.0
        %644 = vmatpush.xpose.msra.mxu0 0.0
        %645 = vmatpush.xpose.msra.mxu0 0.0
        %646 = vmatpush.xpose.msra.mxu0 0.0
        %647 = vmatpush.xpose.msra.mxu0 %v631
        %648 = vmatpush.xpose.msra.mxu0 %v628
        %649 = vmatmul.f32.gmra.mxu0 %v625
        %v650 = vpop.f32.mrf.mxu0
        %v651 = vadd.f32 0.0, %v650
        %652 = vdwg.mxu0
        %v653 = vsel %vm389, 1, 0
        %v654 = vperm.slane %v653, 0
        %vm655 = vcmp.eq.s32.totalorder %v654, 1
        %v656 = vsel %vm655, %v651, -3.4028235e+38
        %vm657 = vcmask 130048
        %v658 = vsel %vm657, %v656, -inf
        %659 = vmax.xlane.f32.xlu0 %v658
        %v660 = vpop.xlane.xlu0 %659
        %v662 = vperm.slane %v321, 0
        %v664 = vmul.f32 %v651, %v662
        %v665 = vsel %vm657, %v664, 0.0
        %666 = vadd.xlane.f32.xlu0 %v665
        %v667 = vpop.xlane.xlu0 %666
        %v668 = vstv %s429
        %v669 = vmul.f32 %v667, %v668
        %v670 = vsel %vm386, 1, 0
        %671 = vset.pattern.permute.xlu0 0
        %672 = vperm.xlu0 %671, %v670
        %v673 = vpop.permute.xlu0 %672
        %vm674 = vcmp.eq.s32.totalorder %v673, 1
        %v675 = vsel %vm674, %v651, -3.4028235e+38
        %v676 = vsel %vm657, %v675, -inf
        %v677 = vrot.slane %v676, 4
        %v678 = vmax.f32 %v676, %v677
        %v679 = vrot.slane %v678, 2
        %v680 = vmax.f32 %v678, %v679
        %v681 = vrot.slane %v680, 1
        %v682 = vmax.f32 %v680, %v681
        %683 = vxpose.xlu0.b32.start [1/16] %v682, 128
        %684 = vxpose.xlu0.b32.cont [2/16] 0.0, 128
        %685 = vxpose.xlu0.b32.cont [3/16] 0.0, 128
        %686 = vxpose.xlu0.b32.cont [4/16] 0.0, 128
        %687 = vxpose.xlu0.b32.cont [5/16] 0.0, 128
        %688 = vxpose.xlu0.b32.cont [6/16] 0.0, 128
        %689 = vxpose.xlu0.b32.cont [7/16] 0.0, 128
        %690 = vxpose.xlu0.b32.cont [8/16] 0.0, 128
        %691 = vxpose.xlu0.b32.cont [9/16] 0.0, 128
        %692 = vxpose.xlu0.b32.cont [10/16] 0.0, 128
        %693 = vxpose.xlu0.b32.cont [11/16] 0.0, 128
        %694 = vxpose.xlu0.b32.cont [12/16] 0.0, 128
        %695 = vxpose.xlu0.b32.cont [13/16] 0.0, 128
        %696 = vxpose.xlu0.b32.cont [14/16] 0.0, 128
        %697 = vxpose.xlu0.b32.cont [15/16] 0.0, 128
        %698 = vxpose.xlu0.b32.end [16/16] 0.0, 128
        %v699 = vpop.trf.xlu0
        %v700 = vpop.trf.xlu0
        %v701 = vpop.trf.xlu0
        %v702 = vpop.trf.xlu0
        %v703 = vpop.trf.xlu0
        %v704 = vpop.trf.xlu0
        %v705 = vpop.trf.xlu0
        %v706 = vpop.trf.xlu0
        %v707 = vpop.trf.xlu0
        %v708 = vpop.trf.xlu0
        %v709 = vpop.trf.xlu0
        %v710 = vpop.trf.xlu0
        %v711 = vpop.trf.xlu0
        %v712 = vpop.trf.xlu0
        %v713 = vpop.trf.xlu0
        %v714 = vpop.trf.xlu0
        %715 = vxpose.xlu0.b32.start [1/16] %v651, 128
        %716 = vxpose.xlu0.b32.cont [2/16] 0.0, 128
        %717 = vxpose.xlu0.b32.cont [3/16] 0.0, 128
        %718 = vxpose.xlu0.b32.cont [4/16] 0.0, 128
        %719 = vxpose.xlu0.b32.cont [5/16] 0.0, 128
        %720 = vxpose.xlu0.b32.cont [6/16] 0.0, 128
        %721 = vxpose.xlu0.b32.cont [7/16] 0.0, 128
        %722 = vxpose.xlu0.b32.cont [8/16] 0.0, 128
        %723 = vxpose.xlu0.b32.cont [9/16] 0.0, 128
        %724 = vxpose.xlu0.b32.cont [10/16] 0.0, 128
        %725 = vxpose.xlu0.b32.cont [11/16] 0.0, 128
        %726 = vxpose.xlu0.b32.cont [12/16] 0.0, 128
        %727 = vxpose.xlu0.b32.cont [13/16] 0.0, 128
        %728 = vxpose.xlu0.b32.cont [14/16] 0.0, 128
        %729 = vxpose.xlu0.b32.cont [15/16] 0.0, 128
        %730 = vxpose.xlu0.b32.end [16/16] 0.0, 128
        %v731 = vpop.trf.xlu0
        %v732 = vpop.trf.xlu0
        %v733 = vpop.trf.xlu0
        %v734 = vpop.trf.xlu0
        %v735 = vpop.trf.xlu0
        %v736 = vpop.trf.xlu0
        %v737 = vpop.trf.xlu0
        %v738 = vpop.trf.xlu0
        %v739 = vpop.trf.xlu0
        %v740 = vpop.trf.xlu0
        %v741 = vpop.trf.xlu0
        %v742 = vpop.trf.xlu0
        %v743 = vpop.trf.xlu0
        %v744 = vpop.trf.xlu0
        %v745 = vpop.trf.xlu0
        %v746 = vpop.trf.xlu0
        %vm747 = vcmask 64512
        %v749 = vsel %vm747, %v731, 0
        %v752 = vsel %vm747, %v732, 0
        %754 = vmatpush.msra.mxu0 0.0
        %755 = vmatpush.msra.mxu0 0.0
        %756 = vmatpush.msra.mxu0 0.0
        %757 = vmatpush.msra.mxu0 0.0
        %758 = vmatpush.msra.mxu0 0.0
        %759 = vmatpush.msra.mxu0 0.0
        %760 = vmatpush.msra.mxu0 0.0
        %761 = vmatpush.msra.mxu0 0.0
        %762 = vmatpush.msra.mxu0 0.0
        %763 = vmatpush.msra.mxu0 0.0
        %764 = vmatpush.msra.mxu0 0.0
        %765 = vmatpush.msra.mxu0 0.0
        %766 = vmatpush.msra.mxu0 0.0
        %767 = vmatpush.msra.mxu0 0.0
        %768 = vmatpush.msra.mxu0 0.0
        %769 = vmatpush.msra.mxu0 %v338
        %770 = vmatmul.f32.gmra.mxu0 %v749
        %v771 = vpop.f32.mrf.mxu0
        %v772 = vadd.f32 0.0, %v771
        %773 = vmatmul.f32.gmra.mxu0 %v752
        %v774 = vpop.f32.mrf.mxu0
        %v775 = vadd.f32 0.0, %v774
        %776 = vdwg.mxu0
        %v777 = vstv %s411
        %v778 = vmul.f32 %v772, %v777
        %v779 = vmul.f32 %v775, %v777
        %s780 = ssub.s32 %s391, 1
        %p781 = scmp.gt.s32.totalorder %s780, 0
        %s782 = scalar_select %p781, %s780, 0
        %s783 = ssub.s32 %s393, 1
        %p784 = scmp.gt.s32.totalorder %s783, 0
        %s785 = scalar_select %p784, %s783, 0
        %v786 = vlaneseq
        %v787 = vand.u32 %v786, 127
        %v788 = vstv %s782
        %vm789 = vcmp.eq.s32.totalorder %v787, %v788
        %v790 = vsel %vm789, 1, 0
        %v791 = vcvt.s32.f32 %v790
        %v792 = vstv %s785
        %vm793 = vcmp.eq.s32.totalorder %v787, %v792
        %v794 = vsel %vm793, 1, 0
        %v795 = vcvt.s32.f32 %v794
        %v797 = vsel %vm747, %v791, 0
        %799 = vmatpush.msra.mxu0 0.0
        %800 = vmatpush.msra.mxu0 0.0
        %801 = vmatpush.msra.mxu0 0.0
        %802 = vmatpush.msra.mxu0 0.0
        %803 = vmatpush.msra.mxu0 0.0
        %804 = vmatpush.msra.mxu0 0.0
        %805 = vmatpush.msra.mxu0 0.0
        %806 = vmatpush.msra.mxu0 0.0
        %807 = vmatpush.msra.mxu0 0.0
        %808 = vmatpush.msra.mxu0 0.0
        %809 = vmatpush.msra.mxu0 0.0
        %810 = vmatpush.msra.mxu0 0.0
        %811 = vmatpush.msra.mxu0 0.0
        %812 = vmatpush.msra.mxu0 0.0
        %813 = vmatpush.msra.mxu0 0.0
        %814 = vmatpush.msra.mxu0 %v436
        %815 = vmatmul.f32.gmra.mxu0 %v797
        %v816 = vpop.f32.mrf.mxu0
        %v817 = vadd.f32 0.0, %v816
        %818 = vdwg.mxu0
        %v820 = vsel %vm657, %v795, 0
        %822 = vmatpush.msra.mxu0 0.0
        %823 = vmatpush.msra.mxu0 0.0
        %824 = vmatpush.msra.mxu0 0.0
        %825 = vmatpush.msra.mxu0 0.0
        %826 = vmatpush.msra.mxu0 0.0
        %827 = vmatpush.msra.mxu0 0.0
        %828 = vmatpush.msra.mxu0 0.0
        %829 = vmatpush.msra.mxu0 0.0
        %830 = vmatpush.msra.mxu0 0.0
        %831 = vmatpush.msra.mxu0 0.0
        %832 = vmatpush.msra.mxu0 0.0
        %833 = vmatpush.msra.mxu0 0.0
        %834 = vmatpush.msra.mxu0 0.0
        %835 = vmatpush.msra.mxu0 0.0
        %836 = vmatpush.msra.mxu0 %v450
        %837 = vmatpush.msra.mxu0 %v449
        %838 = vmatmul.f32.gmra.mxu0 %v820
        %v839 = vpop.f32.mrf.mxu0
        %v840 = vadd.f32 0.0, %v839
        %841 = vdwg.mxu0
        %v842 = vperm.slane %v840, 0
        %v843 = vmul.f32 %v436, %v842
        %v844 = vsel %vm452, %v843, 0.0
        %845 = vadd.xlane.f32.xlu0 %v844
        %v846 = vpop.xlane.xlu0 %845
        %v847 = vmul.f32 %v840, %v840
        %vm848 = vcmask 253952
        %v849 = vsel %vm848, %v847, 0.0
        %850 = vadd.xlane.f32.xlu0 %v849
        %v851 = vpop.xlane.xlu0 %850
        %v852 = vrsqrt.pop %v851
        %v853 = vmul.f32 %v852, %v851
        %v854 = vmul.f32 %v853, %v852
        %v855 = vmul.f32 0.5, %v854
        %v856 = vsub.f32 1.5, %v855
        %v857 = vmul.f32 %v852, %v856
        %v858 = vmul.f32 %v851, %v857
        %vm859 = vcmp.eq.f32.partialorder %v851, inf
        %v860 = vsel %vm859, %v851, %v858
        %vm861 = vcmp.eq.f32.partialorder %v851, 0.0
        %v862 = vand.u32 %v851, 2147483648
        %v863 = vsel %vm861, %v862, %v860
        %v864 = vmax.f32 %v863, 0.0001
        %v865 = vrcp.pop %v864
        %v866 = vmul.f32 %v864, %v865
        %v867 = vsub.f32 1.0, %v866
        %v868 = vmul.f32 %v865, %v867
        %v869 = vadd.f32 %v865, %v868
        %vm870 = vweird.f32 %v864
        %vm871 = vweird.f32 %v865
        %vm872 = vmor %vm870, %vm871
        %v873 = vsel %vm872, %v865, %v869
        %v874 = vand.u32 2147483647, %v864
        %vm875 = vcmp.eq.f32.partialorder %v874, 8.507059e+37
        %v876 = vand.u32 %v864, 2147483648
        %v877 = vor.u32 1.1754944e-38, %v876
        %v878 = vsel %vm875, %v877, %v873
        %v879 = vmul.f32 1.0, %v878
        %v880 = vperm.slane %v879, 0
        %v881 = vmul.f32 %v573, %v880
        %v882 = vmul.f32 %v846, %v881
        %v884 = vsel %vm452, %v843, 0
        %886 = vmatpush.xpose.msra.mxu0 0.0
        %887 = vmatpush.xpose.msra.mxu0 0.0
        %888 = vmatpush.xpose.msra.mxu0 0.0
        %889 = vmatpush.xpose.msra.mxu0 0.0
        %890 = vmatpush.xpose.msra.mxu0 0.0
        %891 = vmatpush.xpose.msra.mxu0 0.0
        %892 = vmatpush.xpose.msra.mxu0 0.0
        %893 = vmatpush.xpose.msra.mxu0 0.0
        %894 = vmatpush.xpose.msra.mxu0 0.0
        %895 = vmatpush.xpose.msra.mxu0 0.0
        %896 = vmatpush.xpose.msra.mxu0 0.0
        %897 = vmatpush.xpose.msra.mxu0 0.0
        %898 = vmatpush.xpose.msra.mxu0 0.0
        %899 = vmatpush.xpose.msra.mxu0 0.0
        %900 = vmatpush.xpose.msra.mxu0 0.0
        %901 = vmatpush.xpose.msra.mxu0 %v457
        %902 = vmatmul.f32.gmra.mxu0 %v884
        %v903 = vpop.f32.mrf.mxu0
        %v904 = vadd.f32 0.0, %v903
        %905 = vdwg.mxu0
        %v907 = vsel %vm452, %v847, 0
        %909 = vmatpush.xpose.msra.mxu0 0.0
        %910 = vmatpush.xpose.msra.mxu0 0.0
        %911 = vmatpush.xpose.msra.mxu0 0.0
        %912 = vmatpush.xpose.msra.mxu0 0.0
        %913 = vmatpush.xpose.msra.mxu0 0.0
        %914 = vmatpush.xpose.msra.mxu0 0.0
        %915 = vmatpush.xpose.msra.mxu0 0.0
        %916 = vmatpush.xpose.msra.mxu0 0.0
        %917 = vmatpush.xpose.msra.mxu0 0.0
        %918 = vmatpush.xpose.msra.mxu0 0.0
        %919 = vmatpush.xpose.msra.mxu0 0.0
        %920 = vmatpush.xpose.msra.mxu0 0.0
        %921 = vmatpush.xpose.msra.mxu0 0.0
        %922 = vmatpush.xpose.msra.mxu0 0.0
        %923 = vmatpush.xpose.msra.mxu0 0.0
        %924 = vmatpush.xpose.msra.mxu0 %v457
        %925 = vmatmul.f32.gmra.mxu0 %v907
        %v926 = vpop.f32.mrf.mxu0
        %v927 = vadd.f32 0.0, %v926
        %928 = vdwg.mxu0
        %v929 = vrsqrt.pop %v927
        %v930 = vmul.f32 %v929, %v927
        %v931 = vmul.f32 %v930, %v929
        %v932 = vmul.f32 0.5, %v931
        %v933 = vsub.f32 1.5, %v932
        %v934 = vmul.f32 %v929, %v933
        %v935 = vmul.f32 %v927, %v934
        %vm936 = vcmp.eq.f32.partialorder %v927, inf
        %v937 = vsel %vm936, %v927, %v935
        %vm938 = vcmp.eq.f32.partialorder %v927, 0.0
        %v939 = vand.u32 %v927, 2147483648
        %v940 = vsel %vm938, %v939, %v937
        %v941 = vmax.f32 %v940, 0.0001
        %v942 = vrcp.pop %v941
        %v943 = vmul.f32 %v941, %v942
        %v944 = vsub.f32 1.0, %v943
        %v945 = vmul.f32 %v942, %v944
        %v946 = vadd.f32 %v942, %v945
        %vm947 = vweird.f32 %v941
        %vm948 = vweird.f32 %v942
        %vm949 = vmor %vm947, %vm948
        %v950 = vsel %vm949, %v942, %v946
        %v951 = vand.u32 2147483647, %v941
        %vm952 = vcmp.eq.f32.partialorder %v951, 8.507059e+37
        %v953 = vand.u32 %v941, 2147483648
        %v954 = vor.u32 1.1754944e-38, %v953
        %v955 = vsel %vm952, %v954, %v950
        %v956 = vmul.f32 1.0, %v955
        %v957 = vperm.slane %v956, 0
        %v958 = vmul.f32 %v573, %v957
        %v959 = vmul.f32 %v904, %v958
        %v960 = vperm.slane %v817, 0
        %v961 = vmul.f32 %v449, %v960
        %v962 = vmul.f32 %v450, %v960
        %v963 = vsel %vm452, %v961, 0.0
        %964 = vadd.xlane.f32.xlu0 %v963
        %v965 = vpop.xlane.xlu0 %964
        %v966 = vsel %vm452, %v962, 0.0
        %967 = vadd.xlane.f32.xlu0 %v966
        %v968 = vpop.xlane.xlu0 %967
        %v969 = vmul.f32 %v817, %v817
        %v970 = vsel %vm848, %v969, 0.0
        %971 = vadd.xlane.f32.xlu0 %v970
        %v972 = vpop.xlane.xlu0 %971
        %v973 = vrsqrt.pop %v972
        %v974 = vmul.f32 %v973, %v972
        %v975 = vmul.f32 %v974, %v973
        %v976 = vmul.f32 0.5, %v975
        %v977 = vsub.f32 1.5, %v976
        %v978 = vmul.f32 %v973, %v977
        %v979 = vmul.f32 %v972, %v978
        %vm980 = vcmp.eq.f32.partialorder %v972, inf
        %v981 = vsel %vm980, %v972, %v979
        %vm982 = vcmp.eq.f32.partialorder %v972, 0.0
        %v983 = vand.u32 %v972, 2147483648
        %v984 = vsel %vm982, %v983, %v981
        %v985 = vmax.f32 %v984, 0.0001
        %v986 = vrcp.pop %v985
        %v987 = vmul.f32 %v985, %v986
        %v988 = vsub.f32 1.0, %v987
        %v989 = vmul.f32 %v986, %v988
        %v990 = vadd.f32 %v986, %v989
        %vm991 = vweird.f32 %v985
        %vm992 = vweird.f32 %v986
        %vm993 = vmor %vm991, %vm992
        %v994 = vsel %vm993, %v986, %v990
        %v995 = vand.u32 2147483647, %v985
        %vm996 = vcmp.eq.f32.partialorder %v995, 8.507059e+37
        %v997 = vand.u32 %v985, 2147483648
        %v998 = vor.u32 1.1754944e-38, %v997
        %v999 = vsel %vm996, %v998, %v994
        %v1000 = vmul.f32 1.0, %v999
        %v1001 = vperm.slane %v1000, 0
        %v1002 = vmul.f32 %v596, %v1001
        %v1003 = vmul.f32 %v611, %v1001
        %v1004 = vmul.f32 %v965, %v1002
        %v1005 = vmul.f32 %v968, %v1003
        %v1007 = vsel %vm452, %v961, 0
        %v1010 = vsel %vm452, %v962, 0
        %1012 = vmatpush.xpose.msra.mxu0 0.0
        %1013 = vmatpush.xpose.msra.mxu0 0.0
        %1014 = vmatpush.xpose.msra.mxu0 0.0
        %1015 = vmatpush.xpose.msra.mxu0 0.0
        %1016 = vmatpush.xpose.msra.mxu0 0.0
        %1017 = vmatpush.xpose.msra.mxu0 0.0
        %1018 = vmatpush.xpose.msra.mxu0 0.0
        %1019 = vmatpush.xpose.msra.mxu0 0.0
        %1020 = vmatpush.xpose.msra.mxu0 0.0
        %1021 = vmatpush.xpose.msra.mxu0 0.0
        %1022 = vmatpush.xpose.msra.mxu0 0.0
        %1023 = vmatpush.xpose.msra.mxu0 0.0
        %1024 = vmatpush.xpose.msra.mxu0 0.0
        %1025 = vmatpush.xpose.msra.mxu0 0.0
        %1026 = vmatpush.xpose.msra.mxu0 0.0
        %1027 = vmatpush.xpose.msra.mxu0 %v457
        %1028 = vmatmul.f32.gmra.mxu0 %v1007
        %v1029 = vpop.f32.mrf.mxu0
        %v1030 = vadd.f32 0.0, %v1029
        %1031 = vmatmul.f32.gmra.mxu0 %v1010
        %v1032 = vpop.f32.mrf.mxu0
        %v1033 = vadd.f32 0.0, %v1032
        %1034 = vdwg.mxu0
        %v1036 = vsel %vm452, %v969, 0
        %1038 = vmatpush.xpose.msra.mxu0 0.0
        %1039 = vmatpush.xpose.msra.mxu0 0.0
        %1040 = vmatpush.xpose.msra.mxu0 0.0
        %1041 = vmatpush.xpose.msra.mxu0 0.0
        %1042 = vmatpush.xpose.msra.mxu0 0.0
        %1043 = vmatpush.xpose.msra.mxu0 0.0
        %1044 = vmatpush.xpose.msra.mxu0 0.0
        %1045 = vmatpush.xpose.msra.mxu0 0.0
        %1046 = vmatpush.xpose.msra.mxu0 0.0
        %1047 = vmatpush.xpose.msra.mxu0 0.0
        %1048 = vmatpush.xpose.msra.mxu0 0.0
        %1049 = vmatpush.xpose.msra.mxu0 0.0
        %1050 = vmatpush.xpose.msra.mxu0 0.0
        %1051 = vmatpush.xpose.msra.mxu0 0.0
        %1052 = vmatpush.xpose.msra.mxu0 0.0
        %1053 = vmatpush.xpose.msra.mxu0 %v457
        %1054 = vmatmul.f32.gmra.mxu0 %v1036
        %v1055 = vpop.f32.mrf.mxu0
        %v1056 = vadd.f32 0.0, %v1055
        %1057 = vdwg.mxu0
        %v1058 = vrsqrt.pop %v1056
        %v1059 = vmul.f32 %v1058, %v1056
        %v1060 = vmul.f32 %v1059, %v1058
        %v1061 = vmul.f32 0.5, %v1060
        %v1062 = vsub.f32 1.5, %v1061
        %v1063 = vmul.f32 %v1058, %v1062
        %v1064 = vmul.f32 %v1056, %v1063
        %vm1065 = vcmp.eq.f32.partialorder %v1056, inf
        %v1066 = vsel %vm1065, %v1056, %v1064
        %vm1067 = vcmp.eq.f32.partialorder %v1056, 0.0
        %v1068 = vand.u32 %v1056, 2147483648
        %v1069 = vsel %vm1067, %v1068, %v1066
        %v1070 = vmax.f32 %v1069, 0.0001
        %v1071 = vrcp.pop %v1070
        %v1072 = vmul.f32 %v1070, %v1071
        %v1073 = vsub.f32 1.0, %v1072
        %v1074 = vmul.f32 %v1071, %v1073
        %v1075 = vadd.f32 %v1071, %v1074
        %vm1076 = vweird.f32 %v1070
        %vm1077 = vweird.f32 %v1071
        %vm1078 = vmor %vm1076, %vm1077
        %v1079 = vsel %vm1078, %v1071, %v1075
        %v1080 = vand.u32 2147483647, %v1070
        %vm1081 = vcmp.eq.f32.partialorder %v1080, 8.507059e+37
        %v1082 = vand.u32 %v1070, 2147483648
        %v1083 = vor.u32 1.1754944e-38, %v1082
        %v1084 = vsel %vm1081, %v1083, %v1079
        %v1085 = vmul.f32 1.0, %v1084
        %v1086 = vperm.slane %v1085, 0
        %v1087 = vmul.f32 %v596, %v1086
        %v1088 = vmul.f32 %v611, %v1086
        %v1089 = vmul.f32 %v1030, %v1087
        %v1090 = vmul.f32 %v1033, %v1088
        %v1091 = vmul.f32 %v442, %v596
        %v1092 = vmul.f32 %v447, %v611
        %1095 = vrot.lane.b32.xlu0 %v1091, 120
        %v1096 = vpop.permute.xlu0 %1095
        %1097 = vrot.lane.b32.xlu0 %v1092, 120
        %v1098 = vpop.permute.xlu0 %1097
        %1101 = vxpose.xlu0.b32.start [1/16] %v1096, 128
        %1102 = vxpose.xlu0.b32.cont [2/16] %v1098, 128
        %1103 = vxpose.xlu0.b32.cont [3/16] 0.0, 128
        %1104 = vxpose.xlu0.b32.cont [4/16] 0.0, 128
        %1105 = vxpose.xlu0.b32.cont [5/16] 0.0, 128
        %1106 = vxpose.xlu0.b32.cont [6/16] 0.0, 128
        %1107 = vxpose.xlu0.b32.cont [7/16] 0.0, 128
        %1108 = vxpose.xlu0.b32.cont [8/16] 0.0, 128
        %1109 = vxpose.xlu0.b32.cont [9/16] 0.0, 128
        %1110 = vxpose.xlu0.b32.cont [10/16] 0.0, 128
        %1111 = vxpose.xlu0.b32.cont [11/16] 0.0, 128
        %1112 = vxpose.xlu0.b32.cont [12/16] 0.0, 128
        %1113 = vxpose.xlu0.b32.cont [13/16] 0.0, 128
        %1114 = vxpose.xlu0.b32.cont [14/16] 0.0, 128
        %1115 = vxpose.xlu0.b32.cont [15/16] 0.0, 128
        %1116 = vxpose.xlu0.b32.end [16/16] 0.0, 128
        %v1117 = vpop.trf.xlu0
        %v1118 = vpop.trf.xlu0
        %v1119 = vpop.trf.xlu0
        %v1120 = vpop.trf.xlu0
        %v1121 = vpop.trf.xlu0
        %v1122 = vpop.trf.xlu0
        %v1123 = vpop.trf.xlu0
        %v1124 = vpop.trf.xlu0
        %v1125 = vpop.trf.xlu0
        %v1126 = vpop.trf.xlu0
        %v1127 = vpop.trf.xlu0
        %v1128 = vpop.trf.xlu0
        %v1129 = vpop.trf.xlu0
        %v1130 = vpop.trf.xlu0
        %v1131 = vpop.trf.xlu0
        %v1132 = vpop.trf.xlu0
        %v1134 = vsel %vm657, %v1117, 0
        %1136 = vmatpush.msra.mxu0 0.0
        %1137 = vmatpush.msra.mxu0 0.0
        %1138 = vmatpush.msra.mxu0 0.0
        %1139 = vmatpush.msra.mxu0 0.0
        %1140 = vmatpush.msra.mxu0 0.0
        %1141 = vmatpush.msra.mxu0 0.0
        %1142 = vmatpush.msra.mxu0 0.0
        %1143 = vmatpush.msra.mxu0 0.0
        %1144 = vmatpush.msra.mxu0 0.0
        %1145 = vmatpush.msra.mxu0 0.0
        %1146 = vmatpush.msra.mxu0 0.0
        %1147 = vmatpush.msra.mxu0 0.0
        %1148 = vmatpush.msra.mxu0 0.0
        %1149 = vmatpush.msra.mxu0 0.0
        %1150 = vmatpush.msra.mxu0 %v450
        %1151 = vmatpush.msra.mxu0 %v449
        %1152 = vmatmul.f32.gmra.mxu0 %v1134
        %v1153 = vpop.f32.mrf.mxu0
        %v1154 = vadd.f32 0.0, %v1153
        %1155 = vdwg.mxu0
        %v1156 = vmul.f32 %v434, %v573
        %1158 = vrot.lane.b32.xlu0 %v1156, 120
        %v1159 = vpop.permute.xlu0 %1158
        %1161 = vxpose.xlu0.b32.start [1/16] %v1159, 128
        %1162 = vxpose.xlu0.b32.cont [2/16] 0.0, 128
        %1163 = vxpose.xlu0.b32.cont [3/16] 0.0, 128
        %1164 = vxpose.xlu0.b32.cont [4/16] 0.0, 128
        %1165 = vxpose.xlu0.b32.cont [5/16] 0.0, 128
        %1166 = vxpose.xlu0.b32.cont [6/16] 0.0, 128
        %1167 = vxpose.xlu0.b32.cont [7/16] 0.0, 128
        %1168 = vxpose.xlu0.b32.cont [8/16] 0.0, 128
        %1169 = vxpose.xlu0.b32.cont [9/16] 0.0, 128
        %1170 = vxpose.xlu0.b32.cont [10/16] 0.0, 128
        %1171 = vxpose.xlu0.b32.cont [11/16] 0.0, 128
        %1172 = vxpose.xlu0.b32.cont [12/16] 0.0, 128
        %1173 = vxpose.xlu0.b32.cont [13/16] 0.0, 128
        %1174 = vxpose.xlu0.b32.cont [14/16] 0.0, 128
        %1175 = vxpose.xlu0.b32.cont [15/16] 0.0, 128
        %1176 = vxpose.xlu0.b32.end [16/16] 0.0, 128
        %v1177 = vpop.trf.xlu0
        %v1178 = vpop.trf.xlu0
        %v1179 = vpop.trf.xlu0
        %v1180 = vpop.trf.xlu0
        %v1181 = vpop.trf.xlu0
        %v1182 = vpop.trf.xlu0
        %v1183 = vpop.trf.xlu0
        %v1184 = vpop.trf.xlu0
        %v1185 = vpop.trf.xlu0
        %v1186 = vpop.trf.xlu0
        %v1187 = vpop.trf.xlu0
        %v1188 = vpop.trf.xlu0
        %v1189 = vpop.trf.xlu0
        %v1190 = vpop.trf.xlu0
        %v1191 = vpop.trf.xlu0
        %v1192 = vpop.trf.xlu0
        %v1194 = vsel %vm747, %v1177, 0
        %1196 = vmatpush.msra.mxu0 0.0
        %1197 = vmatpush.msra.mxu0 0.0
        %1198 = vmatpush.msra.mxu0 0.0
        %1199 = vmatpush.msra.mxu0 0.0
        %1200 = vmatpush.msra.mxu0 0.0
        %1201 = vmatpush.msra.mxu0 0.0
        %1202 = vmatpush.msra.mxu0 0.0
        %1203 = vmatpush.msra.mxu0 0.0
        %1204 = vmatpush.msra.mxu0 0.0
        %1205 = vmatpush.msra.mxu0 0.0
        %1206 = vmatpush.msra.mxu0 0.0
        %1207 = vmatpush.msra.mxu0 0.0
        %1208 = vmatpush.msra.mxu0 0.0
        %1209 = vmatpush.msra.mxu0 0.0
        %1210 = vmatpush.msra.mxu0 0.0
        %1211 = vmatpush.msra.mxu0 %v436
        %1212 = vmatmul.f32.gmra.mxu0 %v1194
        %v1213 = vpop.f32.mrf.mxu0
        %v1214 = vadd.f32 0.0, %v1213
        %1215 = vdwg.mxu0
        %v1216 = vmul.f32 %v316, %v1154
        %v1218 = vsel %vm452, %v436, 0
        %v1221 = vsel %vm452, %v1216, 0
        %1223 = vmatpush.xpose.msra.mxu0 0.0
        %1224 = vmatpush.xpose.msra.mxu0 0.0
        %1225 = vmatpush.xpose.msra.mxu0 0.0
        %1226 = vmatpush.xpose.msra.mxu0 0.0
        %1227 = vmatpush.xpose.msra.mxu0 0.0
        %1228 = vmatpush.xpose.msra.mxu0 0.0
        %1229 = vmatpush.xpose.msra.mxu0 0.0
        %1230 = vmatpush.xpose.msra.mxu0 0.0
        %1231 = vmatpush.xpose.msra.mxu0 0.0
        %1232 = vmatpush.xpose.msra.mxu0 0.0
        %1233 = vmatpush.xpose.msra.mxu0 0.0
        %1234 = vmatpush.xpose.msra.mxu0 0.0
        %1235 = vmatpush.xpose.msra.mxu0 0.0
        %1236 = vmatpush.xpose.msra.mxu0 0.0
        %1237 = vmatpush.xpose.msra.mxu0 0.0
        %1238 = vmatpush.xpose.msra.mxu0 %v1221
        %1239 = vmatmul.f32.gmra.mxu0 %v1218
        %v1240 = vpop.f32.mrf.mxu0
        %v1241 = vadd.f32 0.0, %v1240
        %1242 = vdwg.mxu0
        %1243 = vrot.lane.b32.xlu0 %v573, 120
        %v1244 = vpop.permute.xlu0 %1243
        %v1246 = vmul.f32 %v1241, %v1244
        %v1247 = vmul.f32 %v1246, %v668
        %v1248 = vmul.f32 %v316, %v1214
        %v1250 = vsel %vm452, %v449, 0
        %v1253 = vsel %vm452, %v450, 0
        %v1256 = vsel %vm452, %v1248, 0
        %1258 = vmatpush.xpose.msra.mxu0 0.0
        %1259 = vmatpush.xpose.msra.mxu0 0.0
        %1260 = vmatpush.xpose.msra.mxu0 0.0
        %1261 = vmatpush.xpose.msra.mxu0 0.0
        %1262 = vmatpush.xpose.msra.mxu0 0.0
        %1263 = vmatpush.xpose.msra.mxu0 0.0
        %1264 = vmatpush.xpose.msra.mxu0 0.0
        %1265 = vmatpush.xpose.msra.mxu0 0.0
        %1266 = vmatpush.xpose.msra.mxu0 0.0
        %1267 = vmatpush.xpose.msra.mxu0 0.0
        %1268 = vmatpush.xpose.msra.mxu0 0.0
        %1269 = vmatpush.xpose.msra.mxu0 0.0
        %1270 = vmatpush.xpose.msra.mxu0 0.0
        %1271 = vmatpush.xpose.msra.mxu0 0.0
        %1272 = vmatpush.xpose.msra.mxu0 0.0
        %1273 = vmatpush.xpose.msra.mxu0 %v1256
        %1274 = vmatmul.f32.gmra.mxu0 %v1250
        %v1275 = vpop.f32.mrf.mxu0
        %v1276 = vadd.f32 0.0, %v1275
        %1277 = vmatmul.f32.gmra.mxu0 %v1253
        %v1278 = vpop.f32.mrf.mxu0
        %v1279 = vadd.f32 0.0, %v1278
        %1280 = vdwg.mxu0
        %1281 = vrot.lane.b32.xlu0 %v596, 120
        %v1282 = vpop.permute.xlu0 %1281
        %1283 = vrot.lane.b32.xlu0 %v611, 120
        %v1284 = vpop.permute.xlu0 %1283
        %v1287 = vmul.f32 %v1276, %v1282
        %v1288 = vmul.f32 %v1279, %v1284
        %v1289 = vmul.f32 %v1287, %v777
        %v1290 = vmul.f32 %v1288, %v777
        %v1291 = vrot.slane %v436, 1
        %v1292 = vrot.slane %v436, 2
        %v1293 = vrot.slane %v436, 3
        %v1294 = vrot.slane %v436, 4
        %v1295 = vrot.slane %v436, 5
        %v1296 = vrot.slane %v436, 6
        %v1297 = vrot.slane %v436, 7
        %v1298 = vperm.slane %v436, 0
        %v1299 = vperm.slane %v1291, 0
        %v1300 = vperm.slane %v1292, 0
        %v1301 = vperm.slane %v1293, 0
        %v1302 = vperm.slane %v1294, 0
        %v1303 = vperm.slane %v1295, 0
        %v1304 = vperm.slane %v1296, 0
        %v1305 = vperm.slane %v1297, 0
        %v1314 = vmul.f32 %v1298, %v316
        %v1315 = vmul.f32 %v1299, %v316
        %v1316 = vmul.f32 %v1300, %v316
        %v1317 = vmul.f32 %v1301, %v316
        %v1318 = vmul.f32 %v1302, %v316
        %v1319 = vmul.f32 %v1303, %v316
        %v1320 = vmul.f32 %v1304, %v316
        %v1321 = vmul.f32 %v1305, %v316
        %v1322 = vperm.slane %v573, 0
        %v1323 = vlaneseq
        %v1324 = vshrl.u32 %v1323, 7
        %v1325 = vadd.s32 %v1324, 8
        %1326 = vset.pattern.permute.xlu0 %v1325
        %1327 = vperm.xlu0 %1326, %v1322
        %v1328 = vpop.permute.xlu0 %1327
        %v1329 = vperm.slane %v573, 1
        %v1330 = vlaneseq
        %v1331 = vshrl.u32 %v1330, 7
        %v1332 = vadd.s32 %v1331, 8
        %1333 = vset.pattern.permute.xlu0 %v1332
        %1334 = vperm.xlu0 %1333, %v1329
        %v1335 = vpop.permute.xlu0 %1334
        %v1336 = vperm.slane %v573, 2
        %v1337 = vlaneseq
        %v1338 = vshrl.u32 %v1337, 7
        %v1339 = vadd.s32 %v1338, 8
        %1340 = vset.pattern.permute.xlu0 %v1339
        %1341 = vperm.xlu0 %1340, %v1336
        %v1342 = vpop.permute.xlu0 %1341
        %v1343 = vperm.slane %v573, 3
        %v1344 = vlaneseq
        %v1345 = vshrl.u32 %v1344, 7
        %v1346 = vadd.s32 %v1345, 8
        %1347 = vset.pattern.permute.xlu0 %v1346
        %1348 = vperm.xlu0 %1347, %v1343
        %v1349 = vpop.permute.xlu0 %1348
        %v1350 = vperm.slane %v573, 4
        %v1351 = vlaneseq
        %v1352 = vshrl.u32 %v1351, 7
        %v1353 = vadd.s32 %v1352, 8
        %1354 = vset.pattern.permute.xlu0 %v1353
        %1355 = vperm.xlu0 %1354, %v1350
        %v1356 = vpop.permute.xlu0 %1355
        %v1357 = vperm.slane %v573, 5
        %v1358 = vlaneseq
        %v1359 = vshrl.u32 %v1358, 7
        %v1360 = vadd.s32 %v1359, 8
        %1361 = vset.pattern.permute.xlu0 %v1360
        %1362 = vperm.xlu0 %1361, %v1357
        %v1363 = vpop.permute.xlu0 %1362
        %v1364 = vperm.slane %v573, 6
        %v1365 = vlaneseq
        %v1366 = vshrl.u32 %v1365, 7
        %v1367 = vadd.s32 %v1366, 8
        %1368 = vset.pattern.permute.xlu0 %v1367
        %1369 = vperm.xlu0 %1368, %v1364
        %v1370 = vpop.permute.xlu0 %1369
        %v1371 = vperm.slane %v573, 7
        %v1372 = vlaneseq
        %v1373 = vshrl.u32 %v1372, 7
        %v1374 = vadd.s32 %v1373, 8
        %1375 = vset.pattern.permute.xlu0 %v1374
        %1376 = vperm.xlu0 %1375, %v1371
        %v1377 = vpop.permute.xlu0 %1376
        %v1378 = vmul.f32 %v1314, %v1328
        %v1379 = vmul.f32 %v1315, %v1335
        %v1380 = vmul.f32 %v1316, %v1342
        %v1381 = vmul.f32 %v1317, %v1349
        %v1382 = vmul.f32 %v1318, %v1356
        %v1383 = vmul.f32 %v1319, %v1363
        %v1384 = vmul.f32 %v1320, %v1370
        %v1385 = vmul.f32 %v1321, %v1377
        %v1387 = vsel %vm452, %v1378, 0
        %v1390 = vsel %vm452, %v1379, 0
        %v1393 = vsel %vm452, %v1380, 0
        %v1396 = vsel %vm452, %v1381, 0
        %v1399 = vsel %vm452, %v1382, 0
        %v1402 = vsel %vm452, %v1383, 0
        %v1405 = vsel %vm452, %v1384, 0
        %v1408 = vsel %vm452, %v1385, 0
        %1410 = vmatpush.xpose.msra.mxu0 0.0
        %1411 = vmatpush.xpose.msra.mxu0 0.0
        %1412 = vmatpush.xpose.msra.mxu0 0.0
        %1413 = vmatpush.xpose.msra.mxu0 0.0
        %1414 = vmatpush.xpose.msra.mxu0 0.0
        %1415 = vmatpush.xpose.msra.mxu0 0.0
        %1416 = vmatpush.xpose.msra.mxu0 0.0
        %1417 = vmatpush.xpose.msra.mxu0 0.0
        %1418 = vmatpush.xpose.msra.mxu0 0.0
        %1419 = vmatpush.xpose.msra.mxu0 0.0
        %1420 = vmatpush.xpose.msra.mxu0 0.0
        %1421 = vmatpush.xpose.msra.mxu0 0.0
        %1422 = vmatpush.xpose.msra.mxu0 0.0
        %1423 = vmatpush.xpose.msra.mxu0 0.0
        %1424 = vmatpush.xpose.msra.mxu0 %v1253
        %1425 = vmatpush.xpose.msra.mxu0 %v1250
        %1426 = vmatmul.f32.gmra.mxu0 %v1387
        %v1427 = vpop.f32.mrf.mxu0
        %v1428 = vadd.f32 0.0, %v1427
        %1429 = vmatmul.f32.gmra.mxu0 %v1390
        %v1430 = vpop.f32.mrf.mxu0
        %v1431 = vadd.f32 0.0, %v1430
        %1432 = vmatmul.f32.gmra.mxu0 %v1393
        %v1433 = vpop.f32.mrf.mxu0
        %v1434 = vadd.f32 0.0, %v1433
        %1435 = vmatmul.f32.gmra.mxu0 %v1396
        %v1436 = vpop.f32.mrf.mxu0
        %v1437 = vadd.f32 0.0, %v1436
        %1438 = vmatmul.f32.gmra.mxu0 %v1399
        %v1439 = vpop.f32.mrf.mxu0
        %v1440 = vadd.f32 0.0, %v1439
        %1441 = vmatmul.f32.gmra.mxu0 %v1402
        %v1442 = vpop.f32.mrf.mxu0
        %v1443 = vadd.f32 0.0, %v1442
        %1444 = vmatmul.f32.gmra.mxu0 %v1405
        %v1445 = vpop.f32.mrf.mxu0
        %v1446 = vadd.f32 0.0, %v1445
        %1447 = vmatmul.f32.gmra.mxu0 %v1408
        %v1448 = vpop.f32.mrf.mxu0
        %v1449 = vadd.f32 0.0, %v1448
        %1450 = vdwg.mxu0
        %1451 = vxpose.xlu0.b32.start [1/16] %v1282, 128
        %1452 = vxpose.xlu0.b32.cont [2/16] %v1284, 128
        %1453 = vxpose.xlu0.b32.cont [3/16] 0.0, 128
        %1454 = vxpose.xlu0.b32.cont [4/16] 0.0, 128
        %1455 = vxpose.xlu0.b32.cont [5/16] 0.0, 128
        %1456 = vxpose.xlu0.b32.cont [6/16] 0.0, 128
        %1457 = vxpose.xlu0.b32.cont [7/16] 0.0, 128
        %1458 = vxpose.xlu0.b32.cont [8/16] 0.0, 128
        %1459 = vxpose.xlu0.b32.cont [9/16] 0.0, 128
        %1460 = vxpose.xlu0.b32.cont [10/16] 0.0, 128
        %1461 = vxpose.xlu0.b32.cont [11/16] 0.0, 128
        %1462 = vxpose.xlu0.b32.cont [12/16] 0.0, 128
        %1463 = vxpose.xlu0.b32.cont [13/16] 0.0, 128
        %1464 = vxpose.xlu0.b32.cont [14/16] 0.0, 128
        %1465 = vxpose.xlu0.b32.cont [15/16] 0.0, 128
        %1466 = vxpose.xlu0.b32.end [16/16] 0.0, 128
        %v1467 = vpop.trf.xlu0
        %v1468 = vpop.trf.xlu0
        %v1469 = vpop.trf.xlu0
        %v1470 = vpop.trf.xlu0
        %v1471 = vpop.trf.xlu0
        %v1472 = vpop.trf.xlu0
        %v1473 = vpop.trf.xlu0
        %v1474 = vpop.trf.xlu0
        %v1475 = vpop.trf.xlu0
        %v1476 = vpop.trf.xlu0
        %v1477 = vpop.trf.xlu0
        %v1478 = vpop.trf.xlu0
        %v1479 = vpop.trf.xlu0
        %v1480 = vpop.trf.xlu0
        %v1481 = vpop.trf.xlu0
        %v1482 = vpop.trf.xlu0
        %v1483 = vmul.f32 %v1428, %v1467
        %v1484 = vmul.f32 %v1431, %v1467
        %v1485 = vmul.f32 %v1434, %v1467
        %v1486 = vmul.f32 %v1437, %v1467
        %v1487 = vmul.f32 %v1440, %v1467
        %v1488 = vmul.f32 %v1443, %v1467
        %v1489 = vmul.f32 %v1446, %v1467
        %v1490 = vmul.f32 %v1449, %v1467
        %v1491 = vsel %vm655, %v1483, -3.4028235e+38
        %v1492 = vsel %vm655, %v1484, -3.4028235e+38
        %v1493 = vsel %vm655, %v1485, -3.4028235e+38
        %v1494 = vsel %vm655, %v1486, -3.4028235e+38
        %v1495 = vsel %vm655, %v1487, -3.4028235e+38
        %v1496 = vsel %vm655, %v1488, -3.4028235e+38
        %v1497 = vsel %vm655, %v1489, -3.4028235e+38
        %v1498 = vsel %vm655, %v1490, -3.4028235e+38
        %v1499 = vsel %vm657, %v1491, -inf
        %1500 = vmax.xlane.f32.xlu0 %v1499
        %v1501 = vpop.xlane.xlu0 %1500
        %v1502 = vsel %vm657, %v1492, -inf
        %1503 = vmax.xlane.f32.xlu0 %v1502
        %v1504 = vpop.xlane.xlu0 %1503
        %v1505 = vsel %vm657, %v1493, -inf
        %1506 = vmax.xlane.f32.xlu0 %v1505
        %v1507 = vpop.xlane.xlu0 %1506
        %v1508 = vsel %vm657, %v1494, -inf
        %1509 = vmax.xlane.f32.xlu0 %v1508
        %v1510 = vpop.xlane.xlu0 %1509
        %v1511 = vsel %vm657, %v1495, -inf
        %1512 = vmax.xlane.f32.xlu0 %v1511
        %v1513 = vpop.xlane.xlu0 %1512
        %v1514 = vsel %vm657, %v1496, -inf
        %1515 = vmax.xlane.f32.xlu0 %v1514
        %v1516 = vpop.xlane.xlu0 %1515
        %v1517 = vsel %vm657, %v1497, -inf
        %1518 = vmax.xlane.f32.xlu0 %v1517
        %v1519 = vpop.xlane.xlu0 %1518
        %v1520 = vsel %vm657, %v1498, -inf
        %1521 = vmax.xlane.f32.xlu0 %v1520
        %v1522 = vpop.xlane.xlu0 %1521
        %v1523 = vmax.f32 %v1501, -3.4028235e+38
        %v1524 = vmax.f32 %v1504, -3.4028235e+38
        %v1525 = vmax.f32 %v1507, -3.4028235e+38
        %v1526 = vmax.f32 %v1510, -3.4028235e+38
        %v1527 = vmax.f32 %v1513, -3.4028235e+38
        %v1528 = vmax.f32 %v1516, -3.4028235e+38
        %v1529 = vmax.f32 %v1519, -3.4028235e+38
        %v1530 = vmax.f32 %v1522, -3.4028235e+38
        %v1531 = vrot.slane %v670, 1
        %v1532 = vrot.slane %v670, 2
        %v1533 = vrot.slane %v670, 3
        %v1534 = vrot.slane %v670, 4
        %v1535 = vrot.slane %v670, 5
        %v1536 = vrot.slane %v670, 6
        %v1537 = vrot.slane %v670, 7
        %vm1538 = vcmp.ne.s32.totalorder %v1531, 0
        %vm1539 = vcmp.ne.s32.totalorder %v1532, 0
        %vm1540 = vcmp.ne.s32.totalorder %v1533, 0
        %vm1541 = vcmp.ne.s32.totalorder %v1534, 0
        %vm1542 = vcmp.ne.s32.totalorder %v1535, 0
        %vm1543 = vcmp.ne.s32.totalorder %v1536, 0
        %vm1544 = vcmp.ne.s32.totalorder %v1537, 0
        %v1545 = vsel %vm1538, 1, 0
        %v1546 = vsel %vm1539, 1, 0
        %v1547 = vsel %vm1540, 1, 0
        %v1548 = vsel %vm1541, 1, 0
        %v1549 = vsel %vm1542, 1, 0
        %v1550 = vsel %vm1543, 1, 0
        %v1551 = vsel %vm1544, 1, 0
        %v1552 = vperm.slane %v670, 0
        %v1553 = vperm.slane %v1545, 0
        %v1554 = vperm.slane %v1546, 0
        %v1555 = vperm.slane %v1547, 0
        %v1556 = vperm.slane %v1548, 0
        %v1557 = vperm.slane %v1549, 0
        %v1558 = vperm.slane %v1550, 0
        %v1559 = vperm.slane %v1551, 0
        %1560 = vset.pattern.permute.xlu0 0
        %1561 = vperm.xlu0 %1560, %v1552
        %v1562 = vpop.permute.xlu0 %1561
        %1563 = vset.pattern.permute.xlu0 0
        %1564 = vperm.xlu0 %1563, %v1553
        %v1565 = vpop.permute.xlu0 %1564
        %1566 = vset.pattern.permute.xlu0 0
        %1567 = vperm.xlu0 %1566, %v1554
        %v1568 = vpop.permute.xlu0 %1567
        %1569 = vset.pattern.permute.xlu0 0
        %1570 = vperm.xlu0 %1569, %v1555
        %v1571 = vpop.permute.xlu0 %1570
        %1572 = vset.pattern.permute.xlu0 0
        %1573 = vperm.xlu0 %1572, %v1556
        %v1574 = vpop.permute.xlu0 %1573
        %1575 = vset.pattern.permute.xlu0 0
        %1576 = vperm.xlu0 %1575, %v1557
        %v1577 = vpop.permute.xlu0 %1576
        %1578 = vset.pattern.permute.xlu0 0
        %1579 = vperm.xlu0 %1578, %v1558
        %v1580 = vpop.permute.xlu0 %1579
        %1581 = vset.pattern.permute.xlu0 0
        %1582 = vperm.xlu0 %1581, %v1559
        %v1583 = vpop.permute.xlu0 %1582
        %vm1584 = vcmp.eq.s32.totalorder %v1562, 1
        %vm1585 = vcmp.eq.s32.totalorder %v1565, 1
        %vm1586 = vcmp.eq.s32.totalorder %v1568, 1
        %vm1587 = vcmp.eq.s32.totalorder %v1571, 1
        %vm1588 = vcmp.eq.s32.totalorder %v1574, 1
        %vm1589 = vcmp.eq.s32.totalorder %v1577, 1
        %vm1590 = vcmp.eq.s32.totalorder %v1580, 1
        %vm1591 = vcmp.eq.s32.totalorder %v1583, 1
        %v1592 = vsel %vm1584, %v1483, -3.4028235e+38
        %v1593 = vsel %vm1585, %v1484, -3.4028235e+38
        %v1594 = vsel %vm1586, %v1485, -3.4028235e+38
        %v1595 = vsel %vm1587, %v1486, -3.4028235e+38
        %v1596 = vsel %vm1588, %v1487, -3.4028235e+38
        %v1597 = vsel %vm1589, %v1488, -3.4028235e+38
        %v1598 = vsel %vm1590, %v1489, -3.4028235e+38
        %v1599 = vsel %vm1591, %v1490, -3.4028235e+38
        %v1600 = vsel %vm657, %v1592, -inf
        %v1601 = vsel %vm657, %v1593, -inf
        %v1602 = vsel %vm657, %v1594, -inf
        %v1603 = vsel %vm657, %v1595, -inf
        %v1604 = vsel %vm657, %v1596, -inf
        %v1605 = vmax.f32 %v1600, %v1604
        %v1606 = vsel %vm657, %v1597, -inf
        %v1607 = vmax.f32 %v1601, %v1606
        %v1608 = vsel %vm657, %v1598, -inf
        %v1609 = vmax.f32 %v1602, %v1608
        %v1610 = vsel %vm657, %v1599, -inf
        %v1611 = vmax.f32 %v1603, %v1610
        %v1612 = vmax.f32 %v1605, %v1607
        %v1613 = vmax.f32 %v1609, %v1611
        %v1614 = vmax.f32 %v1612, %v1613
        %1615 = vxpose.xlu0.b32.start [1/16] %v1614, 128
        %1616 = vxpose.xlu0.b32.cont [2/16] 0.0, 128
        %1617 = vxpose.xlu0.b32.cont [3/16] 0.0, 128
        %1618 = vxpose.xlu0.b32.cont [4/16] 0.0, 128
        %1619 = vxpose.xlu0.b32.cont [5/16] 0.0, 128
        %1620 = vxpose.xlu0.b32.cont [6/16] 0.0, 128
        %1621 = vxpose.xlu0.b32.cont [7/16] 0.0, 128
        %1622 = vxpose.xlu0.b32.cont [8/16] 0.0, 128
        %1623 = vxpose.xlu0.b32.cont [9/16] 0.0, 128
        %1624 = vxpose.xlu0.b32.cont [10/16] 0.0, 128
        %1625 = vxpose.xlu0.b32.cont [11/16] 0.0, 128
        %1626 = vxpose.xlu0.b32.cont [12/16] 0.0, 128
        %1627 = vxpose.xlu0.b32.cont [13/16] 0.0, 128
        %1628 = vxpose.xlu0.b32.cont [14/16] 0.0, 128
        %1629 = vxpose.xlu0.b32.cont [15/16] 0.0, 128
        %1630 = vxpose.xlu0.b32.end [16/16] 0.0, 128
        %v1631 = vpop.trf.xlu0
        %v1632 = vpop.trf.xlu0
        %v1633 = vpop.trf.xlu0
        %v1634 = vpop.trf.xlu0
        %v1635 = vpop.trf.xlu0
        %v1636 = vpop.trf.xlu0
        %v1637 = vpop.trf.xlu0
        %v1638 = vpop.trf.xlu0
        %v1639 = vpop.trf.xlu0
        %v1640 = vpop.trf.xlu0
        %v1641 = vpop.trf.xlu0
        %v1642 = vpop.trf.xlu0
        %v1643 = vpop.trf.xlu0
        %v1644 = vpop.trf.xlu0
        %v1645 = vpop.trf.xlu0
        %v1646 = vpop.trf.xlu0
        %v1648 = vsel %vm657, %v651, 0
        %1650 = vmatpush.msra.mxu0 0.0
        %1651 = vmatpush.msra.mxu0 0.0
        %1652 = vmatpush.msra.mxu0 0.0
        %1653 = vmatpush.msra.mxu0 0.0
        %1654 = vmatpush.msra.mxu0 0.0
        %1655 = vmatpush.msra.mxu0 0.0
        %1656 = vmatpush.msra.mxu0 0.0
        %1657 = vmatpush.msra.mxu0 0.0
        %1658 = vmatpush.msra.mxu0 0.0
        %1659 = vmatpush.msra.mxu0 0.0
        %1660 = vmatpush.msra.mxu0 0.0
        %1661 = vmatpush.msra.mxu0 0.0
        %1662 = vmatpush.msra.mxu0 0.0
        %1663 = vmatpush.msra.mxu0 0.0
        %1664 = vmatpush.msra.mxu0 %v450
        %1665 = vmatpush.msra.mxu0 %v449
        %1666 = vmatmul.f32.gmra.mxu0 %v1648
        %v1667 = vpop.f32.mrf.mxu0
        %v1668 = vadd.f32 0.0, %v1667
        %1669 = vdwg.mxu0
        %1670 = vmatpush.msra.mxu0 0.0
        %1671 = vmatpush.msra.mxu0 0.0
        %1672 = vmatpush.msra.mxu0 0.0
        %1673 = vmatpush.msra.mxu0 0.0
        %1674 = vmatpush.msra.mxu0 0.0
        %1675 = vmatpush.msra.mxu0 0.0
        %1676 = vmatpush.msra.mxu0 0.0
        %1677 = vmatpush.msra.mxu0 0.0
        %1678 = vmatpush.msra.mxu0 0.0
        %1679 = vmatpush.msra.mxu0 0.0
        %1680 = vmatpush.msra.mxu0 0.0
        %1681 = vmatpush.msra.mxu0 0.0
        %1682 = vmatpush.msra.mxu0 0.0
        %1683 = vmatpush.msra.mxu0 0.0
        %1684 = vmatpush.msra.mxu0 0.0
        %1685 = vmatpush.msra.mxu0 %v436
        %1686 = vmatmul.f32.gmra.mxu0 %v749
        %v1687 = vpop.f32.mrf.mxu0
        %v1688 = vadd.f32 0.0, %v1687
        %1689 = vmatmul.f32.gmra.mxu0 %v752
        %v1690 = vpop.f32.mrf.mxu0
        %v1691 = vadd.f32 0.0, %v1690
        %1692 = vdwg.mxu0
        %v1693 = vmul.f32 %v1668, %v434
        %v1694 = vsel %vm452, %v1693, -inf
        %1695 = vmax.xlane.f32.xlu0 %v1694
        %v1696 = vpop.xlane.xlu0 %1695
        %v1697 = vsub.f32 %v1693, %v1696
        %v1698 = vmul.f32 %v1697, 1.442695
        %v1699 = vpow.pop %v1698
        %v1700 = vsel %vm452, %v1699, 0.0
        %1701 = vadd.xlane.f32.xlu0 %v1700
        %v1702 = vpop.xlane.xlu0 %1701
        %v1703 = vrcp.pop %v1702
        %v1704 = vmul.f32 %v1702, %v1703
        %v1705 = vsub.f32 1.0, %v1704
        %v1706 = vmul.f32 %v1703, %v1705
        %v1707 = vadd.f32 %v1703, %v1706
        %vm1708 = vweird.f32 %v1702
        %vm1709 = vweird.f32 %v1703
        %vm1710 = vmor %vm1708, %vm1709
        %v1711 = vsel %vm1710, %v1703, %v1707
        %v1712 = vand.u32 2147483647, %v1702
        %vm1713 = vcmp.eq.f32.partialorder %v1712, 8.507059e+37
        %v1714 = vand.u32 %v1702, 2147483648
        %v1715 = vor.u32 1.1754944e-38, %v1714
        %v1716 = vsel %vm1713, %v1715, %v1711
        %v1717 = vmul.f32 %v1699, %v1716
        %v1718 = vmul.f32 %v1717, %v434
        %v1719 = vsel %vm452, %v1718, 0.0
        %1720 = vadd.xlane.f32.xlu0 %v1719
        %v1721 = vpop.xlane.xlu0 %1720
        %v1722 = vadd.f32 %v1721, 1e-13
        %v1723 = vrcp.pop %v1722
        %v1724 = vmul.f32 %v1722, %v1723
        %v1725 = vsub.f32 1.0, %v1724
        %v1726 = vmul.f32 %v1723, %v1725
        %v1727 = vadd.f32 %v1723, %v1726
        %vm1728 = vweird.f32 %v1722
        %vm1729 = vweird.f32 %v1723
        %vm1730 = vmor %vm1728, %vm1729
        %v1731 = vsel %vm1730, %v1723, %v1727
        %v1732 = vand.u32 2147483647, %v1722
        %vm1733 = vcmp.eq.f32.partialorder %v1732, 8.507059e+37
        %v1734 = vand.u32 %v1722, 2147483648
        %v1735 = vor.u32 1.1754944e-38, %v1734
        %v1736 = vsel %vm1733, %v1735, %v1731
        %v1737 = vmul.f32 %v1718, %v1736
        %v1738 = vmul.f32 %v1688, %v442
        %v1739 = vmul.f32 %v1691, %v447
        %v1740 = vsel %vm452, %v1738, -inf
        %1741 = vmax.xlane.f32.xlu0 %v1740
        %v1742 = vpop.xlane.xlu0 %1741
        %v1743 = vsel %vm452, %v1739, -inf
        %1744 = vmax.xlane.f32.xlu0 %v1743
        %v1745 = vpop.xlane.xlu0 %1744
        %v1746 = vsub.f32 %v1738, %v1742
        %v1747 = vsub.f32 %v1739, %v1745
        %v1748 = vmul.f32 %v1746, 1.442695
        %v1749 = vpow.pop %v1748
        %v1750 = vmul.f32 %v1747, 1.442695
        %v1751 = vpow.pop %v1750
        %v1752 = vsel %vm452, %v1749, 0.0
        %1753 = vadd.xlane.f32.xlu0 %v1752
        %v1754 = vpop.xlane.xlu0 %1753
        %v1755 = vsel %vm452, %v1751, 0.0
        %1756 = vadd.xlane.f32.xlu0 %v1755
        %v1757 = vpop.xlane.xlu0 %1756
        %v1758 = vrcp.pop %v1754
        %v1759 = vmul.f32 %v1754, %v1758
        %v1760 = vsub.f32 1.0, %v1759
        %v1761 = vmul.f32 %v1758, %v1760
        %v1762 = vadd.f32 %v1758, %v1761
        %vm1763 = vweird.f32 %v1754
        %vm1764 = vweird.f32 %v1758
        %vm1765 = vmor %vm1763, %vm1764
        %v1766 = vsel %vm1765, %v1758, %v1762
        %v1767 = vand.u32 2147483647, %v1754
        %vm1768 = vcmp.eq.f32.partialorder %v1767, 8.507059e+37
        %v1769 = vand.u32 %v1754, 2147483648
        %v1770 = vor.u32 1.1754944e-38, %v1769
        %v1771 = vsel %vm1768, %v1770, %v1766
        %v1772 = vmul.f32 %v1749, %v1771
        %v1773 = vrcp.pop %v1757
        %v1774 = vmul.f32 %v1757, %v1773
        %v1775 = vsub.f32 1.0, %v1774
        %v1776 = vmul.f32 %v1773, %v1775
        %v1777 = vadd.f32 %v1773, %v1776
        %vm1778 = vweird.f32 %v1757
        %vm1779 = vweird.f32 %v1773
        %vm1780 = vmor %vm1778, %vm1779
        %v1781 = vsel %vm1780, %v1773, %v1777
        %v1782 = vand.u32 2147483647, %v1757
        %vm1783 = vcmp.eq.f32.partialorder %v1782, 8.507059e+37
        %v1784 = vand.u32 %v1757, 2147483648
        %v1785 = vor.u32 1.1754944e-38, %v1784
        %v1786 = vsel %vm1783, %v1785, %v1781
        %v1787 = vmul.f32 %v1751, %v1786
        %v1788 = vmul.f32 %v1772, %v442
        %v1789 = vmul.f32 %v1787, %v447
        %v1790 = vsel %vm452, %v1788, 0.0
        %1791 = vadd.xlane.f32.xlu0 %v1790
        %v1792 = vpop.xlane.xlu0 %1791
        %v1793 = vsel %vm452, %v1789, 0.0
        %1794 = vadd.xlane.f32.xlu0 %v1793
        %v1795 = vpop.xlane.xlu0 %1794
        %v1796 = vadd.f32 %v1792, 1e-13
        %v1797 = vadd.f32 %v1795, 1e-13
        %v1798 = vrcp.pop %v1796
        %v1799 = vmul.f32 %v1796, %v1798
        %v1800 = vsub.f32 1.0, %v1799
        %v1801 = vmul.f32 %v1798, %v1800
        %v1802 = vadd.f32 %v1798, %v1801
        %vm1803 = vweird.f32 %v1796
        %vm1804 = vweird.f32 %v1798
        %vm1805 = vmor %vm1803, %vm1804
        %v1806 = vsel %vm1805, %v1798, %v1802
        %v1807 = vand.u32 2147483647, %v1796
        %vm1808 = vcmp.eq.f32.partialorder %v1807, 8.507059e+37
        %v1809 = vand.u32 %v1796, 2147483648
        %v1810 = vor.u32 1.1754944e-38, %v1809
        %v1811 = vsel %vm1808, %v1810, %v1806
        %v1812 = vmul.f32 %v1788, %v1811
        %v1813 = vrcp.pop %v1797
        %v1814 = vmul.f32 %v1797, %v1813
        %v1815 = vsub.f32 1.0, %v1814
        %v1816 = vmul.f32 %v1813, %v1815
        %v1817 = vadd.f32 %v1813, %v1816
        %vm1818 = vweird.f32 %v1797
        %vm1819 = vweird.f32 %v1813
        %vm1820 = vmor %vm1818, %vm1819
        %v1821 = vsel %vm1820, %v1813, %v1817
        %v1822 = vand.u32 2147483647, %v1797
        %vm1823 = vcmp.eq.f32.partialorder %v1822, 8.507059e+37
        %v1824 = vand.u32 %v1797, 2147483648
        %v1825 = vor.u32 1.1754944e-38, %v1824
        %v1826 = vsel %vm1823, %v1825, %v1821
        %v1827 = vmul.f32 %v1789, %v1826
        %v1828 = vmul.f32 %v436, %v1737
        %v1829 = vsel %vm452, %v1828, 0.0
        %1830 = vadd.xlane.f32.xlu0 %v1829
        %v1831 = vpop.xlane.xlu0 %1830
        %v1832 = vmul.f32 %v1737, %v1737
        %v1833 = vsel %vm452, %v1832, 0.0
        %1834 = vadd.xlane.f32.xlu0 %v1833
        %v1835 = vpop.xlane.xlu0 %1834
        %v1836 = vrsqrt.pop %v1835
        %v1837 = vmul.f32 %v1836, %v1835
        %v1838 = vmul.f32 %v1837, %v1836
        %v1839 = vmul.f32 0.5, %v1838
        %v1840 = vsub.f32 1.5, %v1839
        %v1841 = vmul.f32 %v1836, %v1840
        %v1842 = vmul.f32 %v1835, %v1841
        %vm1843 = vcmp.eq.f32.partialorder %v1835, inf
        %v1844 = vsel %vm1843, %v1835, %v1842
        %vm1845 = vcmp.eq.f32.partialorder %v1835, 0.0
        %v1846 = vand.u32 %v1835, 2147483648
        %v1847 = vsel %vm1845, %v1846, %v1844
        %v1848 = vmax.f32 %v1847, 0.0001
        %v1849 = vrcp.pop %v1848
        %v1850 = vmul.f32 %v1848, %v1849
        %v1851 = vsub.f32 1.0, %v1850
        %v1852 = vmul.f32 %v1849, %v1851
        %v1853 = vadd.f32 %v1849, %v1852
        %vm1854 = vweird.f32 %v1848
        %vm1855 = vweird.f32 %v1849
        %vm1856 = vmor %vm1854, %vm1855
        %v1857 = vsel %vm1856, %v1849, %v1853
        %v1858 = vand.u32 2147483647, %v1848
        %vm1859 = vcmp.eq.f32.partialorder %v1858, 8.507059e+37
        %v1860 = vand.u32 %v1848, 2147483648
        %v1861 = vor.u32 1.1754944e-38, %v1860
        %v1862 = vsel %vm1859, %v1861, %v1857
        %v1863 = vmul.f32 1.0, %v1862
        %v1864 = vmul.f32 %v573, %v1863
        %v1865 = vmul.f32 %v1831, %v1864
        %v1867 = vsel %vm452, %v1828, 0
        %1869 = vmatpush.xpose.msra.mxu0 0.0
        %1870 = vmatpush.xpose.msra.mxu0 0.0
        %1871 = vmatpush.xpose.msra.mxu0 0.0
        %1872 = vmatpush.xpose.msra.mxu0 0.0
        %1873 = vmatpush.xpose.msra.mxu0 0.0
        %1874 = vmatpush.xpose.msra.mxu0 0.0
        %1875 = vmatpush.xpose.msra.mxu0 0.0
        %1876 = vmatpush.xpose.msra.mxu0 0.0
        %1877 = vmatpush.xpose.msra.mxu0 0.0
        %1878 = vmatpush.xpose.msra.mxu0 0.0
        %1879 = vmatpush.xpose.msra.mxu0 0.0
        %1880 = vmatpush.xpose.msra.mxu0 0.0
        %1881 = vmatpush.xpose.msra.mxu0 0.0
        %1882 = vmatpush.xpose.msra.mxu0 0.0
        %1883 = vmatpush.xpose.msra.mxu0 0.0
        %1884 = vmatpush.xpose.msra.mxu0 %v463
        %1885 = vmatmul.f32.gmra.mxu0 %v1867
        %v1886 = vpop.f32.mrf.mxu0
        %v1887 = vadd.f32 0.0, %v1886
        %1888 = vdwg.mxu0
        %v1890 = vsel %vm452, %v1832, 0
        %1892 = vmatpush.xpose.msra.mxu0 0.0
        %1893 = vmatpush.xpose.msra.mxu0 0.0
        %1894 = vmatpush.xpose.msra.mxu0 0.0
        %1895 = vmatpush.xpose.msra.mxu0 0.0
        %1896 = vmatpush.xpose.msra.mxu0 0.0
        %1897 = vmatpush.xpose.msra.mxu0 0.0
        %1898 = vmatpush.xpose.msra.mxu0 0.0
        %1899 = vmatpush.xpose.msra.mxu0 0.0
        %1900 = vmatpush.xpose.msra.mxu0 0.0
        %1901 = vmatpush.xpose.msra.mxu0 0.0
        %1902 = vmatpush.xpose.msra.mxu0 0.0
        %1903 = vmatpush.xpose.msra.mxu0 0.0
        %1904 = vmatpush.xpose.msra.mxu0 0.0
        %1905 = vmatpush.xpose.msra.mxu0 0.0
        %1906 = vmatpush.xpose.msra.mxu0 0.0
        %1907 = vmatpush.xpose.msra.mxu0 %v463
        %1908 = vmatmul.f32.gmra.mxu0 %v1890
        %v1909 = vpop.f32.mrf.mxu0
        %v1910 = vadd.f32 0.0, %v1909
        %1911 = vdwg.mxu0
        %v1912 = vrsqrt.pop %v1910
        %v1913 = vmul.f32 %v1912, %v1910
        %v1914 = vmul.f32 %v1913, %v1912
        %v1915 = vmul.f32 0.5, %v1914
        %v1916 = vsub.f32 1.5, %v1915
        %v1917 = vmul.f32 %v1912, %v1916
        %v1918 = vmul.f32 %v1910, %v1917
        %vm1919 = vcmp.eq.f32.partialorder %v1910, inf
        %v1920 = vsel %vm1919, %v1910, %v1918
        %vm1921 = vcmp.eq.f32.partialorder %v1910, 0.0
        %v1922 = vand.u32 %v1910, 2147483648
        %v1923 = vsel %vm1921, %v1922, %v1920
        %v1924 = vmax.f32 %v1923, 0.0001
        %v1925 = vrcp.pop %v1924
        %v1926 = vmul.f32 %v1924, %v1925
        %v1927 = vsub.f32 1.0, %v1926
        %v1928 = vmul.f32 %v1925, %v1927
        %v1929 = vadd.f32 %v1925, %v1928
        %vm1930 = vweird.f32 %v1924
        %vm1931 = vweird.f32 %v1925
        %vm1932 = vmor %vm1930, %vm1931
        %v1933 = vsel %vm1932, %v1925, %v1929
        %v1934 = vand.u32 2147483647, %v1924
        %vm1935 = vcmp.eq.f32.partialorder %v1934, 8.507059e+37
        %v1936 = vand.u32 %v1924, 2147483648
        %v1937 = vor.u32 1.1754944e-38, %v1936
        %v1938 = vsel %vm1935, %v1937, %v1933
        %v1939 = vmul.f32 1.0, %v1938
        %1941 = vrot.lane.b32.xlu0 %v1939, 16
        %v1942 = vpop.permute.xlu0 %1941
        %v1944 = vmul.f32 %v573, %v1942
        %1946 = vrot.lane.b32.xlu0 %v1944, 112
        %v1947 = vpop.permute.xlu0 %1946
        %v1949 = vmul.f32 %v1887, %v1947
        %v1950 = vmul.f32 %v449, %v1812
        %v1951 = vmul.f32 %v450, %v1827
        %v1952 = vsel %vm452, %v1950, 0.0
        %1953 = vadd.xlane.f32.xlu0 %v1952
        %v1954 = vpop.xlane.xlu0 %1953
        %v1955 = vsel %vm452, %v1951, 0.0
        %1956 = vadd.xlane.f32.xlu0 %v1955
        %v1957 = vpop.xlane.xlu0 %1956
        %v1958 = vmul.f32 %v1812, %v1812
        %v1959 = vmul.f32 %v1827, %v1827
        %v1960 = vsel %vm452, %v1958, 0.0
        %1961 = vadd.xlane.f32.xlu0 %v1960
        %v1962 = vpop.xlane.xlu0 %1961
        %v1963 = vsel %vm452, %v1959, 0.0
        %1964 = vadd.xlane.f32.xlu0 %v1963
        %v1965 = vpop.xlane.xlu0 %1964
        %v1966 = vrsqrt.pop %v1962
        %v1967 = vmul.f32 %v1966, %v1962
        %v1968 = vmul.f32 %v1967, %v1966
        %v1969 = vmul.f32 0.5, %v1968
        %v1970 = vsub.f32 1.5, %v1969
        %v1971 = vmul.f32 %v1966, %v1970
        %v1972 = vmul.f32 %v1962, %v1971
        %vm1973 = vcmp.eq.f32.partialorder %v1962, inf
        %v1974 = vsel %vm1973, %v1962, %v1972
        %vm1975 = vcmp.eq.f32.partialorder %v1962, 0.0
        %v1976 = vand.u32 %v1962, 2147483648
        %v1977 = vsel %vm1975, %v1976, %v1974
        %v1978 = vrsqrt.pop %v1965
        %v1979 = vmul.f32 %v1978, %v1965
        %v1980 = vmul.f32 %v1979, %v1978
        %v1981 = vmul.f32 0.5, %v1980
        %v1982 = vsub.f32 1.5, %v1981
        %v1983 = vmul.f32 %v1978, %v1982
        %v1984 = vmul.f32 %v1965, %v1983
        %vm1985 = vcmp.eq.f32.partialorder %v1965, inf
        %v1986 = vsel %vm1985, %v1965, %v1984
        %vm1987 = vcmp.eq.f32.partialorder %v1965, 0.0
        %v1988 = vand.u32 %v1965, 2147483648
        %v1989 = vsel %vm1987, %v1988, %v1986
        %v1990 = vmax.f32 %v1977, 0.0001
        %v1991 = vmax.f32 %v1989, 0.0001
        %v1992 = vrcp.pop %v1990
        %v1993 = vmul.f32 %v1990, %v1992
        %v1994 = vsub.f32 1.0, %v1993
        %v1995 = vmul.f32 %v1992, %v1994
        %v1996 = vadd.f32 %v1992, %v1995
        %vm1997 = vweird.f32 %v1990
        %vm1998 = vweird.f32 %v1992
        %vm1999 = vmor %vm1997, %vm1998
        %v2000 = vsel %vm1999, %v1992, %v1996
        %v2001 = vand.u32 2147483647, %v1990
        %vm2002 = vcmp.eq.f32.partialorder %v2001, 8.507059e+37
        %v2003 = vand.u32 %v1990, 2147483648
        %v2004 = vor.u32 1.1754944e-38, %v2003
        %v2005 = vsel %vm2002, %v2004, %v2000
        %v2006 = vmul.f32 1.0, %v2005
        %v2007 = vrcp.pop %v1991
        %v2008 = vmul.f32 %v1991, %v2007
        %v2009 = vsub.f32 1.0, %v2008
        %v2010 = vmul.f32 %v2007, %v2009
        %v2011 = vadd.f32 %v2007, %v2010
        %vm2012 = vweird.f32 %v1991
        %vm2013 = vweird.f32 %v2007
        %vm2014 = vmor %vm2012, %vm2013
        %v2015 = vsel %vm2014, %v2007, %v2011
        %v2016 = vand.u32 2147483647, %v1991
        %vm2017 = vcmp.eq.f32.partialorder %v2016, 8.507059e+37
        %v2018 = vand.u32 %v1991, 2147483648
        %v2019 = vor.u32 1.1754944e-38, %v2018
        %v2020 = vsel %vm2017, %v2019, %v2015
        %v2021 = vmul.f32 1.0, %v2020
        %v2022 = vmul.f32 %v596, %v2006
        %v2023 = vmul.f32 %v611, %v2021
        %v2024 = vmul.f32 %v1954, %v2022
        %v2025 = vmul.f32 %v1957, %v2023
        %v2027 = vsel %vm452, %v1950, 0
        %v2030 = vsel %vm452, %v1951, 0
        %2032 = vmatpush.xpose.msra.mxu0 0.0
        %2033 = vmatpush.xpose.msra.mxu0 0.0
        %2034 = vmatpush.xpose.msra.mxu0 0.0
        %2035 = vmatpush.xpose.msra.mxu0 0.0
        %2036 = vmatpush.xpose.msra.mxu0 0.0
        %2037 = vmatpush.xpose.msra.mxu0 0.0
        %2038 = vmatpush.xpose.msra.mxu0 0.0
        %2039 = vmatpush.xpose.msra.mxu0 0.0
        %2040 = vmatpush.xpose.msra.mxu0 0.0
        %2041 = vmatpush.xpose.msra.mxu0 0.0
        %2042 = vmatpush.xpose.msra.mxu0 0.0
        %2043 = vmatpush.xpose.msra.mxu0 0.0
        %2044 = vmatpush.xpose.msra.mxu0 0.0
        %2045 = vmatpush.xpose.msra.mxu0 0.0
        %2046 = vmatpush.xpose.msra.mxu0 0.0
        %2047 = vmatpush.xpose.msra.mxu0 %v463
        %2048 = vmatmul.f32.gmra.mxu0 %v2027
        %v2049 = vpop.f32.mrf.mxu0
        %v2050 = vadd.f32 0.0, %v2049
        %2051 = vmatmul.f32.gmra.mxu0 %v2030
        %v2052 = vpop.f32.mrf.mxu0
        %v2053 = vadd.f32 0.0, %v2052
        %2054 = vdwg.mxu0
        %v2056 = vsel %vm452, %v1958, 0
        %v2059 = vsel %vm452, %v1959, 0
        %2061 = vmatpush.xpose.msra.mxu0 0.0
        %2062 = vmatpush.xpose.msra.mxu0 0.0
        %2063 = vmatpush.xpose.msra.mxu0 0.0
        %2064 = vmatpush.xpose.msra.mxu0 0.0
        %2065 = vmatpush.xpose.msra.mxu0 0.0
        %2066 = vmatpush.xpose.msra.mxu0 0.0
        %2067 = vmatpush.xpose.msra.mxu0 0.0
        %2068 = vmatpush.xpose.msra.mxu0 0.0
        %2069 = vmatpush.xpose.msra.mxu0 0.0
        %2070 = vmatpush.xpose.msra.mxu0 0.0
        %2071 = vmatpush.xpose.msra.mxu0 0.0
        %2072 = vmatpush.xpose.msra.mxu0 0.0
        %2073 = vmatpush.xpose.msra.mxu0 0.0
        %2074 = vmatpush.xpose.msra.mxu0 0.0
        %2075 = vmatpush.xpose.msra.mxu0 0.0
        %2076 = vmatpush.xpose.msra.mxu0 %v463
        %2077 = vmatmul.f32.gmra.mxu0 %v2056
        %v2078 = vpop.f32.mrf.mxu0
        %v2079 = vadd.f32 0.0, %v2078
        %2080 = vmatmul.f32.gmra.mxu0 %v2059
        %v2081 = vpop.f32.mrf.mxu0
        %v2082 = vadd.f32 0.0, %v2081
        %2083 = vdwg.mxu0
        %v2084 = vrsqrt.pop %v2079
        %v2085 = vmul.f32 %v2084, %v2079
        %v2086 = vmul.f32 %v2085, %v2084
        %v2087 = vmul.f32 0.5, %v2086
        %v2088 = vsub.f32 1.5, %v2087
        %v2089 = vmul.f32 %v2084, %v2088
        %v2090 = vmul.f32 %v2079, %v2089
        %vm2091 = vcmp.eq.f32.partialorder %v2079, inf
        %v2092 = vsel %vm2091, %v2079, %v2090
        %vm2093 = vcmp.eq.f32.partialorder %v2079, 0.0
        %v2094 = vand.u32 %v2079, 2147483648
        %v2095 = vsel %vm2093, %v2094, %v2092
        %v2096 = vrsqrt.pop %v2082
        %v2097 = vmul.f32 %v2096, %v2082
        %v2098 = vmul.f32 %v2097, %v2096
        %v2099 = vmul.f32 0.5, %v2098
        %v2100 = vsub.f32 1.5, %v2099
        %v2101 = vmul.f32 %v2096, %v2100
        %v2102 = vmul.f32 %v2082, %v2101
        %vm2103 = vcmp.eq.f32.partialorder %v2082, inf
        %v2104 = vsel %vm2103, %v2082, %v2102
        %vm2105 = vcmp.eq.f32.partialorder %v2082, 0.0
        %v2106 = vand.u32 %v2082, 2147483648
        %v2107 = vsel %vm2105, %v2106, %v2104
        %v2108 = vmax.f32 %v2095, 0.0001
        %v2109 = vmax.f32 %v2107, 0.0001
        %v2110 = vrcp.pop %v2108
        %v2111 = vmul.f32 %v2108, %v2110
        %v2112 = vsub.f32 1.0, %v2111
        %v2113 = vmul.f32 %v2110, %v2112
        %v2114 = vadd.f32 %v2110, %v2113
        %vm2115 = vweird.f32 %v2108
        %vm2116 = vweird.f32 %v2110
        %vm2117 = vmor %vm2115, %vm2116
        %v2118 = vsel %vm2117, %v2110, %v2114
        %v2119 = vand.u32 2147483647, %v2108
        %vm2120 = vcmp.eq.f32.partialorder %v2119, 8.507059e+37
        %v2121 = vand.u32 %v2108, 2147483648
        %v2122 = vor.u32 1.1754944e-38, %v2121
        %v2123 = vsel %vm2120, %v2122, %v2118
        %v2124 = vmul.f32 1.0, %v2123
        %v2125 = vrcp.pop %v2109
        %v2126 = vmul.f32 %v2109, %v2125
        %v2127 = vsub.f32 1.0, %v2126
        %v2128 = vmul.f32 %v2125, %v2127
        %v2129 = vadd.f32 %v2125, %v2128
        %vm2130 = vweird.f32 %v2109
        %vm2131 = vweird.f32 %v2125
        %vm2132 = vmor %vm2130, %vm2131
        %v2133 = vsel %vm2132, %v2125, %v2129
        %v2134 = vand.u32 2147483647, %v2109
        %vm2135 = vcmp.eq.f32.partialorder %v2134, 8.507059e+37
        %v2136 = vand.u32 %v2109, 2147483648
        %v2137 = vor.u32 1.1754944e-38, %v2136
        %v2138 = vsel %vm2135, %v2137, %v2133
        %v2139 = vmul.f32 1.0, %v2138
        %2142 = vrot.lane.b32.xlu0 %v2124, 16
        %v2143 = vpop.permute.xlu0 %2142
        %2144 = vrot.lane.b32.xlu0 %v2139, 16
        %v2145 = vpop.permute.xlu0 %2144
        %v2148 = vmul.f32 %v596, %v2143
        %v2149 = vmul.f32 %v611, %v2145
        %2152 = vrot.lane.b32.xlu0 %v2148, 112
        %v2153 = vpop.permute.xlu0 %2152
        %2154 = vrot.lane.b32.xlu0 %v2149, 112
        %v2155 = vpop.permute.xlu0 %2154
        %v2158 = vmul.f32 %v2050, %v2153
        %v2159 = vmul.f32 %v2053, %v2155
        %v2160 = vperm.slane %v651, 0
        %v2161 = vlaneseq
        %v2162 = vshrl.u32 %v2161, 7
        %2164 = vset.pattern.permute.xlu0 %v2162
        %2165 = vperm.xlu0 %2164, %v2160
        %v2166 = vpop.permute.xlu0 %2165
        %v2167 = vlaneseq
        %v2168 = vshrl.u32 %v2167, 7
        %v2169 = vadd.s32 %v2168, 8
        %2170 = vset.pattern.permute.xlu0 %v2169
        %2171 = vperm.xlu0 %2170, %v2160
        %v2172 = vpop.permute.xlu0 %2171
        %v2173 = vperm.slane %v651, 1
        %v2174 = vlaneseq
        %v2175 = vshrl.u32 %v2174, 7
        %2177 = vset.pattern.permute.xlu0 %v2175
        %2178 = vperm.xlu0 %2177, %v2173
        %v2179 = vpop.permute.xlu0 %2178
        %v2180 = vlaneseq
        %v2181 = vshrl.u32 %v2180, 7
        %v2182 = vadd.s32 %v2181, 8
        %2183 = vset.pattern.permute.xlu0 %v2182
        %2184 = vperm.xlu0 %2183, %v2173
        %v2185 = vpop.permute.xlu0 %2184
        %v2186 = vperm.slane %v651, 2
        %v2187 = vlaneseq
        %v2188 = vshrl.u32 %v2187, 7
        %2190 = vset.pattern.permute.xlu0 %v2188
        %2191 = vperm.xlu0 %2190, %v2186
        %v2192 = vpop.permute.xlu0 %2191
        %v2193 = vlaneseq
        %v2194 = vshrl.u32 %v2193, 7
        %v2195 = vadd.s32 %v2194, 8
        %2196 = vset.pattern.permute.xlu0 %v2195
        %2197 = vperm.xlu0 %2196, %v2186
        %v2198 = vpop.permute.xlu0 %2197
        %v2199 = vperm.slane %v651, 3
        %v2200 = vlaneseq
        %v2201 = vshrl.u32 %v2200, 7
        %2203 = vset.pattern.permute.xlu0 %v2201
        %2204 = vperm.xlu0 %2203, %v2199
        %v2205 = vpop.permute.xlu0 %2204
        %v2206 = vlaneseq
        %v2207 = vshrl.u32 %v2206, 7
        %v2208 = vadd.s32 %v2207, 8
        %2209 = vset.pattern.permute.xlu0 %v2208
        %2210 = vperm.xlu0 %2209, %v2199
        %v2211 = vpop.permute.xlu0 %2210
        %v2212 = vperm.slane %v651, 4
        %v2213 = vlaneseq
        %v2214 = vshrl.u32 %v2213, 7
        %2216 = vset.pattern.permute.xlu0 %v2214
        %2217 = vperm.xlu0 %2216, %v2212
        %v2218 = vpop.permute.xlu0 %2217
        %v2219 = vlaneseq
        %v2220 = vshrl.u32 %v2219, 7
        %v2221 = vadd.s32 %v2220, 8
        %2222 = vset.pattern.permute.xlu0 %v2221
        %2223 = vperm.xlu0 %2222, %v2212
        %v2224 = vpop.permute.xlu0 %2223
        %v2225 = vperm.slane %v651, 5
        %v2226 = vlaneseq
        %v2227 = vshrl.u32 %v2226, 7
        %2229 = vset.pattern.permute.xlu0 %v2227
        %2230 = vperm.xlu0 %2229, %v2225
        %v2231 = vpop.permute.xlu0 %2230
        %v2232 = vlaneseq
        %v2233 = vshrl.u32 %v2232, 7
        %v2234 = vadd.s32 %v2233, 8
        %2235 = vset.pattern.permute.xlu0 %v2234
        %2236 = vperm.xlu0 %2235, %v2225
        %v2237 = vpop.permute.xlu0 %2236
        %v2238 = vperm.slane %v651, 6
        %v2239 = vlaneseq
        %v2240 = vshrl.u32 %v2239, 7
        %2242 = vset.pattern.permute.xlu0 %v2240
        %2243 = vperm.xlu0 %2242, %v2238
        %v2244 = vpop.permute.xlu0 %2243
        %v2245 = vlaneseq
        %v2246 = vshrl.u32 %v2245, 7
        %v2247 = vadd.s32 %v2246, 8
        %2248 = vset.pattern.permute.xlu0 %v2247
        %2249 = vperm.xlu0 %2248, %v2238
        %v2250 = vpop.permute.xlu0 %2249
        %v2251 = vperm.slane %v651, 7
        %v2252 = vlaneseq
        %v2253 = vshrl.u32 %v2252, 7
        %2255 = vset.pattern.permute.xlu0 %v2253
        %2256 = vperm.xlu0 %2255, %v2251
        %v2257 = vpop.permute.xlu0 %2256
        %v2258 = vlaneseq
        %v2259 = vshrl.u32 %v2258, 7
        %v2260 = vadd.s32 %v2259, 8
        %2261 = vset.pattern.permute.xlu0 %v2260
        %2262 = vperm.xlu0 %2261, %v2251
        %v2263 = vpop.permute.xlu0 %2262
        %v2264 = vmul.f32 %v2166, %v449
        %v2265 = vmul.f32 %v2172, %v450
        %v2266 = vmul.f32 %v2179, %v449
        %v2267 = vmul.f32 %v2185, %v450
        %v2268 = vmul.f32 %v2192, %v449
        %v2269 = vmul.f32 %v2198, %v450
        %v2270 = vmul.f32 %v2205, %v449
        %v2271 = vmul.f32 %v2211, %v450
        %v2272 = vmul.f32 %v2218, %v449
        %v2273 = vmul.f32 %v2224, %v450
        %v2274 = vmul.f32 %v2231, %v449
        %v2275 = vmul.f32 %v2237, %v450
        %v2276 = vmul.f32 %v2244, %v449
        %v2277 = vmul.f32 %v2250, %v450
        %v2278 = vmul.f32 %v2257, %v449
        %v2279 = vmul.f32 %v2263, %v450
        %v2280 = vsel %vm387, 1, 0
        %v2281 = vsel %vm388, 1, 0
        %2282 = vset.pattern.permute.xlu0 0
        %2283 = vperm.xlu0 %2282, %v2280
        %v2284 = vpop.permute.xlu0 %2283
        %2285 = vset.pattern.permute.xlu0 0
        %2286 = vperm.xlu0 %2285, %v2281
        %v2287 = vpop.permute.xlu0 %2286
        %vm2288 = vcmp.eq.s32.totalorder %v2284, 1
        %vm2289 = vcmp.eq.s32.totalorder %v2287, 1
        %v2290 = vsel %vm2288, %v2264, -3.4028235e+38
        %v2291 = vsel %vm2289, %v2265, -3.4028235e+38
        %v2292 = vsel %vm2288, %v2266, -3.4028235e+38
        %v2293 = vsel %vm2289, %v2267, -3.4028235e+38
        %v2294 = vsel %vm2288, %v2268, -3.4028235e+38
        %v2295 = vsel %vm2289, %v2269, -3.4028235e+38
        %v2296 = vsel %vm2288, %v2270, -3.4028235e+38
        %v2297 = vsel %vm2289, %v2271, -3.4028235e+38
        %v2298 = vsel %vm2288, %v2272, -3.4028235e+38
        %v2299 = vsel %vm2289, %v2273, -3.4028235e+38
        %v2300 = vsel %vm2288, %v2274, -3.4028235e+38
        %v2301 = vsel %vm2289, %v2275, -3.4028235e+38
        %v2302 = vsel %vm2288, %v2276, -3.4028235e+38
        %v2303 = vsel %vm2289, %v2277, -3.4028235e+38
        %v2304 = vsel %vm2288, %v2278, -3.4028235e+38
        %v2305 = vsel %vm2289, %v2279, -3.4028235e+38
        %v2306 = vsel %vm452, %v2290, -inf
        %v2307 = vsel %vm452, %v2291, -inf
        %v2308 = vmax.f32 %v2306, %v2307
        %v2309 = vrot.slane %v2308, 4
        %v2310 = vmax.f32 %v2308, %v2309
        %v2311 = vrot.slane %v2310, 2
        %v2312 = vmax.f32 %v2310, %v2311
        %v2313 = vrot.slane %v2312, 1
        %v2314 = vmax.f32 %v2312, %v2313
        %v2315 = vsel %vm452, %v2292, -inf
        %v2316 = vsel %vm452, %v2293, -inf
        %v2317 = vmax.f32 %v2315, %v2316
        %v2318 = vrot.slane %v2317, 4
        %v2319 = vmax.f32 %v2317, %v2318
        %v2320 = vrot.slane %v2319, 2
        %v2321 = vmax.f32 %v2319, %v2320
        %v2322 = vrot.slane %v2321, 1
        %v2323 = vmax.f32 %v2321, %v2322
        %v2324 = vsel %vm452, %v2294, -inf
        %v2325 = vsel %vm452, %v2295, -inf
        %v2326 = vmax.f32 %v2324, %v2325
        %v2327 = vrot.slane %v2326, 4
        %v2328 = vmax.f32 %v2326, %v2327
        %v2329 = vrot.slane %v2328, 2
        %v2330 = vmax.f32 %v2328, %v2329
        %v2331 = vrot.slane %v2330, 1
        %v2332 = vmax.f32 %v2330, %v2331
        %v2333 = vsel %vm452, %v2296, -inf
        %v2334 = vsel %vm452, %v2297, -inf
        %v2335 = vmax.f32 %v2333, %v2334
        %v2336 = vrot.slane %v2335, 4
        %v2337 = vmax.f32 %v2335, %v2336
        %v2338 = vrot.slane %v2337, 2
        %v2339 = vmax.f32 %v2337, %v2338
        %v2340 = vrot.slane %v2339, 1
        %v2341 = vmax.f32 %v2339, %v2340
        %v2342 = vsel %vm452, %v2298, -inf
        %v2343 = vsel %vm452, %v2299, -inf
        %v2344 = vmax.f32 %v2342, %v2343
        %v2345 = vrot.slane %v2344, 4
        %v2346 = vmax.f32 %v2344, %v2345
        %v2347 = vrot.slane %v2346, 2
        %v2348 = vmax.f32 %v2346, %v2347
        %v2349 = vrot.slane %v2348, 1
        %v2350 = vmax.f32 %v2348, %v2349
        %v2351 = vsel %vm452, %v2300, -inf
        %v2352 = vsel %vm452, %v2301, -inf
        %v2353 = vmax.f32 %v2351, %v2352
        %v2354 = vrot.slane %v2353, 4
        %v2355 = vmax.f32 %v2353, %v2354
        %v2356 = vrot.slane %v2355, 2
        %v2357 = vmax.f32 %v2355, %v2356
        %v2358 = vrot.slane %v2357, 1
        %v2359 = vmax.f32 %v2357, %v2358
        %v2360 = vsel %vm452, %v2302, -inf
        %v2361 = vsel %vm452, %v2303, -inf
        %v2362 = vmax.f32 %v2360, %v2361
        %v2363 = vrot.slane %v2362, 4
        %v2364 = vmax.f32 %v2362, %v2363
        %v2365 = vrot.slane %v2364, 2
        %v2366 = vmax.f32 %v2364, %v2365
        %v2367 = vrot.slane %v2366, 1
        %v2368 = vmax.f32 %v2366, %v2367
        %v2369 = vsel %vm452, %v2304, -inf
        %v2370 = vsel %vm452, %v2305, -inf
        %v2371 = vmax.f32 %v2369, %v2370
        %v2372 = vrot.slane %v2371, 4
        %v2373 = vmax.f32 %v2371, %v2372
        %v2374 = vrot.slane %v2373, 2
        %v2375 = vmax.f32 %v2373, %v2374
        %v2376 = vrot.slane %v2375, 1
        %v2377 = vmax.f32 %v2375, %v2376
        %v2378 = vmax.f32 %v2314, -3.4028235e+38
        %v2379 = vmax.f32 %v2323, -3.4028235e+38
        %v2380 = vmax.f32 %v2332, -3.4028235e+38
        %v2381 = vmax.f32 %v2341, -3.4028235e+38
        %v2382 = vmax.f32 %v2350, -3.4028235e+38
        %v2383 = vmax.f32 %v2359, -3.4028235e+38
        %v2384 = vmax.f32 %v2368, -3.4028235e+38
        %v2385 = vmax.f32 %v2377, -3.4028235e+38
        %v2386 = vmul.f32 %v2166, %v1298
        %v2387 = vmul.f32 %v2172, %v1298
        %v2388 = vmul.f32 %v2179, %v1299
        %v2389 = vmul.f32 %v2185, %v1299
        %v2390 = vmul.f32 %v2192, %v1300
        %v2391 = vmul.f32 %v2198, %v1300
        %v2392 = vmul.f32 %v2205, %v1301
        %v2393 = vmul.f32 %v2211, %v1301
        %v2394 = vmul.f32 %v2218, %v1302
        %v2395 = vmul.f32 %v2224, %v1302
        %v2396 = vmul.f32 %v2231, %v1303
        %v2397 = vmul.f32 %v2237, %v1303
        %v2398 = vmul.f32 %v2244, %v1304
        %v2399 = vmul.f32 %v2250, %v1304
        %v2400 = vmul.f32 %v2257, %v1305
        %v2401 = vmul.f32 %v2263, %v1305
        %v2402 = vsel %vm1584, %v2386, -3.4028235e+38
        %v2403 = vsel %vm1584, %v2387, -3.4028235e+38
        %v2404 = vsel %vm1585, %v2388, -3.4028235e+38
        %v2405 = vsel %vm1585, %v2389, -3.4028235e+38
        %v2406 = vsel %vm1586, %v2390, -3.4028235e+38
        %v2407 = vsel %vm1586, %v2391, -3.4028235e+38
        %v2408 = vsel %vm1587, %v2392, -3.4028235e+38
        %v2409 = vsel %vm1587, %v2393, -3.4028235e+38
        %v2410 = vsel %vm1588, %v2394, -3.4028235e+38
        %v2411 = vsel %vm1588, %v2395, -3.4028235e+38
        %v2412 = vsel %vm1589, %v2396, -3.4028235e+38
        %v2413 = vsel %vm1589, %v2397, -3.4028235e+38
        %v2414 = vsel %vm1590, %v2398, -3.4028235e+38
        %v2415 = vsel %vm1590, %v2399, -3.4028235e+38
        %v2416 = vsel %vm1591, %v2400, -3.4028235e+38
        %v2417 = vsel %vm1591, %v2401, -3.4028235e+38
        %v2418 = vsel %vm452, %v2402, -inf
        %v2419 = vsel %vm452, %v2404, -inf
        %v2420 = vsel %vm452, %v2406, -inf
        %v2421 = vmax.f32 %v2418, %v2420
        %v2422 = vsel %vm452, %v2408, -inf
        %v2423 = vmax.f32 %v2419, %v2422
        %v2424 = vsel %vm452, %v2410, -inf
        %v2425 = vmax.f32 %v2421, %v2424
        %v2426 = vsel %vm452, %v2412, -inf
        %v2427 = vmax.f32 %v2423, %v2426
        %v2428 = vsel %vm452, %v2414, -inf
        %v2429 = vmax.f32 %v2425, %v2428
        %v2430 = vsel %vm452, %v2416, -inf
        %v2431 = vmax.f32 %v2427, %v2430
        %v2432 = vmax.f32 %v2429, %v2431
        %v2433 = vsel %vm452, %v2403, -inf
        %v2434 = vsel %vm452, %v2405, -inf
        %v2435 = vsel %vm452, %v2407, -inf
        %v2436 = vmax.f32 %v2433, %v2435
        %v2437 = vsel %vm452, %v2409, -inf
        %v2438 = vmax.f32 %v2434, %v2437
        %v2439 = vsel %vm452, %v2411, -inf
        %v2440 = vmax.f32 %v2436, %v2439
        %v2441 = vsel %vm452, %v2413, -inf
        %v2442 = vmax.f32 %v2438, %v2441
        %v2443 = vsel %vm452, %v2415, -inf
        %v2444 = vmax.f32 %v2440, %v2443
        %v2445 = vsel %vm452, %v2417, -inf
        %v2446 = vmax.f32 %v2442, %v2445
        %v2447 = vmax.f32 %v2444, %v2446
        %v2448 = vmax.f32 %v2432, -3.4028235e+38
        %v2449 = vmax.f32 %v2447, -3.4028235e+38
        %vm2458 = vcmask 1041409
        %v2459 = vsel %vm2458, %v2379, %v2378
        %vm2460 = vcmask 1042434
        %v2461 = vsel %vm2460, %v2380, %v2459
        %vm2462 = vcmask 1043459
        %v2463 = vsel %vm2462, %v2381, %v2461
        %vm2464 = vcmask 1044484
        %v2465 = vsel %vm2464, %v2382, %v2463
        %vm2466 = vcmask 1045509
        %v2467 = vsel %vm2466, %v2383, %v2465
        %vm2468 = vcmask 1046534
        %v2469 = vsel %vm2468, %v2384, %v2467
        %vm2470 = vcmask 1047559
        %v2471 = vsel %vm2470, %v2385, %v2469
        %v2473 = vmul.f32 %v436, %v2471
        %v2474 = vsel %vm452, %v2473, 0.0
        %2475 = vadd.xlane.f32.xlu0 %v2474
        %v2476 = vpop.xlane.xlu0 %2475
        %v2477 = vmul.f32 %v2378, %v2378
        %v2478 = vmul.f32 %v2379, %v2379
        %v2479 = vmul.f32 %v2380, %v2380
        %v2480 = vmul.f32 %v2381, %v2381
        %v2481 = vmul.f32 %v2382, %v2382
        %v2482 = vmul.f32 %v2383, %v2383
        %v2483 = vmul.f32 %v2384, %v2384
        %v2484 = vmul.f32 %v2385, %v2385
        %v2493 = vsel %vm2458, %v2478, %v2477
        %v2494 = vsel %vm2460, %v2479, %v2493
        %v2495 = vsel %vm2462, %v2480, %v2494
        %v2496 = vsel %vm2464, %v2481, %v2495
        %v2497 = vsel %vm2466, %v2482, %v2496
        %v2498 = vsel %vm2468, %v2483, %v2497
        %v2499 = vsel %vm2470, %v2484, %v2498
        %v2501 = vsel %vm452, %v2499, 0.0
        %2502 = vadd.xlane.f32.xlu0 %v2501
        %v2503 = vpop.xlane.xlu0 %2502
        %v2504 = vrsqrt.pop %v2503
        %v2505 = vmul.f32 %v2504, %v2503
        %v2506 = vmul.f32 %v2505, %v2504
        %v2507 = vmul.f32 0.5, %v2506
        %v2508 = vsub.f32 1.5, %v2507
        %v2509 = vmul.f32 %v2504, %v2508
        %v2510 = vmul.f32 %v2503, %v2509
        %vm2511 = vcmp.eq.f32.partialorder %v2503, inf
        %v2512 = vsel %vm2511, %v2503, %v2510
        %vm2513 = vcmp.eq.f32.partialorder %v2503, 0.0
        %v2514 = vand.u32 %v2503, 2147483648
        %v2515 = vsel %vm2513, %v2514, %v2512
        %v2516 = vmax.f32 %v2515, 0.0001
        %v2517 = vrcp.pop %v2516
        %v2518 = vmul.f32 %v2516, %v2517
        %v2519 = vsub.f32 1.0, %v2518
        %v2520 = vmul.f32 %v2517, %v2519
        %v2521 = vadd.f32 %v2517, %v2520
        %vm2522 = vweird.f32 %v2516
        %vm2523 = vweird.f32 %v2517
        %vm2524 = vmor %vm2522, %vm2523
        %v2525 = vsel %vm2524, %v2517, %v2521
        %v2526 = vand.u32 2147483647, %v2516
        %vm2527 = vcmp.eq.f32.partialorder %v2526, 8.507059e+37
        %v2528 = vand.u32 %v2516, 2147483648
        %v2529 = vor.u32 1.1754944e-38, %v2528
        %v2530 = vsel %vm2527, %v2529, %v2525
        %v2531 = vmul.f32 1.0, %v2530
        %v2532 = vmul.f32 %v573, %v2531
        %v2533 = vmul.f32 %v2476, %v2532
        %v2535 = vsel %vm452, %v2473, 0
        %2537 = vmatpush.xpose.msra.mxu0 0.0
        %2538 = vmatpush.xpose.msra.mxu0 0.0
        %2539 = vmatpush.xpose.msra.mxu0 0.0
        %2540 = vmatpush.xpose.msra.mxu0 0.0
        %2541 = vmatpush.xpose.msra.mxu0 0.0
        %2542 = vmatpush.xpose.msra.mxu0 0.0
        %2543 = vmatpush.xpose.msra.mxu0 0.0
        %2544 = vmatpush.xpose.msra.mxu0 0.0
        %2545 = vmatpush.xpose.msra.mxu0 0.0
        %2546 = vmatpush.xpose.msra.mxu0 0.0
        %2547 = vmatpush.xpose.msra.mxu0 0.0
        %2548 = vmatpush.xpose.msra.mxu0 0.0
        %2549 = vmatpush.xpose.msra.mxu0 0.0
        %2550 = vmatpush.xpose.msra.mxu0 0.0
        %2551 = vmatpush.xpose.msra.mxu0 0.0
        %2552 = vmatpush.xpose.msra.mxu0 %v466
        %2553 = vmatmul.f32.gmra.mxu0 %v2535
        %v2554 = vpop.f32.mrf.mxu0
        %v2555 = vadd.f32 0.0, %v2554
        %2556 = vdwg.mxu0
        %v2557 = vsel %vm452, %v2499, 0
        %2559 = vmatpush.xpose.msra.mxu0 0.0
        %2560 = vmatpush.xpose.msra.mxu0 0.0
        %2561 = vmatpush.xpose.msra.mxu0 0.0
        %2562 = vmatpush.xpose.msra.mxu0 0.0
        %2563 = vmatpush.xpose.msra.mxu0 0.0
        %2564 = vmatpush.xpose.msra.mxu0 0.0
        %2565 = vmatpush.xpose.msra.mxu0 0.0
        %2566 = vmatpush.xpose.msra.mxu0 0.0
        %2567 = vmatpush.xpose.msra.mxu0 0.0
        %2568 = vmatpush.xpose.msra.mxu0 0.0
        %2569 = vmatpush.xpose.msra.mxu0 0.0
        %2570 = vmatpush.xpose.msra.mxu0 0.0
        %2571 = vmatpush.xpose.msra.mxu0 0.0
        %2572 = vmatpush.xpose.msra.mxu0 0.0
        %2573 = vmatpush.xpose.msra.mxu0 0.0
        %2574 = vmatpush.xpose.msra.mxu0 %v466
        %2575 = vmatmul.f32.gmra.mxu0 %v2557
        %v2576 = vpop.f32.mrf.mxu0
        %v2577 = vadd.f32 0.0, %v2576
        %2578 = vdwg.mxu0
        %v2579 = vrsqrt.pop %v2577
        %v2580 = vmul.f32 %v2579, %v2577
        %v2581 = vmul.f32 %v2580, %v2579
        %v2582 = vmul.f32 0.5, %v2581
        %v2583 = vsub.f32 1.5, %v2582
        %v2584 = vmul.f32 %v2579, %v2583
        %v2585 = vmul.f32 %v2577, %v2584
        %vm2586 = vcmp.eq.f32.partialorder %v2577, inf
        %v2587 = vsel %vm2586, %v2577, %v2585
        %vm2588 = vcmp.eq.f32.partialorder %v2577, 0.0
        %v2589 = vand.u32 %v2577, 2147483648
        %v2590 = vsel %vm2588, %v2589, %v2587
        %v2591 = vmax.f32 %v2590, 0.0001
        %v2592 = vrcp.pop %v2591
        %v2593 = vmul.f32 %v2591, %v2592
        %v2594 = vsub.f32 1.0, %v2593
        %v2595 = vmul.f32 %v2592, %v2594
        %v2596 = vadd.f32 %v2592, %v2595
        %vm2597 = vweird.f32 %v2591
        %vm2598 = vweird.f32 %v2592
        %vm2599 = vmor %vm2597, %vm2598
        %v2600 = vsel %vm2599, %v2592, %v2596
        %v2601 = vand.u32 2147483647, %v2591
        %vm2602 = vcmp.eq.f32.partialorder %v2601, 8.507059e+37
        %v2603 = vand.u32 %v2591, 2147483648
        %v2604 = vor.u32 1.1754944e-38, %v2603
        %v2605 = vsel %vm2602, %v2604, %v2600
        %v2606 = vmul.f32 1.0, %v2605
        %2608 = vrot.lane.b32.xlu0 %v2606, 24
        %v2609 = vpop.permute.xlu0 %2608
        %v2611 = vmul.f32 %v573, %v2609
        %2613 = vrot.lane.b32.xlu0 %v2611, 104
        %v2614 = vpop.permute.xlu0 %2613
        %v2616 = vmul.f32 %v2555, %v2614
        %v2617 = vmul.f32 %v449, %v2448
        %v2618 = vmul.f32 %v450, %v2449
        %v2619 = vsel %vm452, %v2617, 0.0
        %2620 = vadd.xlane.f32.xlu0 %v2619
        %v2621 = vpop.xlane.xlu0 %2620
        %v2622 = vsel %vm452, %v2618, 0.0
        %2623 = vadd.xlane.f32.xlu0 %v2622
        %v2624 = vpop.xlane.xlu0 %2623
        %v2625 = vmul.f32 %v2448, %v2448
        %v2626 = vmul.f32 %v2449, %v2449
        %v2627 = vsel %vm452, %v2625, 0.0
        %2628 = vadd.xlane.f32.xlu0 %v2627
        %v2629 = vpop.xlane.xlu0 %2628
        %v2630 = vsel %vm452, %v2626, 0.0
        %2631 = vadd.xlane.f32.xlu0 %v2630
        %v2632 = vpop.xlane.xlu0 %2631
        %v2633 = vrsqrt.pop %v2629
        %v2634 = vmul.f32 %v2633, %v2629
        %v2635 = vmul.f32 %v2634, %v2633
        %v2636 = vmul.f32 0.5, %v2635
        %v2637 = vsub.f32 1.5, %v2636
        %v2638 = vmul.f32 %v2633, %v2637
        %v2639 = vmul.f32 %v2629, %v2638
        %vm2640 = vcmp.eq.f32.partialorder %v2629, inf
        %v2641 = vsel %vm2640, %v2629, %v2639
        %vm2642 = vcmp.eq.f32.partialorder %v2629, 0.0
        %v2643 = vand.u32 %v2629, 2147483648
        %v2644 = vsel %vm2642, %v2643, %v2641
        %v2645 = vrsqrt.pop %v2632
        %v2646 = vmul.f32 %v2645, %v2632
        %v2647 = vmul.f32 %v2646, %v2645
        %v2648 = vmul.f32 0.5, %v2647
        %v2649 = vsub.f32 1.5, %v2648
        %v2650 = vmul.f32 %v2645, %v2649
        %v2651 = vmul.f32 %v2632, %v2650
        %vm2652 = vcmp.eq.f32.partialorder %v2632, inf
        %v2653 = vsel %vm2652, %v2632, %v2651
        %vm2654 = vcmp.eq.f32.partialorder %v2632, 0.0
        %v2655 = vand.u32 %v2632, 2147483648
        %v2656 = vsel %vm2654, %v2655, %v2653
        %v2657 = vmax.f32 %v2644, 0.0001
        %v2658 = vmax.f32 %v2656, 0.0001
        %v2659 = vrcp.pop %v2657
        %v2660 = vmul.f32 %v2657, %v2659
        %v2661 = vsub.f32 1.0, %v2660
        %v2662 = vmul.f32 %v2659, %v2661
        %v2663 = vadd.f32 %v2659, %v2662
        %vm2664 = vweird.f32 %v2657
        %vm2665 = vweird.f32 %v2659
        %vm2666 = vmor %vm2664, %vm2665
        %v2667 = vsel %vm2666, %v2659, %v2663
        %v2668 = vand.u32 2147483647, %v2657
        %vm2669 = vcmp.eq.f32.partialorder %v2668, 8.507059e+37
        %v2670 = vand.u32 %v2657, 2147483648
        %v2671 = vor.u32 1.1754944e-38, %v2670
        %v2672 = vsel %vm2669, %v2671, %v2667
        %v2673 = vmul.f32 1.0, %v2672
        %v2674 = vrcp.pop %v2658
        %v2675 = vmul.f32 %v2658, %v2674
        %v2676 = vsub.f32 1.0, %v2675
        %v2677 = vmul.f32 %v2674, %v2676
        %v2678 = vadd.f32 %v2674, %v2677
        %vm2679 = vweird.f32 %v2658
        %vm2680 = vweird.f32 %v2674
        %vm2681 = vmor %vm2679, %vm2680
        %v2682 = vsel %vm2681, %v2674, %v2678
        %v2683 = vand.u32 2147483647, %v2658
        %vm2684 = vcmp.eq.f32.partialorder %v2683, 8.507059e+37
        %v2685 = vand.u32 %v2658, 2147483648
        %v2686 = vor.u32 1.1754944e-38, %v2685
        %v2687 = vsel %vm2684, %v2686, %v2682
        %v2688 = vmul.f32 1.0, %v2687
        %v2689 = vmul.f32 %v596, %v2673
        %v2690 = vmul.f32 %v611, %v2688
        %v2691 = vmul.f32 %v2621, %v2689
        %v2692 = vmul.f32 %v2624, %v2690
        %v2694 = vsel %vm452, %v2617, 0
        %v2697 = vsel %vm452, %v2618, 0
        %2699 = vmatpush.xpose.msra.mxu0 0.0
        %2700 = vmatpush.xpose.msra.mxu0 0.0
        %2701 = vmatpush.xpose.msra.mxu0 0.0
        %2702 = vmatpush.xpose.msra.mxu0 0.0
        %2703 = vmatpush.xpose.msra.mxu0 0.0
        %2704 = vmatpush.xpose.msra.mxu0 0.0
        %2705 = vmatpush.xpose.msra.mxu0 0.0
        %2706 = vmatpush.xpose.msra.mxu0 0.0
        %2707 = vmatpush.xpose.msra.mxu0 0.0
        %2708 = vmatpush.xpose.msra.mxu0 0.0
        %2709 = vmatpush.xpose.msra.mxu0 0.0
        %2710 = vmatpush.xpose.msra.mxu0 0.0
        %2711 = vmatpush.xpose.msra.mxu0 0.0
        %2712 = vmatpush.xpose.msra.mxu0 0.0
        %2713 = vmatpush.xpose.msra.mxu0 0.0
        %2714 = vmatpush.xpose.msra.mxu0 %v466
        %2715 = vmatmul.f32.gmra.mxu0 %v2694
        %v2716 = vpop.f32.mrf.mxu0
        %v2717 = vadd.f32 0.0, %v2716
        %2718 = vmatmul.f32.gmra.mxu0 %v2697
        %v2719 = vpop.f32.mrf.mxu0
        %v2720 = vadd.f32 0.0, %v2719
        %2721 = vdwg.mxu0
        %v2723 = vsel %vm452, %v2625, 0
        %v2726 = vsel %vm452, %v2626, 0
        %2728 = vmatpush.xpose.msra.mxu0 0.0
        %2729 = vmatpush.xpose.msra.mxu0 0.0
        %2730 = vmatpush.xpose.msra.mxu0 0.0
        %2731 = vmatpush.xpose.msra.mxu0 0.0
        %2732 = vmatpush.xpose.msra.mxu0 0.0
        %2733 = vmatpush.xpose.msra.mxu0 0.0
        %2734 = vmatpush.xpose.msra.mxu0 0.0
        %2735 = vmatpush.xpose.msra.mxu0 0.0
        %2736 = vmatpush.xpose.msra.mxu0 0.0
        %2737 = vmatpush.xpose.msra.mxu0 0.0
        %2738 = vmatpush.xpose.msra.mxu0 0.0
        %2739 = vmatpush.xpose.msra.mxu0 0.0
        %2740 = vmatpush.xpose.msra.mxu0 0.0
        %2741 = vmatpush.xpose.msra.mxu0 0.0
        %2742 = vmatpush.xpose.msra.mxu0 0.0
        %2743 = vmatpush.xpose.msra.mxu0 %v466
        %2744 = vmatmul.f32.gmra.mxu0 %v2723
        %v2745 = vpop.f32.mrf.mxu0
        %v2746 = vadd.f32 0.0, %v2745
        %2747 = vmatmul.f32.gmra.mxu0 %v2726
        %v2748 = vpop.f32.mrf.mxu0
        %v2749 = vadd.f32 0.0, %v2748
        %2750 = vdwg.mxu0
        %v2751 = vrsqrt.pop %v2746
        %v2752 = vmul.f32 %v2751, %v2746
        %v2753 = vmul.f32 %v2752, %v2751
        %v2754 = vmul.f32 0.5, %v2753
        %v2755 = vsub.f32 1.5, %v2754
        %v2756 = vmul.f32 %v2751, %v2755
        %v2757 = vmul.f32 %v2746, %v2756
        %vm2758 = vcmp.eq.f32.partialorder %v2746, inf
        %v2759 = vsel %vm2758, %v2746, %v2757
        %vm2760 = vcmp.eq.f32.partialorder %v2746, 0.0
        %v2761 = vand.u32 %v2746, 2147483648
        %v2762 = vsel %vm2760, %v2761, %v2759
        %v2763 = vrsqrt.pop %v2749
        %v2764 = vmul.f32 %v2763, %v2749
        %v2765 = vmul.f32 %v2764, %v2763
        %v2766 = vmul.f32 0.5, %v2765
        %v2767 = vsub.f32 1.5, %v2766
        %v2768 = vmul.f32 %v2763, %v2767
        %v2769 = vmul.f32 %v2749, %v2768
        %vm2770 = vcmp.eq.f32.partialorder %v2749, inf
        %v2771 = vsel %vm2770, %v2749, %v2769
        %vm2772 = vcmp.eq.f32.partialorder %v2749, 0.0
        %v2773 = vand.u32 %v2749, 2147483648
        %v2774 = vsel %vm2772, %v2773, %v2771
        %v2775 = vmax.f32 %v2762, 0.0001
        %v2776 = vmax.f32 %v2774, 0.0001
        %v2777 = vrcp.pop %v2775
        %v2778 = vmul.f32 %v2775, %v2777
        %v2779 = vsub.f32 1.0, %v2778
        %v2780 = vmul.f32 %v2777, %v2779
        %v2781 = vadd.f32 %v2777, %v2780
        %vm2782 = vweird.f32 %v2775
        %vm2783 = vweird.f32 %v2777
        %vm2784 = vmor %vm2782, %vm2783
        %v2785 = vsel %vm2784, %v2777, %v2781
        %v2786 = vand.u32 2147483647, %v2775
        %vm2787 = vcmp.eq.f32.partialorder %v2786, 8.507059e+37
        %v2788 = vand.u32 %v2775, 2147483648
        %v2789 = vor.u32 1.1754944e-38, %v2788
        %v2790 = vsel %vm2787, %v2789, %v2785
        %v2791 = vmul.f32 1.0, %v2790
        %v2792 = vrcp.pop %v2776
        %v2793 = vmul.f32 %v2776, %v2792
        %v2794 = vsub.f32 1.0, %v2793
        %v2795 = vmul.f32 %v2792, %v2794
        %v2796 = vadd.f32 %v2792, %v2795
        %vm2797 = vweird.f32 %v2776
        %vm2798 = vweird.f32 %v2792
        %vm2799 = vmor %vm2797, %vm2798
        %v2800 = vsel %vm2799, %v2792, %v2796
        %v2801 = vand.u32 2147483647, %v2776
        %vm2802 = vcmp.eq.f32.partialorder %v2801, 8.507059e+37
        %v2803 = vand.u32 %v2776, 2147483648
        %v2804 = vor.u32 1.1754944e-38, %v2803
        %v2805 = vsel %vm2802, %v2804, %v2800
        %v2806 = vmul.f32 1.0, %v2805
        %2809 = vrot.lane.b32.xlu0 %v2791, 24
        %v2810 = vpop.permute.xlu0 %2809
        %2811 = vrot.lane.b32.xlu0 %v2806, 24
        %v2812 = vpop.permute.xlu0 %2811
        %v2815 = vmul.f32 %v596, %v2810
        %v2816 = vmul.f32 %v611, %v2812
        %2819 = vrot.lane.b32.xlu0 %v2815, 104
        %v2820 = vpop.permute.xlu0 %2819
        %2821 = vrot.lane.b32.xlu0 %v2816, 104
        %v2822 = vpop.permute.xlu0 %2821
        %v2825 = vmul.f32 %v2717, %v2820
        %v2826 = vmul.f32 %v2720, %v2822
        %2828 = vrot.lane.b32.xlu0 %v882, 98
        %v2829 = vpop.permute.xlu0 %2828
        %2832 = vrot.lane.b32.xlu0 %v959, 3
        %v2833 = vpop.permute.xlu0 %2832
        %v2843 = vadd.s32 %v787, 4294967285
        %v2844 = vperm.slane %v1523, %v2843
        %v2845 = vperm.slane %v1524, %v2843
        %v2846 = vperm.slane %v1525, %v2843
        %v2847 = vperm.slane %v1526, %v2843
        %v2848 = vperm.slane %v1527, %v2843
        %v2849 = vperm.slane %v1528, %v2843
        %v2850 = vperm.slane %v1529, %v2843
        %v2851 = vperm.slane %v1530, %v2843
        %v2852 = vsel %vm2458, %v2845, %v2844
        %v2853 = vsel %vm2460, %v2846, %v2852
        %v2854 = vsel %vm2462, %v2847, %v2853
        %v2855 = vsel %vm2464, %v2848, %v2854
        %v2856 = vsel %vm2466, %v2849, %v2855
        %v2857 = vsel %vm2468, %v2850, %v2856
        %v2858 = vsel %vm2470, %v2851, %v2857
        %2861 = vrot.lane.b32.xlu0 %v1247, 19
        %v2862 = vpop.permute.xlu0 %2861
        %2865 = vrot.lane.b32.xlu0 %v1865, 123
        %v2866 = vpop.permute.xlu0 %2865
        %2869 = vrot.lane.b32.xlu0 %v1949, 28
        %v2870 = vpop.permute.xlu0 %2869
        %2873 = vrot.lane.b32.xlu0 %v2533, 4
        %v2874 = vpop.permute.xlu0 %2873
        %2877 = vrot.lane.b32.xlu0 %v2616, 37
        %v2878 = vpop.permute.xlu0 %2877
        %vm2880 = vcmask 7168
        %v2881 = vsel %vm2880, %v660, %v669
        %vm2882 = vcmask 15360
        %v2883 = vsel %vm2882, %v2881, %v2829
        %vm2884 = vcmask 23552
        %v2885 = vsel %vm2884, %v2883, %v2833
        %vm2886 = vcmask 89088
        %v2887 = vsel %vm2886, %v2885, %v2858
        %vm2888 = vcmask 154624
        %v2889 = vsel %vm2888, %v2887, %v2862
        %vm2890 = vcmask 220160
        %v2891 = vsel %vm2890, %v2889, %v2866
        %vm2892 = vcmask 228352
        %v2893 = vsel %vm2892, %v2891, %v2870
        %vm2894 = vcmask 293888
        %v2895 = vsel %vm2894, %v2893, %v2874
        %vm2896 = vcmask 302080
        %v2897 = vsel %vm2896, %v2895, %v2878
        %vm2898 = vcmask 367616
        %v2899 = vsel %vm2898, %v2897, 0.0
        %2900 = vst [vmem:[%s292] sm:$0xff] %v2899
        %2903 = vrot.lane.b32.xlu0 %v778, 1
        %v2904 = vpop.permute.xlu0 %2903
        %2905 = vrot.lane.b32.xlu0 %v779, 1
        %v2906 = vpop.permute.xlu0 %2905
        %2911 = vrot.lane.b32.xlu0 %v1004, 98
        %v2912 = vpop.permute.xlu0 %2911
        %2913 = vrot.lane.b32.xlu0 %v1005, 98
        %v2914 = vpop.permute.xlu0 %2913
        %2919 = vrot.lane.b32.xlu0 %v1089, 3
        %v2920 = vpop.permute.xlu0 %2919
        %2921 = vrot.lane.b32.xlu0 %v1090, 3
        %v2922 = vpop.permute.xlu0 %2921
        %2927 = vrot.lane.b32.xlu0 %v1631, 11
        %v2928 = vpop.permute.xlu0 %2927
        %2929 = vrot.lane.b32.xlu0 %v1632, 11
        %v2930 = vpop.permute.xlu0 %2929
        %2935 = vrot.lane.b32.xlu0 %v1289, 19
        %v2936 = vpop.permute.xlu0 %2935
        %2937 = vrot.lane.b32.xlu0 %v1290, 19
        %v2938 = vpop.permute.xlu0 %2937
        %2943 = vrot.lane.b32.xlu0 %v2024, 123
        %v2944 = vpop.permute.xlu0 %2943
        %2945 = vrot.lane.b32.xlu0 %v2025, 123
        %v2946 = vpop.permute.xlu0 %2945
        %2951 = vrot.lane.b32.xlu0 %v2158, 28
        %v2952 = vpop.permute.xlu0 %2951
        %2953 = vrot.lane.b32.xlu0 %v2159, 28
        %v2954 = vpop.permute.xlu0 %2953
        %2959 = vrot.lane.b32.xlu0 %v2691, 4
        %v2960 = vpop.permute.xlu0 %2959
        %2961 = vrot.lane.b32.xlu0 %v2692, 4
        %v2962 = vpop.permute.xlu0 %2961
        %2967 = vrot.lane.b32.xlu0 %v2825, 37
        %v2968 = vpop.permute.xlu0 %2967
        %2969 = vrot.lane.b32.xlu0 %v2826, 37
        %v2970 = vpop.permute.xlu0 %2969
        %v2973 = vsel %vm2880, %v699, %v2904
        %v2974 = vsel %vm2880, %v700, %v2906
        %v2975 = vsel %vm2882, %v2973, %v2912
        %v2976 = vsel %vm2882, %v2974, %v2914
        %v2977 = vsel %vm2884, %v2975, %v2920
        %v2978 = vsel %vm2884, %v2976, %v2922
        %v2979 = vsel %vm2886, %v2977, %v2928
        %v2980 = vsel %vm2886, %v2978, %v2930
        %v2981 = vsel %vm2888, %v2979, %v2936
        %v2982 = vsel %vm2888, %v2980, %v2938
        %v2983 = vsel %vm2890, %v2981, %v2944
        %v2984 = vsel %vm2890, %v2982, %v2946
        %v2985 = vsel %vm2892, %v2983, %v2952
        %v2986 = vsel %vm2892, %v2984, %v2954
        %v2987 = vsel %vm2894, %v2985, %v2960
        %v2988 = vsel %vm2894, %v2986, %v2962
        %v2989 = vsel %vm2896, %v2987, %v2968
        %v2990 = vsel %vm2896, %v2988, %v2970
        %v2991 = vsel %vm2898, %v2989, 0.0
        %v2992 = vsel %vm2898, %v2990, 0.0
        %2993 = vst [vmem:[%s299] sm:$0xff] %v2991
        %2994 = vst [vmem:[%s299 + $0x8] sm:$0xff] %v2992
        %s2995 = sand.u32 %s166, 1
        %s2996 = scalar_lea.sflag [#allocation5], %s2995
        %s2997 = sand.u32 %s166, 1
        %s2998 = smul.addr %s2997, 8
        %s2999 = scalar_lea.vmem [#allocation4], %s2998
        %s3000 = sand.u32 %s192, 1
        %s3001 = scalar_lea.sflag [#allocation7], %s3000
        %s3002 = sand.u32 %s192, 1
        %s3003 = smul.addr %s3002, 16
        %s3004 = scalar_lea.vmem [#allocation6], %s3003
        // Predicated region
        $region41: #{tpu_custom_call.1} parent=39 // pred_check
          %p3005 = pneg %p176
        $region42: #{tpu_custom_call.1} parent=39 // pred_check_branch
          %3007 = sbr.rel (%p3005) target = $region44
        $region43: #{tpu_custom_call.1} parent=39 // pred_region
          %3009 = vsyncadd %s2996, 0
          %s3010 = smul.addr %s33, 8
          %s3011 = scalar_lea.hbm %s6, %s3010
          %s3013 = sshll.u32 %s2999, 4
          %s3014 = int_to_ptr.vmem [resolvable:$true] %s3013
          %s3015 = sshll.u32 %s3011, 4
          %s3016 = int_to_ptr.hbm [resolvable:$true] %s3015
          %3018 = dma.vmem_to_hbm [thread:$0]  %s3014, 128, %s3016, %s2996
        $region44: #{tpu_custom_call.1} parent=39 // pred_fallthru
          _
        // Predicated region
        $region45: #{tpu_custom_call.1} parent=39 // pred_check
          %p3019 = pneg %p202
        $region46: #{tpu_custom_call.1} parent=39 // pred_check_branch
          %3021 = sbr.rel (%p3019) target = $region48
        $region47: #{tpu_custom_call.1} parent=39 // pred_region
          %3023 = vsyncadd %s3001, 0
          %s3024 = smul.addr %s33, 2
          %s3025 = smul.addr %s3024, 8
          %s3026 = scalar_lea.hbm %s7, %s3025
          %s3027 = sshll.u32 %s3004, 4
          %s3028 = int_to_ptr.vmem [resolvable:$true] %s3027
          %s3029 = sshll.u32 %s3026, 4
          %s3030 = int_to_ptr.hbm [resolvable:$true] %s3029
          %3035 = dma.vmem_to_hbm [thread:$0]  %s3028, 256, %s3030, %s3001, 128, 128, 8
        $region48: #{tpu_custom_call.1} parent=39 // pred_fallthru
          _
      $region40: #{tpu_custom_call.1} parent=5 // pred_fallthru
        _
      %p3036 = scmp.le.s32.totalorder 2, %s28
      // Predicated region
      $region49: #{tpu_custom_call.1} parent=5 // pred_check
        %p3037 = pneg %p3036
      $region50: #{tpu_custom_call.1} parent=5 // pred_check_branch
        %3039 = sbr.rel (%p3037) target = $region52
      $region51: #{tpu_custom_call.1} parent=5 // pred_region
        %s3040 = ssub.s32 %s28, 2
        // Predicated region
        $region53: #{tpu_custom_call.1} parent=51 // pred_check
          %p3041 = pneg %p182
        $region54: #{tpu_custom_call.1} parent=51 // pred_check_branch
          %3043 = sbr.rel (%p3041) target = $region56
        $region55: #{tpu_custom_call.1} parent=51 // pred_region
          %s3044 = sand.u32 %s167, 1
          %s3045 = scalar_lea.sflag [#allocation5], %s3044
          %s3046 = sand.u32 %s167, 1
          %s3047 = smul.addr %s3046, 8
          %s3048 = scalar_lea.vmem [#allocation4], %s3047
          %3050 = dma.done %s3045, 128
        $region56: #{tpu_custom_call.1} parent=51 // pred_fallthru
          _
        // Predicated region
        $region57: #{tpu_custom_call.1} parent=51 // pred_check
          %p3051 = pneg %p208
        $region58: #{tpu_custom_call.1} parent=51 // pred_check_branch
          %3053 = sbr.rel (%p3051) target = $region60
        $region59: #{tpu_custom_call.1} parent=51 // pred_region
          %s3054 = sand.u32 %s193, 1
          %s3055 = scalar_lea.sflag [#allocation7], %s3054
          %s3056 = sand.u32 %s193, 1
          %s3057 = smul.addr %s3056, 16
          %s3058 = scalar_lea.vmem [#allocation6], %s3057
          %3060 = dma.done %s3055, 256
        $region60: #{tpu_custom_call.1} parent=51 // pred_fallthru
          _
      $region52: #{tpu_custom_call.1} parent=5 // pred_fallthru
        _
    $region6: #{tpu_custom_call.1} parent=1 // loop_footer
      %s32 = sadd.s32 1, %s28
    $region7: #{tpu_custom_call.1} parent=1 // loop_footer_branch
      %27 = sbr.rel target = $region3
    $region8: #{tpu_custom_call.1} parent=1 // loop_exit
      _
    %3061 = vsyncpa [#allocation5], 1
    %s3062 = scalar_lea.sflag [#allocation5], 1
    %3063 = vsyncpa %s3062, 1
    %3064 = vsyncpa [#allocation7], 1
    %s3065 = scalar_lea.sflag [#allocation7], 1
    %3066 = vsyncpa %s3065, 1

</llo_original>
